<compile_context>
chip_gen: v6e
topology: v6e:2x2x1
jax: 0.10.0
libtpu: 0.0.40
codegen_flags: <defaults>
</compile_context>

<pallas_src>
import math
import functools

import jax
import jax.numpy as jnp
from jax.experimental import pallas as pl
from jax.experimental.pallas import tpu as pltpu


# ----------------------------------------------------------------------------
# Config (mirrors the PyTorch `config` dict)
# ----------------------------------------------------------------------------
CONFIG = dict(
    D_MODEL=32,
    N_HEADS=4,
    D_FF=64,
    NUM_LAYERS=2,
    DROPOUT=0.0,        # inference: dropout is identity
    ACTIVATION="relu",  # 'relu' or 'gelu'
)
VOCAB = 101
MAX_LEN = 5000


# ----------------------------------------------------------------------------
# Positional encoding table (same as the PyTorch PositionalEncoding function)
# ----------------------------------------------------------------------------
def positional_encoding(d_model, max_len=MAX_LEN):
    position = jnp.arange(0, max_len, dtype=jnp.float32)[:, None]
    div_term = jnp.exp(
        jnp.arange(0, d_model, 2, dtype=jnp.float32) * -(math.log(10000.0) / d_model)
    )
    pe = jnp.zeros((max_len, d_model), dtype=jnp.float32)
    pe = pe.at[:, 0::2].set(jnp.sin(position * div_term))
    pe = pe.at[:, 1::2].set(jnp.cos(position * div_term))
    return pe


# ----------------------------------------------------------------------------
# Pallas kernel: encoder stack + final norm + head
# ----------------------------------------------------------------------------
def _layer_norm(v, w, b, eps=1e-5):
    # f32 math (PyTorch LayerNorm default eps=1e-5)
    mu = jnp.mean(v, axis=-1, keepdims=True)
    var = jnp.mean((v - mu) ** 2, axis=-1, keepdims=True)
    return (v - mu) * jax.lax.rsqrt(var + eps) * w + b


def transformer_kernel(
    num_layers, activation,
    x_ref,                       # [B, S, D] f32
    mask_ref,                    # [B*S*S, 1] f32 additive causal mask (k>q -> -inf)
    ind_d2h_ref,                 # [D, H] bf16   (1 iff lane d belongs to head h)
    ind_h2d_ref,                 # [H, D] bf16   (transpose of the above)
    qkv_w_ref, qkv_b_ref,        # [L, D, 3D] bf16 (Q cols pre-scaled), [L, 3D] f32
    outp_w_ref, outp_b_ref,      # [L, D, D]  bf16 , [L, D]  f32
    ln1_w_ref, ln1_b_ref,        # [L, D] f32
    ln2_w_ref, ln2_b_ref,        # [L, D] f32
    ff1_w_ref, ff1_b_ref,        # [L, D, DFF] bf16 , [L, DFF] f32
    ff2_w_ref, ff2_b_ref,        # [L, DFF, D] bf16 , [L, D]   f32
    lnf_w_ref, lnf_b_ref,        # [1, D] f32
    head_w_ref, head_b_ref,      # [1, D] f32 , [1, 1] f32
    out_ref,                     # [B, S] f32
):
    x3 = x_ref[...]                       # [B, S, D] f32
    B, S, D = x3.shape
    N = B * S                             # activation rows
    R = N * S                             # flattened (b, q, k) score rows

    # 2-D activations everywhere: one sublane-dense [N, D] slab
    x = x3.reshape(N, D)

    # Hoisted attention constants (built host-side, loaded once)
    mask_add = mask_ref[...]              # [R, 1] f32, 0 / -inf
    ind_d2h = ind_d2h_ref[...]            # [D, H] bf16
    ind_h2d = ind_h2d_ref[...]            # [H, D] bf16

    def mxu(a, w_bf16):
        # bf16 MXU inputs, f32 accumulation
        return jnp.dot(a.astype(jnp.bfloat16), w_bf16,
                       preferred_element_type=jnp.float32)

    # TODO(synk): switch to lax.fori_loop + dynamic ref[l] once NUM_LAYERS grows.
    for l in range(num_layers):
        h_in = x                                               # [N, D] f32

        # ---- attention ------------------------------------------------------
        # fused QKV; 1/sqrt(Dh) already folded into the Q columns host-side
        qkv = mxu(h_in, qkv_w_ref[l]) + qkv_b_ref[l]           # [N, 3D] f32
        q3 = qkv[:, :D].reshape(B, S, D)                       # heads packed on lanes
        k3 = qkv[:, D:2 * D].reshape(B, S, D)
        v3 = qkv[:, 2 * D:].reshape(B, S, D)

        # all-pairs Q*K elementwise products (VPU), heads still packed on lanes
        e = q3[:, :, None, :] * k3[:, None, :, :]              # [B, Sq, Sk, D] f32

        # per-head lane-block reduction as ONE fat MXU matmul (M = R rows),
        # plus the (hoisted) additive causal mask
        s2d = mxu(e.reshape(R, D), ind_d2h) + mask_add         # [R, H] f32
        s3 = s2d.reshape(N, S, H := ind_d2h.shape[-1])         # (b*q, k, h)

        # softmax over k (sublane axis); diagonal is never masked -> no NaN
        m = jnp.max(s3, axis=1, keepdims=True)                 # [N, 1, H]
        p = jnp.exp(s3 - m)
        denom = jnp.sum(p, axis=1, keepdims=True)
        p = p * pl.reciprocal(denom, approx=True)              # EUP reciprocal

        # expand per-head probs back to D lanes (one matmul), weight V (VPU),
        # reduce over k (sublane-group reduction) -> context with heads packed
        pexp = mxu(p.reshape(R, H), ind_h2d)                   # [R, D] f32
        g = pexp.reshape(B, S, S, D) * v3[:, None, :, :]       # [B, Sq, Sk, D]
        ctx = jnp.sum(g.reshape(N, S, D), axis=1)              # [N, D] f32

        attn = mxu(ctx, outp_w_ref[l]) + outp_b_ref[l]         # [N, D]

        # post-norm residual 1 (f32)
        x = _layer_norm(h_in + attn, ln1_w_ref[l], ln1_b_ref[l])

        # ---- feed-forward (2-D matmuls) --------------------------------------
        ff = mxu(x, ff1_w_ref[l]) + ff1_b_ref[l]               # [N, DFF]
        if activation == "relu":
            ff = jnp.maximum(ff, 0.0)
        else:  # exact erf GELU, matching PyTorch's 'gelu'
            ff = jax.nn.gelu(ff, approximate=False)
        ff = mxu(ff, ff2_w_ref[l]) + ff2_b_ref[l]              # [N, D]

        # post-norm residual 2
        x = _layer_norm(x + ff, ln2_w_ref[l], ln2_b_ref[l])

    # final encoder LayerNorm
    x = _layer_norm(x, lnf_w_ref[...], lnf_b_ref[...])          # [N, D]

    # head (D -> 1) as VPU multiply + lane reduction; [B, S] output
    # TODO(synk): emit a lane-dense [1, B*S] output once B*S grows.
    xb = x.reshape(B, S, D)
    out_ref[...] = jnp.sum(xb * head_w_ref[...], axis=-1) + head_b_ref[...]


# ----------------------------------------------------------------------------
# Host-side constant / weight prep
# ----------------------------------------------------------------------------
def _attention_constants(B, S, D, H):
    Dh = D // H
    # additive causal mask, flattened over (b, q, k) rows, k fastest
    q_idx = jnp.arange(S, dtype=jnp.int32)
    k_idx = jnp.arange(S, dtype=jnp.int32)
    m2 = jnp.where(k_idx[None, :] > q_idx[:, None],
                   jnp.float32(-jnp.inf), jnp.float32(0.0))      # [S, S]
    mask_add = jnp.tile(m2.reshape(S * S, 1), (B, 1))            # [B*S*S, 1]
    # 0/1 head-block indicator: ind[d, h] = 1 iff lane d belongs to head h
    d_idx = jnp.arange(D, dtype=jnp.int32)
    h_idx = jnp.arange(H, dtype=jnp.int32)
    ind_d2h = (d_idx[:, None] // Dh == h_idx[None, :]).astype(jnp.bfloat16)  # [D, H]
    ind_h2d = ind_d2h.T                                                      # [H, D]
    return mask_add, ind_d2h, ind_h2d


def _prepare_weights(params, n_heads):
    bf = jnp.bfloat16
    D = params["ln1_w"].shape[-1]
    Dh = D // n_heads
    scale = 1.0 / math.sqrt(Dh)
    # fold the attention scale into the Q rows of in_proj (weight AND bias)
    qscale = jnp.concatenate([jnp.full((D,), scale, jnp.float32),
                              jnp.ones((2 * D,), jnp.float32)])
    in_w = params["in_proj_w"] * qscale[None, :, None]           # [L, 3D, D]
    in_b = params["in_proj_b"] * qscale[None, :]                 # [L, 3D]
    return (
        jnp.swapaxes(in_w, -1, -2).astype(bf),                   # [L, D, 3D]
        in_b,
        jnp.swapaxes(params["out_proj_w"], -1, -2).astype(bf),   # [L, D, D]
        params["out_proj_b"],
        params["ln1_w"], params["ln1_b"],
        params["ln2_w"], params["ln2_b"],
        jnp.swapaxes(params["ff1_w"], -1, -2).astype(bf),        # [L, D, DFF]
        params["ff1_b"],
        jnp.swapaxes(params["ff2_w"], -1, -2).astype(bf),        # [L, DFF, D]
        params["ff2_b"],
        params["lnf_w"].reshape(1, -1), params["lnf_b"].reshape(1, -1),
        params["head_w"],                                        # [1, D]
        params["head_b"].reshape(1, 1),                          # [1, 1]
    )


def run_transformer(features, params, config):
    B, S, D = features.shape
    H = config["N_HEADS"]
    mask_add, ind_d2h, ind_h2d = _attention_constants(B, S, D, H)
    kernel = functools.partial(
        transformer_kernel, config["NUM_LAYERS"], config["ACTIVATION"],
    )
    inputs = (features, mask_add, ind_d2h, ind_h2d) + _prepare_weights(params, H)
    vmem = pl.BlockSpec(memory_space=pltpu.MemorySpace.VMEM)
    out2d = pl.pallas_call(
        kernel,
        out_shape=jax.ShapeDtypeStruct((B, S), jnp.float32),
        in_specs=[vmem] * len(inputs),
        out_specs=vmem,
    )(*inputs)
    return out2d[..., None]   # [B, S, 1], matching the PyTorch head output


# ----------------------------------------------------------------------------
# Deterministic parameter construction (shapes match the nn.Module __init__)
# ----------------------------------------------------------------------------
def make_params(key, config):
    D, DFF, L = config["D_MODEL"], config["D_FF"], config["NUM_LAYERS"]
    ks = jax.random.split(key, 10)

    def n(k, shape, scale):
        return (jax.random.normal(k, shape, jnp.float32) * scale).astype(jnp.float32)

    params = dict(
        emb_table=n(ks[0], (VOCAB, D), 1.0),
        in_proj_w=n(ks[1], (L, 3 * D, D), 1.0 / math.sqrt(D)),
        in_proj_b=jnp.zeros((L, 3 * D), jnp.float32),
        out_proj_w=n(ks[2], (L, D, D), 1.0 / math.sqrt(D)),
        out_proj_b=jnp.zeros((L, D), jnp.float32),
        ln1_w=jnp.ones((L, D), jnp.float32),
        ln1_b=jnp.zeros((L, D), jnp.float32),
        ln2_w=jnp.ones((L, D), jnp.float32),
        ln2_b=jnp.zeros((L, D), jnp.float32),
        ff1_w=n(ks[3], (L, DFF, D), 1.0 / math.sqrt(D)),
        ff1_b=jnp.zeros((L, DFF), jnp.float32),
        ff2_w=n(ks[4], (L, D, DFF), 1.0 / math.sqrt(DFF)),
        ff2_b=jnp.zeros((L, D), jnp.float32),
        lnf_w=jnp.ones((D,), jnp.float32),
        lnf_b=jnp.zeros((D,), jnp.float32),
        head_w=n(ks[5], (1, D), 1.0 / math.sqrt(D)),
        head_b=jnp.zeros((1,), jnp.float32),
    )
    return params


# ----------------------------------------------------------------------------
# Full forward pass: embeddings (glue, plain JAX gathers) + Pallas kernel
# ----------------------------------------------------------------------------
def simple_transformer_forward(x_tokens, idx, params, pe_table, config):
    features = jnp.take(params["emb_table"], x_tokens, axis=0)   # [B, S, D]
    pos_embed = jnp.take(pe_table, idx, axis=0)                  # [B, S, D]
    features = features + pos_embed
    return run_transformer(features, params, config)             # [B, S, 1]


if __name__ == "__main__":
    B, S = 2, 8
    key = jax.random.PRNGKey(0)
    k_tok, k_param = jax.random.split(key)

    params = make_params(k_param, CONFIG)
    pe_table = positional_encoding(CONFIG["D_MODEL"], MAX_LEN)

    x_tokens = jax.random.randint(k_tok, (B, S), 0, VOCAB, dtype=jnp.int32)
    idx = jnp.broadcast_to(jnp.arange(S, dtype=jnp.int32)[None, :], (B, S))

    out = simple_transformer_forward(x_tokens, idx, params, pe_table, CONFIG)
    out = jax.block_until_ready(out)

    assert out.shape == (B, S, 1), out.shape
    assert bool(jnp.all(jnp.isfinite(out)))
    print("KERNEL_OK")
</pallas_src>

<mosaic_0001>
module attributes {stable_mosaic.version = 11 : i64} {
  func.func @transformer_kernel(%arg0: memref<2x8x32xf32, #tpu.memory_space<vmem>>, %arg1: memref<128x1xf32, #tpu.memory_space<vmem>>, %arg2: memref<32x4xbf16, #tpu.memory_space<vmem>>, %arg3: memref<4x32xbf16, #tpu.memory_space<vmem>>, %arg4: memref<2x32x96xbf16, #tpu.memory_space<vmem>>, %arg5: memref<2x96xf32, #tpu.memory_space<vmem>>, %arg6: memref<2x32x32xbf16, #tpu.memory_space<vmem>>, %arg7: memref<2x32xf32, #tpu.memory_space<vmem>>, %arg8: memref<2x32xf32, #tpu.memory_space<vmem>>, %arg9: memref<2x32xf32, #tpu.memory_space<vmem>>, %arg10: memref<2x32xf32, #tpu.memory_space<vmem>>, %arg11: memref<2x32xf32, #tpu.memory_space<vmem>>, %arg12: memref<2x32x64xbf16, #tpu.memory_space<vmem>>, %arg13: memref<2x64xf32, #tpu.memory_space<vmem>>, %arg14: memref<2x64x32xbf16, #tpu.memory_space<vmem>>, %arg15: memref<2x32xf32, #tpu.memory_space<vmem>>, %arg16: memref<1x32xf32, #tpu.memory_space<vmem>>, %arg17: memref<1x32xf32, #tpu.memory_space<vmem>>, %arg18: memref<1x32xf32, #tpu.memory_space<vmem>>, %arg19: memref<1x1xf32, #tpu.memory_space<vmem>>, %arg20: memref<2x8xf32, #tpu.memory_space<vmem>>) attributes {dimension_semantics = [], scalar_prefetch = 0 : i64, scratch_operands = 0 : i64, tpu.core_type = #tpu.core_type<tc>} {
    %c0 = arith.constant 0 : index
    %c0_0 = arith.constant 0 : index
    %c0_1 = arith.constant 0 : index
    %0 = vector.load %arg0[%c0, %c0_0, %c0_1] : memref<2x8x32xf32, #tpu.memory_space<vmem>>, vector<2x8x32xf32>
    %1 = vector.shape_cast %0 : vector<2x8x32xf32> to vector<16x32xf32>
    %c0_2 = arith.constant 0 : index
    %c0_3 = arith.constant 0 : index
    %2 = vector.load %arg1[%c0_2, %c0_3] : memref<128x1xf32, #tpu.memory_space<vmem>>, vector<128x1xf32>
    %c0_4 = arith.constant 0 : index
    %c0_5 = arith.constant 0 : index
    %3 = vector.load %arg2[%c0_4, %c0_5] : memref<32x4xbf16, #tpu.memory_space<vmem>>, vector<32x4xbf16>
    %c0_6 = arith.constant 0 : index
    %c0_7 = arith.constant 0 : index
    %4 = vector.load %arg3[%c0_6, %c0_7] : memref<4x32xbf16, #tpu.memory_space<vmem>>, vector<4x32xbf16>
    %c0_8 = arith.constant 0 : index
    %c0_9 = arith.constant 0 : index
    %c0_10 = arith.constant 0 : index
    %5 = vector.load %arg4[%c0_8, %c0_9, %c0_10] : memref<2x32x96xbf16, #tpu.memory_space<vmem>>, vector<1x32x96xbf16>
    %6 = vector.shape_cast %5 : vector<1x32x96xbf16> to vector<32x96xbf16>
    %7 = arith.truncf %1 : vector<16x32xf32> to vector<16x32xbf16>
    %cst = arith.constant dense<0.000000e+00> : vector<16x96xf32>
    %8 = tpu.matmul %7, %6, %cst {dimension_numbers = #tpu.dot_dimension_numbers<[1], [0], [0], [1], [0, 0, 1, 1], [], []>} : vector<16x32xbf16>, vector<32x96xbf16>, vector<16x96xf32> -> vector<16x96xf32>
    %c0_11 = arith.constant 0 : index
    %c0_12 = arith.constant 0 : index
    %9 = vector.load %arg5[%c0_11, %c0_12] : memref<2x96xf32, #tpu.memory_space<vmem>>, vector<1x96xf32>
    %10 = vector.shape_cast %9 : vector<1x96xf32> to vector<96xf32>
    %11 = vector.shape_cast %10 : vector<96xf32> to vector<1x96xf32>
    %12 = vector.broadcast %11 : vector<1x96xf32> to vector<16x96xf32>
    %13 = arith.addf %8, %12 : vector<16x96xf32>
    %14 = vector.extract_strided_slice %13 {offsets = [0, 0], sizes = [16, 32], strides = [1, 1]} : vector<16x96xf32> to vector<16x32xf32>
    %15 = vector.shape_cast %14 : vector<16x32xf32> to vector<2x8x32xf32>
    %16 = vector.extract_strided_slice %13 {offsets = [0, 32], sizes = [16, 32], strides = [1, 1]} : vector<16x96xf32> to vector<16x32xf32>
    %17 = vector.shape_cast %16 : vector<16x32xf32> to vector<2x8x32xf32>
    %18 = vector.extract_strided_slice %13 {offsets = [0, 64], sizes = [16, 32], strides = [1, 1]} : vector<16x96xf32> to vector<16x32xf32>
    %19 = vector.shape_cast %18 : vector<16x32xf32> to vector<2x8x32xf32>
    %20 = vector.shape_cast %15 : vector<2x8x32xf32> to vector<2x8x1x32xf32>
    %21 = vector.shape_cast %17 : vector<2x8x32xf32> to vector<2x1x8x32xf32>
    %22 = vector.broadcast %20 : vector<2x8x1x32xf32> to vector<2x8x8x32xf32>
    %23 = vector.broadcast %21 : vector<2x1x8x32xf32> to vector<2x8x8x32xf32>
    %24 = arith.mulf %22, %23 : vector<2x8x8x32xf32>
    %25 = vector.shape_cast %24 : vector<2x8x8x32xf32> to vector<128x32xf32>
    %26 = arith.truncf %25 : vector<128x32xf32> to vector<128x32xbf16>
    %cst_13 = arith.constant dense<0.000000e+00> : vector<128x4xf32>
    %27 = tpu.matmul %26, %3, %cst_13 {dimension_numbers = #tpu.dot_dimension_numbers<[1], [0], [0], [1], [0, 0, 1, 1], [], []>} : vector<128x32xbf16>, vector<32x4xbf16>, vector<128x4xf32> -> vector<128x4xf32>
    %28 = vector.broadcast %2 : vector<128x1xf32> to vector<128x4xf32>
    %29 = arith.addf %27, %28 : vector<128x4xf32>
    %30 = vector.shape_cast %29 : vector<128x4xf32> to vector<16x8x4xf32>
    %cst_14 = arith.constant dense<0xFF800000> : vector<16x4xf32>
    %31 = vector.multi_reduction <maximumf>, %30, %cst_14 [1] : vector<16x8x4xf32> to vector<16x4xf32>
    %32 = vector.shape_cast %31 : vector<16x4xf32> to vector<16x1x4xf32>
    %33 = vector.broadcast %32 : vector<16x1x4xf32> to vector<16x8x4xf32>
    %34 = arith.subf %30, %33 : vector<16x8x4xf32>
    %35 = math.exp %34 : vector<16x8x4xf32>
    %cst_15 = arith.constant dense<0.000000e+00> : vector<16x4xf32>
    %36 = vector.multi_reduction <add>, %35, %cst_15 [1] : vector<16x8x4xf32> to vector<16x4xf32>
    %37 = vector.shape_cast %36 : vector<16x4xf32> to vector<16x1x4xf32>
    %38 = tpu.reciprocal %37 {approx = true} : vector<16x1x4xf32> -> vector<16x1x4xf32>
    %39 = vector.broadcast %38 : vector<16x1x4xf32> to vector<16x8x4xf32>
    %40 = arith.mulf %35, %39 : vector<16x8x4xf32>
    %41 = vector.shape_cast %40 : vector<16x8x4xf32> to vector<128x4xf32>
    %42 = arith.truncf %41 : vector<128x4xf32> to vector<128x4xbf16>
    %cst_16 = arith.constant dense<0.000000e+00> : vector<128x32xf32>
    %43 = tpu.matmul %42, %4, %cst_16 {dimension_numbers = #tpu.dot_dimension_numbers<[1], [0], [0], [1], [0, 0, 1, 1], [], []>} : vector<128x4xbf16>, vector<4x32xbf16>, vector<128x32xf32> -> vector<128x32xf32>
    %44 = vector.shape_cast %43 : vector<128x32xf32> to vector<2x8x8x32xf32>
    %45 = vector.shape_cast %19 : vector<2x8x32xf32> to vector<2x1x8x32xf32>
    %46 = vector.broadcast %45 : vector<2x1x8x32xf32> to vector<2x8x8x32xf32>
    %47 = arith.mulf %44, %46 : vector<2x8x8x32xf32>
    %48 = vector.shape_cast %47 : vector<2x8x8x32xf32> to vector<16x8x32xf32>
    %cst_17 = arith.constant dense<0.000000e+00> : vector<16x32xf32>
    %49 = vector.multi_reduction <add>, %48, %cst_17 [1] : vector<16x8x32xf32> to vector<16x32xf32>
    %c0_18 = arith.constant 0 : index
    %c0_19 = arith.constant 0 : index
    %c0_20 = arith.constant 0 : index
    %50 = vector.load %arg6[%c0_18, %c0_19, %c0_20] : memref<2x32x32xbf16, #tpu.memory_space<vmem>>, vector<1x32x32xbf16>
    %51 = vector.shape_cast %50 : vector<1x32x32xbf16> to vector<32x32xbf16>
    %52 = arith.truncf %49 : vector<16x32xf32> to vector<16x32xbf16>
    %cst_21 = arith.constant dense<0.000000e+00> : vector<16x32xf32>
    %53 = tpu.matmul %52, %51, %cst_21 {dimension_numbers = #tpu.dot_dimension_numbers<[1], [0], [0], [1], [0, 0, 1, 1], [], []>} : vector<16x32xbf16>, vector<32x32xbf16>, vector<16x32xf32> -> vector<16x32xf32>
    %c0_22 = arith.constant 0 : index
    %c0_23 = arith.constant 0 : index
    %54 = vector.load %arg7[%c0_22, %c0_23] : memref<2x32xf32, #tpu.memory_space<vmem>>, vector<1x32xf32>
    %55 = vector.shape_cast %54 : vector<1x32xf32> to vector<32xf32>
    %56 = vector.shape_cast %55 : vector<32xf32> to vector<1x32xf32>
    %57 = vector.broadcast %56 : vector<1x32xf32> to vector<16x32xf32>
    %58 = arith.addf %53, %57 : vector<16x32xf32>
    %59 = arith.addf %1, %58 : vector<16x32xf32>
    %c0_24 = arith.constant 0 : index
    %c0_25 = arith.constant 0 : index
    %60 = vector.load %arg8[%c0_24, %c0_25] : memref<2x32xf32, #tpu.memory_space<vmem>>, vector<1x32xf32>
    %61 = vector.shape_cast %60 : vector<1x32xf32> to vector<32xf32>
    %c0_26 = arith.constant 0 : index
    %c0_27 = arith.constant 0 : index
    %62 = vector.load %arg9[%c0_26, %c0_27] : memref<2x32xf32, #tpu.memory_space<vmem>>, vector<1x32xf32>
    %63 = vector.shape_cast %62 : vector<1x32xf32> to vector<32xf32>
    %cst_28 = arith.constant dense<0.000000e+00> : vector<16xf32>
    %64 = vector.multi_reduction <add>, %59, %cst_28 [1] : vector<16x32xf32> to vector<16xf32>
    %65 = vector.shape_cast %64 : vector<16xf32> to vector<16x1xf32>
    %cst_29 = arith.constant 3.200000e+01 : f32
    %66 = vector.broadcast %cst_29 : f32 to vector<16x1xf32>
    %67 = arith.divf %65, %66 : vector<16x1xf32>
    %68 = vector.broadcast %67 : vector<16x1xf32> to vector<16x32xf32>
    %69 = arith.subf %59, %68 : vector<16x32xf32>
    %70 = arith.mulf %69, %69 : vector<16x32xf32>
    %cst_30 = arith.constant dense<0.000000e+00> : vector<16xf32>
    %71 = vector.multi_reduction <add>, %70, %cst_30 [1] : vector<16x32xf32> to vector<16xf32>
    %72 = vector.shape_cast %71 : vector<16xf32> to vector<16x1xf32>
    %cst_31 = arith.constant 3.200000e+01 : f32
    %73 = vector.broadcast %cst_31 : f32 to vector<16x1xf32>
    %74 = arith.divf %72, %73 : vector<16x1xf32>
    %75 = vector.broadcast %67 : vector<16x1xf32> to vector<16x32xf32>
    %76 = arith.subf %59, %75 : vector<16x32xf32>
    %cst_32 = arith.constant 9.99999974E-6 : f32
    %77 = vector.broadcast %cst_32 : f32 to vector<16x1xf32>
    %78 = arith.addf %74, %77 : vector<16x1xf32>
    %79 = math.rsqrt %78 : vector<16x1xf32>
    %80 = vector.broadcast %79 : vector<16x1xf32> to vector<16x32xf32>
    %81 = arith.mulf %76, %80 : vector<16x32xf32>
    %82 = vector.shape_cast %61 : vector<32xf32> to vector<1x32xf32>
    %83 = vector.broadcast %82 : vector<1x32xf32> to vector<16x32xf32>
    %84 = arith.mulf %81, %83 : vector<16x32xf32>
    %85 = vector.shape_cast %63 : vector<32xf32> to vector<1x32xf32>
    %86 = vector.broadcast %85 : vector<1x32xf32> to vector<16x32xf32>
    %87 = arith.addf %84, %86 : vector<16x32xf32>
    %c0_33 = arith.constant 0 : index
    %c0_34 = arith.constant 0 : index
    %c0_35 = arith.constant 0 : index
    %88 = vector.load %arg12[%c0_33, %c0_34, %c0_35] : memref<2x32x64xbf16, #tpu.memory_space<vmem>>, vector<1x32x64xbf16>
    %89 = vector.shape_cast %88 : vector<1x32x64xbf16> to vector<32x64xbf16>
    %90 = arith.truncf %87 : vector<16x32xf32> to vector<16x32xbf16>
    %cst_36 = arith.constant dense<0.000000e+00> : vector<16x64xf32>
    %91 = tpu.matmul %90, %89, %cst_36 {dimension_numbers = #tpu.dot_dimension_numbers<[1], [0], [0], [1], [0, 0, 1, 1], [], []>} : vector<16x32xbf16>, vector<32x64xbf16>, vector<16x64xf32> -> vector<16x64xf32>
    %c0_37 = arith.constant 0 : index
    %c0_38 = arith.constant 0 : index
    %92 = vector.load %arg13[%c0_37, %c0_38] : memref<2x64xf32, #tpu.memory_space<vmem>>, vector<1x64xf32>
    %93 = vector.shape_cast %92 : vector<1x64xf32> to vector<64xf32>
    %94 = vector.shape_cast %93 : vector<64xf32> to vector<1x64xf32>
    %95 = vector.broadcast %94 : vector<1x64xf32> to vector<16x64xf32>
    %96 = arith.addf %91, %95 : vector<16x64xf32>
    %cst_39 = arith.constant 0.000000e+00 : f32
    %97 = vector.broadcast %cst_39 : f32 to vector<16x64xf32>
    %98 = arith.maximumf %96, %97 : vector<16x64xf32>
    %c0_40 = arith.constant 0 : index
    %c0_41 = arith.constant 0 : index
    %c0_42 = arith.constant 0 : index
    %99 = vector.load %arg14[%c0_40, %c0_41, %c0_42] : memref<2x64x32xbf16, #tpu.memory_space<vmem>>, vector<1x64x32xbf16>
    %100 = vector.shape_cast %99 : vector<1x64x32xbf16> to vector<64x32xbf16>
    %101 = arith.truncf %98 : vector<16x64xf32> to vector<16x64xbf16>
    %cst_43 = arith.constant dense<0.000000e+00> : vector<16x32xf32>
    %102 = tpu.matmul %101, %100, %cst_43 {dimension_numbers = #tpu.dot_dimension_numbers<[1], [0], [0], [1], [0, 0, 1, 1], [], []>} : vector<16x64xbf16>, vector<64x32xbf16>, vector<16x32xf32> -> vector<16x32xf32>
    %c0_44 = arith.constant 0 : index
    %c0_45 = arith.constant 0 : index
    %103 = vector.load %arg15[%c0_44, %c0_45] : memref<2x32xf32, #tpu.memory_space<vmem>>, vector<1x32xf32>
    %104 = vector.shape_cast %103 : vector<1x32xf32> to vector<32xf32>
    %105 = vector.shape_cast %104 : vector<32xf32> to vector<1x32xf32>
    %106 = vector.broadcast %105 : vector<1x32xf32> to vector<16x32xf32>
    %107 = arith.addf %102, %106 : vector<16x32xf32>
    %108 = arith.addf %87, %107 : vector<16x32xf32>
    %c0_46 = arith.constant 0 : index
    %c0_47 = arith.constant 0 : index
    %109 = vector.load %arg10[%c0_46, %c0_47] : memref<2x32xf32, #tpu.memory_space<vmem>>, vector<1x32xf32>
    %110 = vector.shape_cast %109 : vector<1x32xf32> to vector<32xf32>
    %c0_48 = arith.constant 0 : index
    %c0_49 = arith.constant 0 : index
    %111 = vector.load %arg11[%c0_48, %c0_49] : memref<2x32xf32, #tpu.memory_space<vmem>>, vector<1x32xf32>
    %112 = vector.shape_cast %111 : vector<1x32xf32> to vector<32xf32>
    %cst_50 = arith.constant dense<0.000000e+00> : vector<16xf32>
    %113 = vector.multi_reduction <add>, %108, %cst_50 [1] : vector<16x32xf32> to vector<16xf32>
    %114 = vector.shape_cast %113 : vector<16xf32> to vector<16x1xf32>
    %cst_51 = arith.constant 3.200000e+01 : f32
    %115 = vector.broadcast %cst_51 : f32 to vector<16x1xf32>
    %116 = arith.divf %114, %115 : vector<16x1xf32>
    %117 = vector.broadcast %116 : vector<16x1xf32> to vector<16x32xf32>
    %118 = arith.subf %108, %117 : vector<16x32xf32>
    %119 = arith.mulf %118, %118 : vector<16x32xf32>
    %cst_52 = arith.constant dense<0.000000e+00> : vector<16xf32>
    %120 = vector.multi_reduction <add>, %119, %cst_52 [1] : vector<16x32xf32> to vector<16xf32>
    %121 = vector.shape_cast %120 : vector<16xf32> to vector<16x1xf32>
    %cst_53 = arith.constant 3.200000e+01 : f32
    %122 = vector.broadcast %cst_53 : f32 to vector<16x1xf32>
    %123 = arith.divf %121, %122 : vector<16x1xf32>
    %124 = vector.broadcast %116 : vector<16x1xf32> to vector<16x32xf32>
    %125 = arith.subf %108, %124 : vector<16x32xf32>
    %cst_54 = arith.constant 9.99999974E-6 : f32
    %126 = vector.broadcast %cst_54 : f32 to vector<16x1xf32>
    %127 = arith.addf %123, %126 : vector<16x1xf32>
    %128 = math.rsqrt %127 : vector<16x1xf32>
    %129 = vector.broadcast %128 : vector<16x1xf32> to vector<16x32xf32>
    %130 = arith.mulf %125, %129 : vector<16x32xf32>
    %131 = vector.shape_cast %110 : vector<32xf32> to vector<1x32xf32>
    %132 = vector.broadcast %131 : vector<1x32xf32> to vector<16x32xf32>
    %133 = arith.mulf %130, %132 : vector<16x32xf32>
    %134 = vector.shape_cast %112 : vector<32xf32> to vector<1x32xf32>
    %135 = vector.broadcast %134 : vector<1x32xf32> to vector<16x32xf32>
    %136 = arith.addf %133, %135 : vector<16x32xf32>
    %c1 = arith.constant 1 : index
    %c0_55 = arith.constant 0 : index
    %c0_56 = arith.constant 0 : index
    %137 = vector.load %arg4[%c1, %c0_55, %c0_56] : memref<2x32x96xbf16, #tpu.memory_space<vmem>>, vector<1x32x96xbf16>
    %138 = vector.shape_cast %137 : vector<1x32x96xbf16> to vector<32x96xbf16>
    %139 = arith.truncf %136 : vector<16x32xf32> to vector<16x32xbf16>
    %cst_57 = arith.constant dense<0.000000e+00> : vector<16x96xf32>
    %140 = tpu.matmul %139, %138, %cst_57 {dimension_numbers = #tpu.dot_dimension_numbers<[1], [0], [0], [1], [0, 0, 1, 1], [], []>} : vector<16x32xbf16>, vector<32x96xbf16>, vector<16x96xf32> -> vector<16x96xf32>
    %c1_58 = arith.constant 1 : index
    %c0_59 = arith.constant 0 : index
    %141 = vector.load %arg5[%c1_58, %c0_59] : memref<2x96xf32, #tpu.memory_space<vmem>>, vector<1x96xf32>
    %142 = vector.shape_cast %141 : vector<1x96xf32> to vector<96xf32>
    %143 = vector.shape_cast %142 : vector<96xf32> to vector<1x96xf32>
    %144 = vector.broadcast %143 : vector<1x96xf32> to vector<16x96xf32>
    %145 = arith.addf %140, %144 : vector<16x96xf32>
    %146 = vector.extract_strided_slice %145 {offsets = [0, 0], sizes = [16, 32], strides = [1, 1]} : vector<16x96xf32> to vector<16x32xf32>
    %147 = vector.shape_cast %146 : vector<16x32xf32> to vector<2x8x32xf32>
    %148 = vector.extract_strided_slice %145 {offsets = [0, 32], sizes = [16, 32], strides = [1, 1]} : vector<16x96xf32> to vector<16x32xf32>
    %149 = vector.shape_cast %148 : vector<16x32xf32> to vector<2x8x32xf32>
    %150 = vector.extract_strided_slice %145 {offsets = [0, 64], sizes = [16, 32], strides = [1, 1]} : vector<16x96xf32> to vector<16x32xf32>
    %151 = vector.shape_cast %150 : vector<16x32xf32> to vector<2x8x32xf32>
    %152 = vector.shape_cast %147 : vector<2x8x32xf32> to vector<2x8x1x32xf32>
    %153 = vector.shape_cast %149 : vector<2x8x32xf32> to vector<2x1x8x32xf32>
    %154 = vector.broadcast %152 : vector<2x8x1x32xf32> to vector<2x8x8x32xf32>
    %155 = vector.broadcast %153 : vector<2x1x8x32xf32> to vector<2x8x8x32xf32>
    %156 = arith.mulf %154, %155 : vector<2x8x8x32xf32>
    %157 = vector.shape_cast %156 : vector<2x8x8x32xf32> to vector<128x32xf32>
    %158 = arith.truncf %157 : vector<128x32xf32> to vector<128x32xbf16>
    %cst_60 = arith.constant dense<0.000000e+00> : vector<128x4xf32>
    %159 = tpu.matmul %158, %3, %cst_60 {dimension_numbers = #tpu.dot_dimension_numbers<[1], [0], [0], [1], [0, 0, 1, 1], [], []>} : vector<128x32xbf16>, vector<32x4xbf16>, vector<128x4xf32> -> vector<128x4xf32>
    %160 = vector.broadcast %2 : vector<128x1xf32> to vector<128x4xf32>
    %161 = arith.addf %159, %160 : vector<128x4xf32>
    %162 = vector.shape_cast %161 : vector<128x4xf32> to vector<16x8x4xf32>
    %cst_61 = arith.constant dense<0xFF800000> : vector<16x4xf32>
    %163 = vector.multi_reduction <maximumf>, %162, %cst_61 [1] : vector<16x8x4xf32> to vector<16x4xf32>
    %164 = vector.shape_cast %163 : vector<16x4xf32> to vector<16x1x4xf32>
    %165 = vector.broadcast %164 : vector<16x1x4xf32> to vector<16x8x4xf32>
    %166 = arith.subf %162, %165 : vector<16x8x4xf32>
    %167 = math.exp %166 : vector<16x8x4xf32>
    %cst_62 = arith.constant dense<0.000000e+00> : vector<16x4xf32>
    %168 = vector.multi_reduction <add>, %167, %cst_62 [1] : vector<16x8x4xf32> to vector<16x4xf32>
    %169 = vector.shape_cast %168 : vector<16x4xf32> to vector<16x1x4xf32>
    %170 = tpu.reciprocal %169 {approx = true} : vector<16x1x4xf32> -> vector<16x1x4xf32>
    %171 = vector.broadcast %170 : vector<16x1x4xf32> to vector<16x8x4xf32>
    %172 = arith.mulf %167, %171 : vector<16x8x4xf32>
    %173 = vector.shape_cast %172 : vector<16x8x4xf32> to vector<128x4xf32>
    %174 = arith.truncf %173 : vector<128x4xf32> to vector<128x4xbf16>
    %cst_63 = arith.constant dense<0.000000e+00> : vector<128x32xf32>
    %175 = tpu.matmul %174, %4, %cst_63 {dimension_numbers = #tpu.dot_dimension_numbers<[1], [0], [0], [1], [0, 0, 1, 1], [], []>} : vector<128x4xbf16>, vector<4x32xbf16>, vector<128x32xf32> -> vector<128x32xf32>
    %176 = vector.shape_cast %175 : vector<128x32xf32> to vector<2x8x8x32xf32>
    %177 = vector.shape_cast %151 : vector<2x8x32xf32> to vector<2x1x8x32xf32>
    %178 = vector.broadcast %177 : vector<2x1x8x32xf32> to vector<2x8x8x32xf32>
    %179 = arith.mulf %176, %178 : vector<2x8x8x32xf32>
    %180 = vector.shape_cast %179 : vector<2x8x8x32xf32> to vector<16x8x32xf32>
    %cst_64 = arith.constant dense<0.000000e+00> : vector<16x32xf32>
    %181 = vector.multi_reduction <add>, %180, %cst_64 [1] : vector<16x8x32xf32> to vector<16x32xf32>
    %c1_65 = arith.constant 1 : index
    %c0_66 = arith.constant 0 : index
    %c0_67 = arith.constant 0 : index
    %182 = vector.load %arg6[%c1_65, %c0_66, %c0_67] : memref<2x32x32xbf16, #tpu.memory_space<vmem>>, vector<1x32x32xbf16>
    %183 = vector.shape_cast %182 : vector<1x32x32xbf16> to vector<32x32xbf16>
    %184 = arith.truncf %181 : vector<16x32xf32> to vector<16x32xbf16>
    %cst_68 = arith.constant dense<0.000000e+00> : vector<16x32xf32>
    %185 = tpu.matmul %184, %183, %cst_68 {dimension_numbers = #tpu.dot_dimension_numbers<[1], [0], [0], [1], [0, 0, 1, 1], [], []>} : vector<16x32xbf16>, vector<32x32xbf16>, vector<16x32xf32> -> vector<16x32xf32>
    %c1_69 = arith.constant 1 : index
    %c0_70 = arith.constant 0 : index
    %186 = vector.load %arg7[%c1_69, %c0_70] : memref<2x32xf32, #tpu.memory_space<vmem>>, vector<1x32xf32>
    %187 = vector.shape_cast %186 : vector<1x32xf32> to vector<32xf32>
    %188 = vector.shape_cast %187 : vector<32xf32> to vector<1x32xf32>
    %189 = vector.broadcast %188 : vector<1x32xf32> to vector<16x32xf32>
    %190 = arith.addf %185, %189 : vector<16x32xf32>
    %191 = arith.addf %136, %190 : vector<16x32xf32>
    %c1_71 = arith.constant 1 : index
    %c0_72 = arith.constant 0 : index
    %192 = vector.load %arg8[%c1_71, %c0_72] : memref<2x32xf32, #tpu.memory_space<vmem>>, vector<1x32xf32>
    %193 = vector.shape_cast %192 : vector<1x32xf32> to vector<32xf32>
    %c1_73 = arith.constant 1 : index
    %c0_74 = arith.constant 0 : index
    %194 = vector.load %arg9[%c1_73, %c0_74] : memref<2x32xf32, #tpu.memory_space<vmem>>, vector<1x32xf32>
    %195 = vector.shape_cast %194 : vector<1x32xf32> to vector<32xf32>
    %cst_75 = arith.constant dense<0.000000e+00> : vector<16xf32>
    %196 = vector.multi_reduction <add>, %191, %cst_75 [1] : vector<16x32xf32> to vector<16xf32>
    %197 = vector.shape_cast %196 : vector<16xf32> to vector<16x1xf32>
    %cst_76 = arith.constant 3.200000e+01 : f32
    %198 = vector.broadcast %cst_76 : f32 to vector<16x1xf32>
    %199 = arith.divf %197, %198 : vector<16x1xf32>
    %200 = vector.broadcast %199 : vector<16x1xf32> to vector<16x32xf32>
    %201 = arith.subf %191, %200 : vector<16x32xf32>
    %202 = arith.mulf %201, %201 : vector<16x32xf32>
    %cst_77 = arith.constant dense<0.000000e+00> : vector<16xf32>
    %203 = vector.multi_reduction <add>, %202, %cst_77 [1] : vector<16x32xf32> to vector<16xf32>
    %204 = vector.shape_cast %203 : vector<16xf32> to vector<16x1xf32>
    %cst_78 = arith.constant 3.200000e+01 : f32
    %205 = vector.broadcast %cst_78 : f32 to vector<16x1xf32>
    %206 = arith.divf %204, %205 : vector<16x1xf32>
    %207 = vector.broadcast %199 : vector<16x1xf32> to vector<16x32xf32>
    %208 = arith.subf %191, %207 : vector<16x32xf32>
    %cst_79 = arith.constant 9.99999974E-6 : f32
    %209 = vector.broadcast %cst_79 : f32 to vector<16x1xf32>
    %210 = arith.addf %206, %209 : vector<16x1xf32>
    %211 = math.rsqrt %210 : vector<16x1xf32>
    %212 = vector.broadcast %211 : vector<16x1xf32> to vector<16x32xf32>
    %213 = arith.mulf %208, %212 : vector<16x32xf32>
    %214 = vector.shape_cast %193 : vector<32xf32> to vector<1x32xf32>
    %215 = vector.broadcast %214 : vector<1x32xf32> to vector<16x32xf32>
    %216 = arith.mulf %213, %215 : vector<16x32xf32>
    %217 = vector.shape_cast %195 : vector<32xf32> to vector<1x32xf32>
    %218 = vector.broadcast %217 : vector<1x32xf32> to vector<16x32xf32>
    %219 = arith.addf %216, %218 : vector<16x32xf32>
    %c1_80 = arith.constant 1 : index
    %c0_81 = arith.constant 0 : index
    %c0_82 = arith.constant 0 : index
    %220 = vector.load %arg12[%c1_80, %c0_81, %c0_82] : memref<2x32x64xbf16, #tpu.memory_space<vmem>>, vector<1x32x64xbf16>
    %221 = vector.shape_cast %220 : vector<1x32x64xbf16> to vector<32x64xbf16>
    %222 = arith.truncf %219 : vector<16x32xf32> to vector<16x32xbf16>
    %cst_83 = arith.constant dense<0.000000e+00> : vector<16x64xf32>
    %223 = tpu.matmul %222, %221, %cst_83 {dimension_numbers = #tpu.dot_dimension_numbers<[1], [0], [0], [1], [0, 0, 1, 1], [], []>} : vector<16x32xbf16>, vector<32x64xbf16>, vector<16x64xf32> -> vector<16x64xf32>
    %c1_84 = arith.constant 1 : index
    %c0_85 = arith.constant 0 : index
    %224 = vector.load %arg13[%c1_84, %c0_85] : memref<2x64xf32, #tpu.memory_space<vmem>>, vector<1x64xf32>
    %225 = vector.shape_cast %224 : vector<1x64xf32> to vector<64xf32>
    %226 = vector.shape_cast %225 : vector<64xf32> to vector<1x64xf32>
    %227 = vector.broadcast %226 : vector<1x64xf32> to vector<16x64xf32>
    %228 = arith.addf %223, %227 : vector<16x64xf32>
    %cst_86 = arith.constant 0.000000e+00 : f32
    %229 = vector.broadcast %cst_86 : f32 to vector<16x64xf32>
    %230 = arith.maximumf %228, %229 : vector<16x64xf32>
    %c1_87 = arith.constant 1 : index
    %c0_88 = arith.constant 0 : index
    %c0_89 = arith.constant 0 : index
    %231 = vector.load %arg14[%c1_87, %c0_88, %c0_89] : memref<2x64x32xbf16, #tpu.memory_space<vmem>>, vector<1x64x32xbf16>
    %232 = vector.shape_cast %231 : vector<1x64x32xbf16> to vector<64x32xbf16>
    %233 = arith.truncf %230 : vector<16x64xf32> to vector<16x64xbf16>
    %cst_90 = arith.constant dense<0.000000e+00> : vector<16x32xf32>
    %234 = tpu.matmul %233, %232, %cst_90 {dimension_numbers = #tpu.dot_dimension_numbers<[1], [0], [0], [1], [0, 0, 1, 1], [], []>} : vector<16x64xbf16>, vector<64x32xbf16>, vector<16x32xf32> -> vector<16x32xf32>
    %c1_91 = arith.constant 1 : index
    %c0_92 = arith.constant 0 : index
    %235 = vector.load %arg15[%c1_91, %c0_92] : memref<2x32xf32, #tpu.memory_space<vmem>>, vector<1x32xf32>
    %236 = vector.shape_cast %235 : vector<1x32xf32> to vector<32xf32>
    %237 = vector.shape_cast %236 : vector<32xf32> to vector<1x32xf32>
    %238 = vector.broadcast %237 : vector<1x32xf32> to vector<16x32xf32>
    %239 = arith.addf %234, %238 : vector<16x32xf32>
    %240 = arith.addf %219, %239 : vector<16x32xf32>
    %c1_93 = arith.constant 1 : index
    %c0_94 = arith.constant 0 : index
    %241 = vector.load %arg10[%c1_93, %c0_94] : memref<2x32xf32, #tpu.memory_space<vmem>>, vector<1x32xf32>
    %242 = vector.shape_cast %241 : vector<1x32xf32> to vector<32xf32>
    %c1_95 = arith.constant 1 : index
    %c0_96 = arith.constant 0 : index
    %243 = vector.load %arg11[%c1_95, %c0_96] : memref<2x32xf32, #tpu.memory_space<vmem>>, vector<1x32xf32>
    %244 = vector.shape_cast %243 : vector<1x32xf32> to vector<32xf32>
    %cst_97 = arith.constant dense<0.000000e+00> : vector<16xf32>
    %245 = vector.multi_reduction <add>, %240, %cst_97 [1] : vector<16x32xf32> to vector<16xf32>
    %246 = vector.shape_cast %245 : vector<16xf32> to vector<16x1xf32>
    %cst_98 = arith.constant 3.200000e+01 : f32
    %247 = vector.broadcast %cst_98 : f32 to vector<16x1xf32>
    %248 = arith.divf %246, %247 : vector<16x1xf32>
    %249 = vector.broadcast %248 : vector<16x1xf32> to vector<16x32xf32>
    %250 = arith.subf %240, %249 : vector<16x32xf32>
    %251 = arith.mulf %250, %250 : vector<16x32xf32>
    %cst_99 = arith.constant dense<0.000000e+00> : vector<16xf32>
    %252 = vector.multi_reduction <add>, %251, %cst_99 [1] : vector<16x32xf32> to vector<16xf32>
    %253 = vector.shape_cast %252 : vector<16xf32> to vector<16x1xf32>
    %cst_100 = arith.constant 3.200000e+01 : f32
    %254 = vector.broadcast %cst_100 : f32 to vector<16x1xf32>
    %255 = arith.divf %253, %254 : vector<16x1xf32>
    %256 = vector.broadcast %248 : vector<16x1xf32> to vector<16x32xf32>
    %257 = arith.subf %240, %256 : vector<16x32xf32>
    %cst_101 = arith.constant 9.99999974E-6 : f32
    %258 = vector.broadcast %cst_101 : f32 to vector<16x1xf32>
    %259 = arith.addf %255, %258 : vector<16x1xf32>
    %260 = math.rsqrt %259 : vector<16x1xf32>
    %261 = vector.broadcast %260 : vector<16x1xf32> to vector<16x32xf32>
    %262 = arith.mulf %257, %261 : vector<16x32xf32>
    %263 = vector.shape_cast %242 : vector<32xf32> to vector<1x32xf32>
    %264 = vector.broadcast %263 : vector<1x32xf32> to vector<16x32xf32>
    %265 = arith.mulf %262, %264 : vector<16x32xf32>
    %266 = vector.shape_cast %244 : vector<32xf32> to vector<1x32xf32>
    %267 = vector.broadcast %266 : vector<1x32xf32> to vector<16x32xf32>
    %268 = arith.addf %265, %267 : vector<16x32xf32>
    %c0_102 = arith.constant 0 : index
    %c0_103 = arith.constant 0 : index
    %269 = vector.load %arg16[%c0_102, %c0_103] : memref<1x32xf32, #tpu.memory_space<vmem>>, vector<1x32xf32>
    %c0_104 = arith.constant 0 : index
    %c0_105 = arith.constant 0 : index
    %270 = vector.load %arg17[%c0_104, %c0_105] : memref<1x32xf32, #tpu.memory_space<vmem>>, vector<1x32xf32>
    %cst_106 = arith.constant dense<0.000000e+00> : vector<16xf32>
    %271 = vector.multi_reduction <add>, %268, %cst_106 [1] : vector<16x32xf32> to vector<16xf32>
    %272 = vector.shape_cast %271 : vector<16xf32> to vector<16x1xf32>
    %cst_107 = arith.constant 3.200000e+01 : f32
    %273 = vector.broadcast %cst_107 : f32 to vector<16x1xf32>
    %274 = arith.divf %272, %273 : vector<16x1xf32>
    %275 = vector.broadcast %274 : vector<16x1xf32> to vector<16x32xf32>
    %276 = arith.subf %268, %275 : vector<16x32xf32>
    %277 = arith.mulf %276, %276 : vector<16x32xf32>
    %cst_108 = arith.constant dense<0.000000e+00> : vector<16xf32>
    %278 = vector.multi_reduction <add>, %277, %cst_108 [1] : vector<16x32xf32> to vector<16xf32>
    %279 = vector.shape_cast %278 : vector<16xf32> to vector<16x1xf32>
    %cst_109 = arith.constant 3.200000e+01 : f32
    %280 = vector.broadcast %cst_109 : f32 to vector<16x1xf32>
    %281 = arith.divf %279, %280 : vector<16x1xf32>
    %282 = vector.broadcast %274 : vector<16x1xf32> to vector<16x32xf32>
    %283 = arith.subf %268, %282 : vector<16x32xf32>
    %cst_110 = arith.constant 9.99999974E-6 : f32
    %284 = vector.broadcast %cst_110 : f32 to vector<16x1xf32>
    %285 = arith.addf %281, %284 : vector<16x1xf32>
    %286 = math.rsqrt %285 : vector<16x1xf32>
    %287 = vector.broadcast %286 : vector<16x1xf32> to vector<16x32xf32>
    %288 = arith.mulf %283, %287 : vector<16x32xf32>
    %289 = vector.broadcast %269 : vector<1x32xf32> to vector<16x32xf32>
    %290 = arith.mulf %288, %289 : vector<16x32xf32>
    %291 = vector.broadcast %270 : vector<1x32xf32> to vector<16x32xf32>
    %292 = arith.addf %290, %291 : vector<16x32xf32>
    %293 = vector.shape_cast %292 : vector<16x32xf32> to vector<2x8x32xf32>
    %c0_111 = arith.constant 0 : index
    %c0_112 = arith.constant 0 : index
    %294 = vector.load %arg18[%c0_111, %c0_112] : memref<1x32xf32, #tpu.memory_space<vmem>>, vector<1x32xf32>
    %295 = vector.shape_cast %294 : vector<1x32xf32> to vector<1x1x32xf32>
    %296 = vector.broadcast %295 : vector<1x1x32xf32> to vector<2x8x32xf32>
    %297 = arith.mulf %293, %296 : vector<2x8x32xf32>
    %cst_113 = arith.constant dense<0.000000e+00> : vector<2x8xf32>
    %298 = vector.multi_reduction <add>, %297, %cst_113 [2] : vector<2x8x32xf32> to vector<2x8xf32>
    %c0_114 = arith.constant 0 : index
    %c0_115 = arith.constant 0 : index
    %299 = vector.load %arg19[%c0_114, %c0_115] : memref<1x1xf32, #tpu.memory_space<vmem>>, vector<1x1xf32>
    %300 = vector.broadcast %299 : vector<1x1xf32> to vector<2x8xf32>
    %301 = arith.addf %298, %300 : vector<2x8xf32>
    %c0_116 = arith.constant 0 : index
    %c0_117 = arith.constant 0 : index
    %302 = vector.load %arg20[%c0_116, %c0_117] : memref<2x8xf32, #tpu.memory_space<vmem>>, vector<2x8xf32>
    tpu.vector_store %arg20[%c0_116, %c0_117], %301 {strides = array<i32>} : memref<2x8xf32, #tpu.memory_space<vmem>>, vector<2x8xf32>,
    return
  }
}

</mosaic_0001>

<llo_original>
// kernel: tpu_custom_call.1
$region0: #{tpu_custom_call.1}
  #allocation0 [shape = 'u32[]', space=smem, size = 0x4, offset = 0x4, fixed_abs, tag = 'smem constant byte address 0x4 - core index']
  #allocation1 [shape = 'u32[144,128]{1,0:T(1,128)}', space=vmem, size = 0x12000, scoped, tag = 'internal scratch']
  #allocation2 [shape = 'f32[1,1]{1,0:T(1,128)S(1)}', space=vmem, size = 0x200, scoped, tag = 'scoped memory for tpu_custom_call.1']
  %s0 = inlined_call_operand.vmem [shape: f32[2,8,32], index: 0, kind: input, shape index: {}]
  %s1 = inlined_call_operand.vmem [shape: f32[128,1], index: 1, kind: input, shape index: {}]
  %s2 = inlined_call_operand.vmem [shape: bf16[32,4], index: 2, kind: input, shape index: {}]
  %s3 = inlined_call_operand.vmem [shape: bf16[4,32], index: 3, kind: input, shape index: {}]
  %s4 = inlined_call_operand.vmem [shape: bf16[2,32,96], index: 4, kind: input, shape index: {}]
  %s5 = inlined_call_operand.vmem [shape: f32[2,96], index: 5, kind: input, shape index: {}]
  %s6 = inlined_call_operand.vmem [shape: bf16[2,32,32], index: 6, kind: input, shape index: {}]
  %s7 = inlined_call_operand.vmem [shape: f32[2,32], index: 7, kind: input, shape index: {}]
  %s8 = inlined_call_operand.vmem [shape: f32[2,32], index: 8, kind: input, shape index: {}]
  %s9 = inlined_call_operand.vmem [shape: f32[2,32], index: 9, kind: input, shape index: {}]
  %s10 = inlined_call_operand.vmem [shape: f32[2,32], index: 10, kind: input, shape index: {}]
  %s11 = inlined_call_operand.vmem [shape: f32[2,32], index: 11, kind: input, shape index: {}]
  %s12 = inlined_call_operand.vmem [shape: bf16[2,32,64], index: 12, kind: input, shape index: {}]
  %s13 = inlined_call_operand.vmem [shape: f32[2,64], index: 13, kind: input, shape index: {}]
  %s14 = inlined_call_operand.vmem [shape: bf16[2,64,32], index: 14, kind: input, shape index: {}]
  %s15 = inlined_call_operand.vmem [shape: f32[2,32], index: 15, kind: input, shape index: {}]
  %s16 = inlined_call_operand.vmem [shape: f32[1,32], index: 16, kind: input, shape index: {}]
  %s17 = inlined_call_operand.vmem [shape: f32[1,32], index: 17, kind: input, shape index: {}]
  %s18 = inlined_call_operand.vmem [shape: f32[1,32], index: 18, kind: input, shape index: {}]
  %s19 = inlined_call_operand.<no memory space> [shape: f32[1,1], index: 19, kind: input, shape index: {}]
  %s20 = inlined_call_operand.hbm [shape: f32[2,8], index: 20, kind: output, shape index: {}]
  %s21 = sld [smem:[#allocation0]]
  $region90: #{tpu_custom_call.1} parent=0
    _
  %s23 = ssub.s32 1, %s21
  %s24 = scalar_select 0, %s23, %s21
  %v25 = vstv %s19
  %26 = vst [vmem:[#allocation2] sm:$0x1] %v25
  $region1: #{tpu_custom_call.1} parent=0
    #allocation3 [shape = 'u8[1024]{0}', space=vmem, size = 0x400, scoped, tag = 'output window, operand 0, single buffered']
    #allocation4 [shape = 's32[1]{0}', space=sflag, size = 0x4, scoped, tag = 'scoped memory for tpu_custom_call.1']
    %27 = vsyncpa [#allocation4], 0
    // Predicated region
    $region2: #{tpu_custom_call.1} parent=1 // pred_check
      _
    $region3: #{tpu_custom_call.1} parent=1 // pred_check_branch
      %29 = sbr.rel (0) target = $region5
    $region4: #{tpu_custom_call.1} parent=1 // pred_region
      _
    $region5: #{tpu_custom_call.1} parent=1 // pred_fallthru
      _
    // Predicated region
    $region6: #{tpu_custom_call.1} parent=1 // pred_check
      _
    $region7: #{tpu_custom_call.1} parent=1 // pred_check_branch
      %31 = sbr.rel (0) target = $region9
    $region8: #{tpu_custom_call.1} parent=1 // pred_region
      _
    $region9: #{tpu_custom_call.1} parent=1 // pred_fallthru
      _
    // Predicated region
    $region10: #{tpu_custom_call.1} parent=1 // pred_check
      _
    $region11: #{tpu_custom_call.1} parent=1 // pred_check_branch
      %33 = sbr.rel (0) target = $region13
    $region12: #{tpu_custom_call.1} parent=1 // pred_region
      _
    $region13: #{tpu_custom_call.1} parent=1 // pred_fallthru
      _
    // Predicated region
    $region14: #{tpu_custom_call.1} parent=1 // pred_check
      _
    $region15: #{tpu_custom_call.1} parent=1 // pred_check_branch
      %35 = sbr.rel (0) target = $region17
    $region16: #{tpu_custom_call.1} parent=1 // pred_region
      _
    $region17: #{tpu_custom_call.1} parent=1 // pred_fallthru
      _
    // Predicated region
    $region18: #{tpu_custom_call.1} parent=1 // pred_check
      _
    $region19: #{tpu_custom_call.1} parent=1 // pred_check_branch
      %37 = sbr.rel (0) target = $region21
    $region20: #{tpu_custom_call.1} parent=1 // pred_region
      _
    $region21: #{tpu_custom_call.1} parent=1 // pred_fallthru
      _
    // Predicated region
    $region22: #{tpu_custom_call.1} parent=1 // pred_check
      _
    $region23: #{tpu_custom_call.1} parent=1 // pred_check_branch
      %39 = sbr.rel (0) target = $region25
    $region24: #{tpu_custom_call.1} parent=1 // pred_region
      _
    $region25: #{tpu_custom_call.1} parent=1 // pred_fallthru
      _
    // Predicated region
    $region26: #{tpu_custom_call.1} parent=1 // pred_check
      _
    $region27: #{tpu_custom_call.1} parent=1 // pred_check_branch
      %41 = sbr.rel (0) target = $region29
    $region28: #{tpu_custom_call.1} parent=1 // pred_region
      _
    $region29: #{tpu_custom_call.1} parent=1 // pred_fallthru
      _
    // Predicated region
    $region30: #{tpu_custom_call.1} parent=1 // pred_check
      _
    $region31: #{tpu_custom_call.1} parent=1 // pred_check_branch
      %43 = sbr.rel (0) target = $region33
    $region32: #{tpu_custom_call.1} parent=1 // pred_region
      _
    $region33: #{tpu_custom_call.1} parent=1 // pred_fallthru
      _
    // Predicated region
    $region34: #{tpu_custom_call.1} parent=1 // pred_check
      _
    $region35: #{tpu_custom_call.1} parent=1 // pred_check_branch
      %45 = sbr.rel (0) target = $region37
    $region36: #{tpu_custom_call.1} parent=1 // pred_region
      _
    $region37: #{tpu_custom_call.1} parent=1 // pred_fallthru
      _
    // Predicated region
    $region38: #{tpu_custom_call.1} parent=1 // pred_check
      _
    $region39: #{tpu_custom_call.1} parent=1 // pred_check_branch
      %47 = sbr.rel (0) target = $region41
    $region40: #{tpu_custom_call.1} parent=1 // pred_region
      _
    $region41: #{tpu_custom_call.1} parent=1 // pred_fallthru
      _
    // Predicated region
    $region42: #{tpu_custom_call.1} parent=1 // pred_check
      _
    $region43: #{tpu_custom_call.1} parent=1 // pred_check_branch
      %49 = sbr.rel (0) target = $region45
    $region44: #{tpu_custom_call.1} parent=1 // pred_region
      _
    $region45: #{tpu_custom_call.1} parent=1 // pred_fallthru
      _
    // Predicated region
    $region46: #{tpu_custom_call.1} parent=1 // pred_check
      _
    $region47: #{tpu_custom_call.1} parent=1 // pred_check_branch
      %51 = sbr.rel (0) target = $region49
    $region48: #{tpu_custom_call.1} parent=1 // pred_region
      _
    $region49: #{tpu_custom_call.1} parent=1 // pred_fallthru
      _
    // Predicated region
    $region50: #{tpu_custom_call.1} parent=1 // pred_check
      _
    $region51: #{tpu_custom_call.1} parent=1 // pred_check_branch
      %53 = sbr.rel (0) target = $region53
    $region52: #{tpu_custom_call.1} parent=1 // pred_region
      _
    $region53: #{tpu_custom_call.1} parent=1 // pred_fallthru
      _
    // Predicated region
    $region54: #{tpu_custom_call.1} parent=1 // pred_check
      _
    $region55: #{tpu_custom_call.1} parent=1 // pred_check_branch
      %55 = sbr.rel (0) target = $region57
    $region56: #{tpu_custom_call.1} parent=1 // pred_region
      _
    $region57: #{tpu_custom_call.1} parent=1 // pred_fallthru
      _
    // Predicated region
    $region58: #{tpu_custom_call.1} parent=1 // pred_check
      _
    $region59: #{tpu_custom_call.1} parent=1 // pred_check_branch
      %57 = sbr.rel (0) target = $region61
    $region60: #{tpu_custom_call.1} parent=1 // pred_region
      _
    $region61: #{tpu_custom_call.1} parent=1 // pred_fallthru
      _
    // Predicated region
    $region62: #{tpu_custom_call.1} parent=1 // pred_check
      _
    $region63: #{tpu_custom_call.1} parent=1 // pred_check_branch
      %59 = sbr.rel (0) target = $region65
    $region64: #{tpu_custom_call.1} parent=1 // pred_region
      _
    $region65: #{tpu_custom_call.1} parent=1 // pred_fallthru
      _
    // Predicated region
    $region66: #{tpu_custom_call.1} parent=1 // pred_check
      _
    $region67: #{tpu_custom_call.1} parent=1 // pred_check_branch
      %61 = sbr.rel (0) target = $region69
    $region68: #{tpu_custom_call.1} parent=1 // pred_region
      _
    $region69: #{tpu_custom_call.1} parent=1 // pred_fallthru
      _
    // Predicated region
    $region70: #{tpu_custom_call.1} parent=1 // pred_check
      _
    $region71: #{tpu_custom_call.1} parent=1 // pred_check_branch
      %63 = sbr.rel (0) target = $region73
    $region72: #{tpu_custom_call.1} parent=1 // pred_region
      _
    $region73: #{tpu_custom_call.1} parent=1 // pred_fallthru
      _
    // Predicated region
    $region74: #{tpu_custom_call.1} parent=1 // pred_check
      _
    $region75: #{tpu_custom_call.1} parent=1 // pred_check_branch
      %65 = sbr.rel (0) target = $region77
    $region76: #{tpu_custom_call.1} parent=1 // pred_region
      _
    $region77: #{tpu_custom_call.1} parent=1 // pred_fallthru
      _
    // Predicated region
    $region78: #{tpu_custom_call.1} parent=1 // pred_check
      _
    $region79: #{tpu_custom_call.1} parent=1 // pred_check_branch
      %67 = sbr.rel (0) target = $region81
    $region80: #{tpu_custom_call.1} parent=1 // pred_region
      _
    $region81: #{tpu_custom_call.1} parent=1 // pred_fallthru
      _
    %v69 = vld [vmem:[%s0] sm:$0xff]
    %v70 = vld [vmem:[%s0 + $0x8] sm:$0xff]
    %v71 = vld [vmem:[%s1] sm:$0xff]
    %v72 = vld [vmem:[%s1 + $0x8] sm:$0xff]
    %v73 = vld [vmem:[%s1 + $0x10] sm:$0xff]
    %v74 = vld [vmem:[%s1 + $0x18] sm:$0xff]
    %v75 = vld [vmem:[%s1 + $0x20] sm:$0xff]
    %v76 = vld [vmem:[%s1 + $0x28] sm:$0xff]
    %v77 = vld [vmem:[%s1 + $0x30] sm:$0xff]
    %v78 = vld [vmem:[%s1 + $0x38] sm:$0xff]
    %v79 = vld [vmem:[%s1 + $0x40] sm:$0xff]
    %v80 = vld [vmem:[%s1 + $0x48] sm:$0xff]
    %v81 = vld [vmem:[%s1 + $0x50] sm:$0xff]
    %v82 = vld [vmem:[%s1 + $0x58] sm:$0xff]
    %v83 = vld [vmem:[%s1 + $0x60] sm:$0xff]
    %v84 = vld [vmem:[%s1 + $0x68] sm:$0xff]
    %v85 = vld [vmem:[%s1 + $0x70] sm:$0xff]
    %v86 = vld [vmem:[%s1 + $0x78] sm:$0xff]
    %v87 = vld [vmem:[%s2] sm:$0xf]
    %v88 = vld [vmem:[%s2 + $0x4] sm:$0xf]
    %v89 = vld [vmem:[%s2 + $0x8] sm:$0xf]
    %v90 = vld [vmem:[%s2 + $0xc] sm:$0xf]
    %v91 = vld [vmem:[%s3] sm:$0x3]
    %v92 = vld [vmem:[%s4] sm:$0xf]
    %v93 = vld [vmem:[%s4 + $0x4] sm:$0xf]
    %v94 = vld [vmem:[%s4 + $0x8] sm:$0xf]
    %v95 = vld [vmem:[%s4 + $0xc] sm:$0xf]
    %v96 = vpack.c.bf16 %v70, %v69
    %v97 = vld [vmem:[%s5] sm:$0x1]
    %v98 = vlaneseq
    %v99 = vshrl.u32 %v98, 7
    %v100 = vsub.s32 0, %v99
    %v101 = vrot.slane %v97, %v100
    %v106 = vunpack.c.l.b16 %v92
    %v107 = vunpack.c.l.b16 %v93
    %v108 = vunpack.c.l.b16 %v94
    %v109 = vunpack.c.l.b16 %v95
    %v110 = vpack.c.b16 %v107, %v106
    %v111 = vpack.c.b16 %v109, %v108
    %vm114 = vcmask 261120
    %v116 = vsel %vm114, %v96, 0
    %118 = vmatprep.subr.bf16.mxu0 0
    %119 = vmatpush1.bf16.msra.mxu0 0
    %120 = vmatprep.subr.bf16.mxu0 0
    %121 = vmatpush1.bf16.msra.mxu0 0
    %122 = vmatprep.subr.bf16.mxu0 0
    %123 = vmatpush1.bf16.msra.mxu0 0
    %124 = vmatprep.subr.bf16.mxu0 0
    %125 = vmatpush1.bf16.msra.mxu0 0
    %126 = vmatprep.subr.bf16.mxu0 0
    %127 = vmatpush1.bf16.msra.mxu0 0
    %128 = vmatprep.subr.bf16.mxu0 0
    %129 = vmatpush1.bf16.msra.mxu0 0
    %130 = vmatprep.subr.bf16.mxu0 0
    %131 = vmatpush1.bf16.msra.mxu0 %v111
    %132 = vmatprep.subr.bf16.mxu0 0
    %133 = vmatpush1.bf16.msra.mxu0 %v110
    %134 = vmatprep.subr.bf16.mxu0 0
    %135 = vmatpush2.bf16.msra.mxu0 0
    %136 = vmatprep.subr.bf16.mxu0 0
    %137 = vmatpush2.bf16.msra.mxu0 0
    %138 = vmatprep.subr.bf16.mxu0 0
    %139 = vmatpush2.bf16.msra.mxu0 0
    %140 = vmatprep.subr.bf16.mxu0 0
    %141 = vmatpush2.bf16.msra.mxu0 0
    %142 = vmatprep.subr.bf16.mxu0 0
    %143 = vmatpush2.bf16.msra.mxu0 0
    %144 = vmatprep.subr.bf16.mxu0 0
    %145 = vmatpush2.bf16.msra.mxu0 0
    %146 = vmatprep.subr.bf16.mxu0 0
    %147 = vmatpush2.bf16.msra.mxu0 0
    %148 = vmatprep.subr.bf16.mxu0 0
    %149 = vmatpush2.bf16.msra.mxu0 0
    %150 = vmatprep.mubr.bf16.mxu0 0
    %151 = vmatmul.mubr.bf16.gmra.mxu0 %v116
    %v152 = vpop.f32.mrf.mxu0
    %v153 = vadd.f32 %v101, %v152
    %v154 = vpop.f32.mrf.mxu0
    %v155 = vpop.f32.mrf.mxu0
    %v156 = vadd.f32 %v101, %v155
    %v157 = vpop.f32.mrf.mxu0
    %158 = vdwg.mxu0
    %v161 = vcombine.high %v153, %v153
    %v163 = vunpack.c.l.s4 1966171168
    %v164 = vunpack.c.0.s8 %v163
    %v165 = vlaneseq
    %v166 = vshrl.u32 %v165, 7
    %v167 = vsub.s32 %v164, %v166
    %v168 = vrot.slane %v153, %v167
    %v170 = vunpack.c.l.s4 1966171168
    %v171 = vunpack.c.0.s8 %v170
    %v172 = vlaneseq
    %v173 = vshrl.u32 %v172, 7
    %v174 = vsub.s32 %v171, %v173
    %v175 = vrot.slane %v161, %v174
    %v176 = vcombine.high %v168, %v168
    %v177 = vcombine.high %v175, %v175
    %v179 = vunpack.c.l.s4 1966171168
    %v180 = vunpack.c.0.s8 %v179
    %v181 = vlaneseq
    %v182 = vshrl.u32 %v181, 7
    %v183 = vsub.s32 %v180, %v182
    %v184 = vrot.slane %v168, %v183
    %v186 = vunpack.c.l.s4 1966171168
    %v187 = vunpack.c.0.s8 %v186
    %v188 = vlaneseq
    %v189 = vshrl.u32 %v188, 7
    %v190 = vsub.s32 %v187, %v189
    %v191 = vrot.slane %v175, %v190
    %v193 = vunpack.c.l.s4 1966171168
    %v194 = vunpack.c.0.s8 %v193
    %v195 = vlaneseq
    %v196 = vshrl.u32 %v195, 7
    %v197 = vsub.s32 %v194, %v196
    %v198 = vrot.slane %v176, %v197
    %v200 = vunpack.c.l.s4 1966171168
    %v201 = vunpack.c.0.s8 %v200
    %v202 = vlaneseq
    %v203 = vshrl.u32 %v202, 7
    %v204 = vsub.s32 %v201, %v203
    %v205 = vrot.slane %v177, %v204
    %v206 = vcombine.high %v184, %v184
    %v207 = vcombine.high %v191, %v191
    %v208 = vcombine.high %v198, %v198
    %v209 = vcombine.high %v205, %v205
    %v210 = vcombine.high %v156, %v156
    %v212 = vunpack.c.l.s4 1966171168
    %v213 = vunpack.c.0.s8 %v212
    %v214 = vlaneseq
    %v215 = vshrl.u32 %v214, 7
    %v216 = vsub.s32 %v213, %v215
    %v217 = vrot.slane %v156, %v216
    %v219 = vunpack.c.l.s4 1966171168
    %v220 = vunpack.c.0.s8 %v219
    %v221 = vlaneseq
    %v222 = vshrl.u32 %v221, 7
    %v223 = vsub.s32 %v220, %v222
    %v224 = vrot.slane %v210, %v223
    %v225 = vcombine.high %v217, %v217
    %v226 = vcombine.high %v224, %v224
    %v228 = vunpack.c.l.s4 1966171168
    %v229 = vunpack.c.0.s8 %v228
    %v230 = vlaneseq
    %v231 = vshrl.u32 %v230, 7
    %v232 = vsub.s32 %v229, %v231
    %v233 = vrot.slane %v217, %v232
    %v235 = vunpack.c.l.s4 1966171168
    %v236 = vunpack.c.0.s8 %v235
    %v237 = vlaneseq
    %v238 = vshrl.u32 %v237, 7
    %v239 = vsub.s32 %v236, %v238
    %v240 = vrot.slane %v224, %v239
    %v242 = vunpack.c.l.s4 1966171168
    %v243 = vunpack.c.0.s8 %v242
    %v244 = vlaneseq
    %v245 = vshrl.u32 %v244, 7
    %v246 = vsub.s32 %v243, %v245
    %v247 = vrot.slane %v225, %v246
    %v249 = vunpack.c.l.s4 1966171168
    %v250 = vunpack.c.0.s8 %v249
    %v251 = vlaneseq
    %v252 = vshrl.u32 %v251, 7
    %v253 = vsub.s32 %v250, %v252
    %v254 = vrot.slane %v226, %v253
    %v255 = vcombine.high %v233, %v233
    %v256 = vcombine.high %v240, %v240
    %v257 = vcombine.high %v247, %v247
    %v258 = vcombine.high %v254, %v254
    %v259 = vlaneseq
    %v260 = vshrl.u32 %v259, 7
    %v261 = vsub.s32 0, %v260
    %v262 = vrot.slane %v184, %v261
    %v263 = vlaneseq
    %v264 = vshrl.u32 %v263, 7
    %v265 = vsub.s32 0, %v264
    %v266 = vrot.slane %v198, %v265
    %v267 = vlaneseq
    %v268 = vshrl.u32 %v267, 7
    %v269 = vsub.s32 0, %v268
    %v270 = vrot.slane %v206, %v269
    %v271 = vlaneseq
    %v272 = vshrl.u32 %v271, 7
    %v273 = vsub.s32 0, %v272
    %v274 = vrot.slane %v208, %v273
    %v275 = vlaneseq
    %v276 = vshrl.u32 %v275, 7
    %v277 = vsub.s32 0, %v276
    %v278 = vrot.slane %v191, %v277
    %v279 = vlaneseq
    %v280 = vshrl.u32 %v279, 7
    %v281 = vsub.s32 0, %v280
    %v282 = vrot.slane %v205, %v281
    %v283 = vlaneseq
    %v284 = vshrl.u32 %v283, 7
    %v285 = vsub.s32 0, %v284
    %v286 = vrot.slane %v207, %v285
    %v287 = vlaneseq
    %v288 = vshrl.u32 %v287, 7
    %v289 = vsub.s32 0, %v288
    %v290 = vrot.slane %v209, %v289
    %v291 = vlaneseq
    %v292 = vshrl.u32 %v291, 7
    %v293 = vsub.s32 0, %v292
    %v294 = vrot.slane %v233, %v293
    %v295 = vlaneseq
    %v296 = vshrl.u32 %v295, 7
    %v297 = vsub.s32 0, %v296
    %v298 = vrot.slane %v247, %v297
    %v299 = vlaneseq
    %v300 = vshrl.u32 %v299, 7
    %v301 = vsub.s32 0, %v300
    %v302 = vrot.slane %v255, %v301
    %v303 = vlaneseq
    %v304 = vshrl.u32 %v303, 7
    %v305 = vsub.s32 0, %v304
    %v306 = vrot.slane %v257, %v305
    %v307 = vlaneseq
    %v308 = vshrl.u32 %v307, 7
    %v309 = vsub.s32 0, %v308
    %v310 = vrot.slane %v240, %v309
    %v311 = vlaneseq
    %v312 = vshrl.u32 %v311, 7
    %v313 = vsub.s32 0, %v312
    %v314 = vrot.slane %v254, %v313
    %v315 = vlaneseq
    %v316 = vshrl.u32 %v315, 7
    %v317 = vsub.s32 0, %v316
    %v318 = vrot.slane %v256, %v317
    %v319 = vlaneseq
    %v320 = vshrl.u32 %v319, 7
    %v321 = vsub.s32 0, %v320
    %v322 = vrot.slane %v258, %v321
    %339 = vrot.lane.b32.xlu0 %v153, 96
    %v340 = vpop.permute.xlu0 %339
    %341 = vrot.lane.b32.xlu0 %v156, 96
    %v342 = vpop.permute.xlu0 %341
    %v345 = vmul.f32 %v262, %v340
    %v346 = vmul.f32 %v266, %v340
    %v347 = vmul.f32 %v270, %v340
    %v348 = vmul.f32 %v274, %v340
    %v349 = vmul.f32 %v278, %v340
    %v350 = vmul.f32 %v282, %v340
    %v351 = vmul.f32 %v286, %v340
    %v352 = vmul.f32 %v290, %v340
    %v353 = vmul.f32 %v294, %v342
    %v354 = vmul.f32 %v298, %v342
    %v355 = vmul.f32 %v302, %v342
    %v356 = vmul.f32 %v306, %v342
    %v357 = vmul.f32 %v310, %v342
    %v358 = vmul.f32 %v314, %v342
    %v359 = vmul.f32 %v318, %v342
    %v360 = vmul.f32 %v322, %v342
    %v361 = vpack.c.bf16 %v346, %v345
    %v362 = vpack.c.bf16 %v348, %v347
    %v363 = vpack.c.bf16 %v350, %v349
    %v364 = vpack.c.bf16 %v352, %v351
    %v365 = vpack.c.bf16 %v354, %v353
    %v366 = vpack.c.bf16 %v356, %v355
    %v367 = vpack.c.bf16 %v358, %v357
    %v368 = vpack.c.bf16 %v360, %v359
    %370 = vset.pattern.permute.xlu0 0
    %371 = vperm.xlu0 %370, %v71
    %v372 = vpop.permute.xlu0 %371
    %375 = vset.pattern.permute.xlu0 0
    %376 = vperm.xlu0 %375, %v72
    %v377 = vpop.permute.xlu0 %376
    %380 = vset.pattern.permute.xlu0 0
    %381 = vperm.xlu0 %380, %v73
    %v382 = vpop.permute.xlu0 %381
    %385 = vset.pattern.permute.xlu0 0
    %386 = vperm.xlu0 %385, %v74
    %v387 = vpop.permute.xlu0 %386
    %390 = vset.pattern.permute.xlu0 0
    %391 = vperm.xlu0 %390, %v75
    %v392 = vpop.permute.xlu0 %391
    %395 = vset.pattern.permute.xlu0 0
    %396 = vperm.xlu0 %395, %v76
    %v397 = vpop.permute.xlu0 %396
    %400 = vset.pattern.permute.xlu0 0
    %401 = vperm.xlu0 %400, %v77
    %v402 = vpop.permute.xlu0 %401
    %405 = vset.pattern.permute.xlu0 0
    %406 = vperm.xlu0 %405, %v78
    %v407 = vpop.permute.xlu0 %406
    %410 = vset.pattern.permute.xlu0 0
    %411 = vperm.xlu0 %410, %v79
    %v412 = vpop.permute.xlu0 %411
    %415 = vset.pattern.permute.xlu0 0
    %416 = vperm.xlu0 %415, %v80
    %v417 = vpop.permute.xlu0 %416
    %420 = vset.pattern.permute.xlu0 0
    %421 = vperm.xlu0 %420, %v81
    %v422 = vpop.permute.xlu0 %421
    %425 = vset.pattern.permute.xlu0 0
    %426 = vperm.xlu0 %425, %v82
    %v427 = vpop.permute.xlu0 %426
    %430 = vset.pattern.permute.xlu0 0
    %431 = vperm.xlu0 %430, %v83
    %v432 = vpop.permute.xlu0 %431
    %435 = vset.pattern.permute.xlu0 0
    %436 = vperm.xlu0 %435, %v84
    %v437 = vpop.permute.xlu0 %436
    %440 = vset.pattern.permute.xlu0 0
    %441 = vperm.xlu0 %440, %v85
    %v442 = vpop.permute.xlu0 %441
    %445 = vset.pattern.permute.xlu0 0
    %446 = vperm.xlu0 %445, %v86
    %v447 = vpop.permute.xlu0 %446
    %v453 = vunpack.c.l.b16 %v87
    %v454 = vunpack.c.l.b16 %v88
    %v455 = vunpack.c.l.b16 %v89
    %v456 = vunpack.c.l.b16 %v90
    %v457 = vpack.c.b16 %v454, %v453
    %v458 = vpack.c.b16 %v456, %v455
    %v462 = vsel %vm114, %v361, 0
    %v465 = vsel %vm114, %v362, 0
    %v468 = vsel %vm114, %v363, 0
    %v471 = vsel %vm114, %v364, 0
    %v474 = vsel %vm114, %v365, 0
    %v477 = vsel %vm114, %v366, 0
    %v480 = vsel %vm114, %v367, 0
    %v483 = vsel %vm114, %v368, 0
    %485 = vmatprep.subr.bf16.mxu0 0
    %486 = vmatpush1.bf16.msra.mxu0 0
    %487 = vmatprep.subr.bf16.mxu0 0
    %488 = vmatpush1.bf16.msra.mxu0 0
    %489 = vmatprep.subr.bf16.mxu0 0
    %490 = vmatpush1.bf16.msra.mxu0 0
    %491 = vmatprep.subr.bf16.mxu0 0
    %492 = vmatpush1.bf16.msra.mxu0 0
    %493 = vmatprep.subr.bf16.mxu0 0
    %494 = vmatpush1.bf16.msra.mxu0 0
    %495 = vmatprep.subr.bf16.mxu0 0
    %496 = vmatpush1.bf16.msra.mxu0 0
    %497 = vmatprep.subr.bf16.mxu0 0
    %498 = vmatpush1.bf16.msra.mxu0 %v458
    %499 = vmatprep.subr.bf16.mxu0 0
    %500 = vmatpush1.bf16.msra.mxu0 %v457
    %501 = vmatprep.subr.bf16.mxu0 0
    %502 = vmatpush2.bf16.msra.mxu0 0
    %503 = vmatprep.subr.bf16.mxu0 0
    %504 = vmatpush2.bf16.msra.mxu0 0
    %505 = vmatprep.subr.bf16.mxu0 0
    %506 = vmatpush2.bf16.msra.mxu0 0
    %507 = vmatprep.subr.bf16.mxu0 0
    %508 = vmatpush2.bf16.msra.mxu0 0
    %509 = vmatprep.subr.bf16.mxu0 0
    %510 = vmatpush2.bf16.msra.mxu0 0
    %511 = vmatprep.subr.bf16.mxu0 0
    %512 = vmatpush2.bf16.msra.mxu0 0
    %513 = vmatprep.subr.bf16.mxu0 0
    %514 = vmatpush2.bf16.msra.mxu0 0
    %515 = vmatprep.subr.bf16.mxu0 0
    %516 = vmatpush2.bf16.msra.mxu0 0
    %517 = vmatprep.mubr.bf16.mxu0 0
    %518 = vmatmul.mubr.bf16.gmra.mxu0 %v462
    %v519 = vpop.f32.mrf.mxu0
    %v520 = vadd.f32 %v372, %v519
    %v521 = vpop.f32.mrf.mxu0
    %v522 = vpop.f32.mrf.mxu0
    %v523 = vadd.f32 %v377, %v522
    %v524 = vpop.f32.mrf.mxu0
    %525 = vmatprep.mubr.bf16.mxu0 0
    %526 = vmatmul.mubr.bf16.gmra.mxu0 %v465
    %v527 = vpop.f32.mrf.mxu0
    %v528 = vadd.f32 %v382, %v527
    %v529 = vpop.f32.mrf.mxu0
    %v530 = vpop.f32.mrf.mxu0
    %v531 = vadd.f32 %v387, %v530
    %v532 = vpop.f32.mrf.mxu0
    %533 = vmatprep.mubr.bf16.mxu0 0
    %534 = vmatmul.mubr.bf16.gmra.mxu0 %v468
    %v535 = vpop.f32.mrf.mxu0
    %v536 = vadd.f32 %v392, %v535
    %v537 = vpop.f32.mrf.mxu0
    %v538 = vpop.f32.mrf.mxu0
    %v539 = vadd.f32 %v397, %v538
    %v540 = vpop.f32.mrf.mxu0
    %541 = vmatprep.mubr.bf16.mxu0 0
    %542 = vmatmul.mubr.bf16.gmra.mxu0 %v471
    %v543 = vpop.f32.mrf.mxu0
    %v544 = vadd.f32 %v402, %v543
    %v545 = vpop.f32.mrf.mxu0
    %v546 = vpop.f32.mrf.mxu0
    %v547 = vadd.f32 %v407, %v546
    %v548 = vpop.f32.mrf.mxu0
    %549 = vmatprep.mubr.bf16.mxu0 0
    %550 = vmatmul.mubr.bf16.gmra.mxu0 %v474
    %v551 = vpop.f32.mrf.mxu0
    %v552 = vadd.f32 %v412, %v551
    %v553 = vpop.f32.mrf.mxu0
    %v554 = vpop.f32.mrf.mxu0
    %v555 = vadd.f32 %v417, %v554
    %v556 = vpop.f32.mrf.mxu0
    %557 = vmatprep.mubr.bf16.mxu0 0
    %558 = vmatmul.mubr.bf16.gmra.mxu0 %v477
    %v559 = vpop.f32.mrf.mxu0
    %v560 = vadd.f32 %v422, %v559
    %v561 = vpop.f32.mrf.mxu0
    %v562 = vpop.f32.mrf.mxu0
    %v563 = vadd.f32 %v427, %v562
    %v564 = vpop.f32.mrf.mxu0
    %565 = vmatprep.mubr.bf16.mxu0 0
    %566 = vmatmul.mubr.bf16.gmra.mxu0 %v480
    %v567 = vpop.f32.mrf.mxu0
    %v568 = vadd.f32 %v432, %v567
    %v569 = vpop.f32.mrf.mxu0
    %v570 = vpop.f32.mrf.mxu0
    %v571 = vadd.f32 %v437, %v570
    %v572 = vpop.f32.mrf.mxu0
    %573 = vmatprep.mubr.bf16.mxu0 0
    %574 = vmatmul.mubr.bf16.gmra.mxu0 %v483
    %v575 = vpop.f32.mrf.mxu0
    %v576 = vadd.f32 %v442, %v575
    %v577 = vpop.f32.mrf.mxu0
    %v578 = vpop.f32.mrf.mxu0
    %v579 = vadd.f32 %v447, %v578
    %v580 = vpop.f32.mrf.mxu0
    %581 = vdwg.mxu0
    %vm582 = vcmask 31744
    %v583 = vsel %vm582, %v520, -inf
    %v584 = vrot.slane %v583, 4
    %v585 = vmax.f32 %v583, %v584
    %v586 = vrot.slane %v585, 2
    %v587 = vmax.f32 %v585, %v586
    %v588 = vrot.slane %v587, 1
    %v589 = vmax.f32 %v587, %v588
    %v590 = vsel %vm582, %v523, -inf
    %v591 = vrot.slane %v590, 4
    %v592 = vmax.f32 %v590, %v591
    %v593 = vrot.slane %v592, 2
    %v594 = vmax.f32 %v592, %v593
    %v595 = vrot.slane %v594, 1
    %v596 = vmax.f32 %v594, %v595
    %v597 = vsel %vm582, %v528, -inf
    %v598 = vrot.slane %v597, 4
    %v599 = vmax.f32 %v597, %v598
    %v600 = vrot.slane %v599, 2
    %v601 = vmax.f32 %v599, %v600
    %v602 = vrot.slane %v601, 1
    %v603 = vmax.f32 %v601, %v602
    %v604 = vsel %vm582, %v531, -inf
    %v605 = vrot.slane %v604, 4
    %v606 = vmax.f32 %v604, %v605
    %v607 = vrot.slane %v606, 2
    %v608 = vmax.f32 %v606, %v607
    %v609 = vrot.slane %v608, 1
    %v610 = vmax.f32 %v608, %v609
    %v611 = vsel %vm582, %v536, -inf
    %v612 = vrot.slane %v611, 4
    %v613 = vmax.f32 %v611, %v612
    %v614 = vrot.slane %v613, 2
    %v615 = vmax.f32 %v613, %v614
    %v616 = vrot.slane %v615, 1
    %v617 = vmax.f32 %v615, %v616
    %v618 = vsel %vm582, %v539, -inf
    %v619 = vrot.slane %v618, 4
    %v620 = vmax.f32 %v618, %v619
    %v621 = vrot.slane %v620, 2
    %v622 = vmax.f32 %v620, %v621
    %v623 = vrot.slane %v622, 1
    %v624 = vmax.f32 %v622, %v623
    %v625 = vsel %vm582, %v544, -inf
    %v626 = vrot.slane %v625, 4
    %v627 = vmax.f32 %v625, %v626
    %v628 = vrot.slane %v627, 2
    %v629 = vmax.f32 %v627, %v628
    %v630 = vrot.slane %v629, 1
    %v631 = vmax.f32 %v629, %v630
    %v632 = vsel %vm582, %v547, -inf
    %v633 = vrot.slane %v632, 4
    %v634 = vmax.f32 %v632, %v633
    %v635 = vrot.slane %v634, 2
    %v636 = vmax.f32 %v634, %v635
    %v637 = vrot.slane %v636, 1
    %v638 = vmax.f32 %v636, %v637
    %v639 = vsel %vm582, %v552, -inf
    %v640 = vrot.slane %v639, 4
    %v641 = vmax.f32 %v639, %v640
    %v642 = vrot.slane %v641, 2
    %v643 = vmax.f32 %v641, %v642
    %v644 = vrot.slane %v643, 1
    %v645 = vmax.f32 %v643, %v644
    %v646 = vsel %vm582, %v555, -inf
    %v647 = vrot.slane %v646, 4
    %v648 = vmax.f32 %v646, %v647
    %v649 = vrot.slane %v648, 2
    %v650 = vmax.f32 %v648, %v649
    %v651 = vrot.slane %v650, 1
    %v652 = vmax.f32 %v650, %v651
    %v653 = vsel %vm582, %v560, -inf
    %v654 = vrot.slane %v653, 4
    %v655 = vmax.f32 %v653, %v654
    %v656 = vrot.slane %v655, 2
    %v657 = vmax.f32 %v655, %v656
    %v658 = vrot.slane %v657, 1
    %v659 = vmax.f32 %v657, %v658
    %v660 = vsel %vm582, %v563, -inf
    %v661 = vrot.slane %v660, 4
    %v662 = vmax.f32 %v660, %v661
    %v663 = vrot.slane %v662, 2
    %v664 = vmax.f32 %v662, %v663
    %v665 = vrot.slane %v664, 1
    %v666 = vmax.f32 %v664, %v665
    %v667 = vsel %vm582, %v568, -inf
    %v668 = vrot.slane %v667, 4
    %v669 = vmax.f32 %v667, %v668
    %v670 = vrot.slane %v669, 2
    %v671 = vmax.f32 %v669, %v670
    %v672 = vrot.slane %v671, 1
    %v673 = vmax.f32 %v671, %v672
    %v674 = vsel %vm582, %v571, -inf
    %v675 = vrot.slane %v674, 4
    %v676 = vmax.f32 %v674, %v675
    %v677 = vrot.slane %v676, 2
    %v678 = vmax.f32 %v676, %v677
    %v679 = vrot.slane %v678, 1
    %v680 = vmax.f32 %v678, %v679
    %v681 = vsel %vm582, %v576, -inf
    %v682 = vrot.slane %v681, 4
    %v683 = vmax.f32 %v681, %v682
    %v684 = vrot.slane %v683, 2
    %v685 = vmax.f32 %v683, %v684
    %v686 = vrot.slane %v685, 1
    %v687 = vmax.f32 %v685, %v686
    %v688 = vsel %vm582, %v579, -inf
    %v689 = vrot.slane %v688, 4
    %v690 = vmax.f32 %v688, %v689
    %v691 = vrot.slane %v690, 2
    %v692 = vmax.f32 %v690, %v691
    %v693 = vrot.slane %v692, 1
    %v694 = vmax.f32 %v692, %v693
    %v695 = vsub.f32 %v520, %v589
    %v696 = vsub.f32 %v523, %v596
    %v697 = vsub.f32 %v528, %v603
    %v698 = vsub.f32 %v531, %v610
    %v699 = vsub.f32 %v536, %v617
    %v700 = vsub.f32 %v539, %v624
    %v701 = vsub.f32 %v544, %v631
    %v702 = vsub.f32 %v547, %v638
    %v703 = vsub.f32 %v552, %v645
    %v704 = vsub.f32 %v555, %v652
    %v705 = vsub.f32 %v560, %v659
    %v706 = vsub.f32 %v563, %v666
    %v707 = vsub.f32 %v568, %v673
    %v708 = vsub.f32 %v571, %v680
    %v709 = vsub.f32 %v576, %v687
    %v710 = vsub.f32 %v579, %v694
    %v711 = vmul.f32 %v695, 1.442695
    %v712 = vpow.pop %v711
    %v713 = vmul.f32 %v696, 1.442695
    %v714 = vpow.pop %v713
    %v715 = vmul.f32 %v697, 1.442695
    %v716 = vpow.pop %v715
    %v717 = vmul.f32 %v698, 1.442695
    %v718 = vpow.pop %v717
    %v719 = vmul.f32 %v699, 1.442695
    %v720 = vpow.pop %v719
    %v721 = vmul.f32 %v700, 1.442695
    %v722 = vpow.pop %v721
    %v723 = vmul.f32 %v701, 1.442695
    %v724 = vpow.pop %v723
    %v725 = vmul.f32 %v702, 1.442695
    %v726 = vpow.pop %v725
    %v727 = vmul.f32 %v703, 1.442695
    %v728 = vpow.pop %v727
    %v729 = vmul.f32 %v704, 1.442695
    %v730 = vpow.pop %v729
    %v731 = vmul.f32 %v705, 1.442695
    %v732 = vpow.pop %v731
    %v733 = vmul.f32 %v706, 1.442695
    %v734 = vpow.pop %v733
    %v735 = vmul.f32 %v707, 1.442695
    %v736 = vpow.pop %v735
    %v737 = vmul.f32 %v708, 1.442695
    %v738 = vpow.pop %v737
    %v739 = vmul.f32 %v709, 1.442695
    %v740 = vpow.pop %v739
    %v741 = vmul.f32 %v710, 1.442695
    %v742 = vpow.pop %v741
    %v743 = vsel %vm582, %v712, 0.0
    %v744 = vrot.slane %v743, 4
    %v745 = vadd.f32 %v743, %v744
    %v746 = vrot.slane %v745, 2
    %v747 = vadd.f32 %v745, %v746
    %v748 = vrot.slane %v747, 1
    %v749 = vadd.f32 %v747, %v748
    %v750 = vsel %vm582, %v714, 0.0
    %v751 = vrot.slane %v750, 4
    %v752 = vadd.f32 %v750, %v751
    %v753 = vrot.slane %v752, 2
    %v754 = vadd.f32 %v752, %v753
    %v755 = vrot.slane %v754, 1
    %v756 = vadd.f32 %v754, %v755
    %v757 = vsel %vm582, %v716, 0.0
    %v758 = vrot.slane %v757, 4
    %v759 = vadd.f32 %v757, %v758
    %v760 = vrot.slane %v759, 2
    %v761 = vadd.f32 %v759, %v760
    %v762 = vrot.slane %v761, 1
    %v763 = vadd.f32 %v761, %v762
    %v764 = vsel %vm582, %v718, 0.0
    %v765 = vrot.slane %v764, 4
    %v766 = vadd.f32 %v764, %v765
    %v767 = vrot.slane %v766, 2
    %v768 = vadd.f32 %v766, %v767
    %v769 = vrot.slane %v768, 1
    %v770 = vadd.f32 %v768, %v769
    %v771 = vsel %vm582, %v720, 0.0
    %v772 = vrot.slane %v771, 4
    %v773 = vadd.f32 %v771, %v772
    %v774 = vrot.slane %v773, 2
    %v775 = vadd.f32 %v773, %v774
    %v776 = vrot.slane %v775, 1
    %v777 = vadd.f32 %v775, %v776
    %v778 = vsel %vm582, %v722, 0.0
    %v779 = vrot.slane %v778, 4
    %v780 = vadd.f32 %v778, %v779
    %v781 = vrot.slane %v780, 2
    %v782 = vadd.f32 %v780, %v781
    %v783 = vrot.slane %v782, 1
    %v784 = vadd.f32 %v782, %v783
    %v785 = vsel %vm582, %v724, 0.0
    %v786 = vrot.slane %v785, 4
    %v787 = vadd.f32 %v785, %v786
    %v788 = vrot.slane %v787, 2
    %v789 = vadd.f32 %v787, %v788
    %v790 = vrot.slane %v789, 1
    %v791 = vadd.f32 %v789, %v790
    %v792 = vsel %vm582, %v726, 0.0
    %v793 = vrot.slane %v792, 4
    %v794 = vadd.f32 %v792, %v793
    %v795 = vrot.slane %v794, 2
    %v796 = vadd.f32 %v794, %v795
    %v797 = vrot.slane %v796, 1
    %v798 = vadd.f32 %v796, %v797
    %v799 = vsel %vm582, %v728, 0.0
    %v800 = vrot.slane %v799, 4
    %v801 = vadd.f32 %v799, %v800
    %v802 = vrot.slane %v801, 2
    %v803 = vadd.f32 %v801, %v802
    %v804 = vrot.slane %v803, 1
    %v805 = vadd.f32 %v803, %v804
    %v806 = vsel %vm582, %v730, 0.0
    %v807 = vrot.slane %v806, 4
    %v808 = vadd.f32 %v806, %v807
    %v809 = vrot.slane %v808, 2
    %v810 = vadd.f32 %v808, %v809
    %v811 = vrot.slane %v810, 1
    %v812 = vadd.f32 %v810, %v811
    %v813 = vsel %vm582, %v732, 0.0
    %v814 = vrot.slane %v813, 4
    %v815 = vadd.f32 %v813, %v814
    %v816 = vrot.slane %v815, 2
    %v817 = vadd.f32 %v815, %v816
    %v818 = vrot.slane %v817, 1
    %v819 = vadd.f32 %v817, %v818
    %v820 = vsel %vm582, %v734, 0.0
    %v821 = vrot.slane %v820, 4
    %v822 = vadd.f32 %v820, %v821
    %v823 = vrot.slane %v822, 2
    %v824 = vadd.f32 %v822, %v823
    %v825 = vrot.slane %v824, 1
    %v826 = vadd.f32 %v824, %v825
    %v827 = vsel %vm582, %v736, 0.0
    %v828 = vrot.slane %v827, 4
    %v829 = vadd.f32 %v827, %v828
    %v830 = vrot.slane %v829, 2
    %v831 = vadd.f32 %v829, %v830
    %v832 = vrot.slane %v831, 1
    %v833 = vadd.f32 %v831, %v832
    %v834 = vsel %vm582, %v738, 0.0
    %v835 = vrot.slane %v834, 4
    %v836 = vadd.f32 %v834, %v835
    %v837 = vrot.slane %v836, 2
    %v838 = vadd.f32 %v836, %v837
    %v839 = vrot.slane %v838, 1
    %v840 = vadd.f32 %v838, %v839
    %v841 = vsel %vm582, %v740, 0.0
    %v842 = vrot.slane %v841, 4
    %v843 = vadd.f32 %v841, %v842
    %v844 = vrot.slane %v843, 2
    %v845 = vadd.f32 %v843, %v844
    %v846 = vrot.slane %v845, 1
    %v847 = vadd.f32 %v845, %v846
    %v848 = vsel %vm582, %v742, 0.0
    %v849 = vrot.slane %v848, 4
    %v850 = vadd.f32 %v848, %v849
    %v851 = vrot.slane %v850, 2
    %v852 = vadd.f32 %v850, %v851
    %v853 = vrot.slane %v852, 1
    %v854 = vadd.f32 %v852, %v853
    %v855 = vrcp.pop %v749
    %v856 = vrcp.pop %v756
    %v857 = vrcp.pop %v763
    %v858 = vrcp.pop %v770
    %v859 = vrcp.pop %v777
    %v860 = vrcp.pop %v784
    %v861 = vrcp.pop %v791
    %v862 = vrcp.pop %v798
    %v863 = vrcp.pop %v805
    %v864 = vrcp.pop %v812
    %v865 = vrcp.pop %v819
    %v866 = vrcp.pop %v826
    %v867 = vrcp.pop %v833
    %v868 = vrcp.pop %v840
    %v869 = vrcp.pop %v847
    %v870 = vrcp.pop %v854
    %v871 = vmul.f32 %v712, %v855
    %v872 = vmul.f32 %v714, %v856
    %v873 = vmul.f32 %v716, %v857
    %v874 = vmul.f32 %v718, %v858
    %v875 = vmul.f32 %v720, %v859
    %v876 = vmul.f32 %v722, %v860
    %v877 = vmul.f32 %v724, %v861
    %v878 = vmul.f32 %v726, %v862
    %v879 = vmul.f32 %v728, %v863
    %v880 = vmul.f32 %v730, %v864
    %v881 = vmul.f32 %v732, %v865
    %v882 = vmul.f32 %v734, %v866
    %v883 = vmul.f32 %v736, %v867
    %v884 = vmul.f32 %v738, %v868
    %v885 = vmul.f32 %v740, %v869
    %v886 = vmul.f32 %v742, %v870
    %v887 = vpack.c.bf16 %v872, %v871
    %v888 = vpack.c.bf16 %v874, %v873
    %v889 = vpack.c.bf16 %v876, %v875
    %v890 = vpack.c.bf16 %v878, %v877
    %v891 = vpack.c.bf16 %v880, %v879
    %v892 = vpack.c.bf16 %v882, %v881
    %v893 = vpack.c.bf16 %v884, %v883
    %v894 = vpack.c.bf16 %v886, %v885
    %v896 = vsel %vm582, %v887, 0
    %v899 = vsel %vm582, %v888, 0
    %v902 = vsel %vm582, %v889, 0
    %v905 = vsel %vm582, %v890, 0
    %v908 = vsel %vm582, %v891, 0
    %v911 = vsel %vm582, %v892, 0
    %v914 = vsel %vm582, %v893, 0
    %v917 = vsel %vm582, %v894, 0
    %vm919 = vcmask 1041408
    %v921 = vsel %vm919, %v91, 0
    %923 = vmatprep.subr.bf16.mxu0 0
    %924 = vmatpush1.bf16.msra.mxu0 0
    %925 = vmatprep.subr.bf16.mxu0 0
    %926 = vmatpush1.bf16.msra.mxu0 0
    %927 = vmatprep.subr.bf16.mxu0 0
    %928 = vmatpush1.bf16.msra.mxu0 0
    %929 = vmatprep.subr.bf16.mxu0 0
    %930 = vmatpush1.bf16.msra.mxu0 0
    %931 = vmatprep.subr.bf16.mxu0 0
    %932 = vmatpush1.bf16.msra.mxu0 0
    %933 = vmatprep.subr.bf16.mxu0 0
    %934 = vmatpush1.bf16.msra.mxu0 0
    %935 = vmatprep.subr.bf16.mxu0 0
    %936 = vmatpush1.bf16.msra.mxu0 0
    %937 = vmatprep.subr.bf16.mxu0 0
    %938 = vmatpush1.bf16.msra.mxu0 %v921
    %939 = vmatprep.subr.bf16.mxu0 0
    %940 = vmatpush2.bf16.msra.mxu0 0
    %941 = vmatprep.subr.bf16.mxu0 0
    %942 = vmatpush2.bf16.msra.mxu0 0
    %943 = vmatprep.subr.bf16.mxu0 0
    %944 = vmatpush2.bf16.msra.mxu0 0
    %945 = vmatprep.subr.bf16.mxu0 0
    %946 = vmatpush2.bf16.msra.mxu0 0
    %947 = vmatprep.subr.bf16.mxu0 0
    %948 = vmatpush2.bf16.msra.mxu0 0
    %949 = vmatprep.subr.bf16.mxu0 0
    %950 = vmatpush2.bf16.msra.mxu0 0
    %951 = vmatprep.subr.bf16.mxu0 0
    %952 = vmatpush2.bf16.msra.mxu0 0
    %953 = vmatprep.subr.bf16.mxu0 0
    %954 = vmatpush2.bf16.msra.mxu0 0
    %955 = vmatprep.mubr.bf16.mxu0 0
    %956 = vmatmul.mubr.bf16.gmra.mxu0 %v896
    %v957 = vpop.f32.mrf.mxu0
    %v958 = vadd.f32 0.0, %v957
    %v959 = vpop.f32.mrf.mxu0
    %v960 = vpop.f32.mrf.mxu0
    %v961 = vadd.f32 0.0, %v960
    %v962 = vpop.f32.mrf.mxu0
    %963 = vmatprep.mubr.bf16.mxu0 0
    %964 = vmatmul.mubr.bf16.gmra.mxu0 %v899
    %v965 = vpop.f32.mrf.mxu0
    %v966 = vadd.f32 0.0, %v965
    %v967 = vpop.f32.mrf.mxu0
    %v968 = vpop.f32.mrf.mxu0
    %v969 = vadd.f32 0.0, %v968
    %v970 = vpop.f32.mrf.mxu0
    %971 = vmatprep.mubr.bf16.mxu0 0
    %972 = vmatmul.mubr.bf16.gmra.mxu0 %v902
    %v973 = vpop.f32.mrf.mxu0
    %v974 = vadd.f32 0.0, %v973
    %v975 = vpop.f32.mrf.mxu0
    %v976 = vpop.f32.mrf.mxu0
    %v977 = vadd.f32 0.0, %v976
    %v978 = vpop.f32.mrf.mxu0
    %979 = vmatprep.mubr.bf16.mxu0 0
    %980 = vmatmul.mubr.bf16.gmra.mxu0 %v905
    %v981 = vpop.f32.mrf.mxu0
    %v982 = vadd.f32 0.0, %v981
    %v983 = vpop.f32.mrf.mxu0
    %v984 = vpop.f32.mrf.mxu0
    %v985 = vadd.f32 0.0, %v984
    %v986 = vpop.f32.mrf.mxu0
    %987 = vmatprep.mubr.bf16.mxu0 0
    %988 = vmatmul.mubr.bf16.gmra.mxu0 %v908
    %v989 = vpop.f32.mrf.mxu0
    %v990 = vadd.f32 0.0, %v989
    %v991 = vpop.f32.mrf.mxu0
    %v992 = vpop.f32.mrf.mxu0
    %v993 = vadd.f32 0.0, %v992
    %v994 = vpop.f32.mrf.mxu0
    %995 = vmatprep.mubr.bf16.mxu0 0
    %996 = vmatmul.mubr.bf16.gmra.mxu0 %v911
    %v997 = vpop.f32.mrf.mxu0
    %v998 = vadd.f32 0.0, %v997
    %v999 = vpop.f32.mrf.mxu0
    %v1000 = vpop.f32.mrf.mxu0
    %v1001 = vadd.f32 0.0, %v1000
    %v1002 = vpop.f32.mrf.mxu0
    %1003 = vmatprep.mubr.bf16.mxu0 0
    %1004 = vmatmul.mubr.bf16.gmra.mxu0 %v914
    %v1005 = vpop.f32.mrf.mxu0
    %v1006 = vadd.f32 0.0, %v1005
    %v1007 = vpop.f32.mrf.mxu0
    %v1008 = vpop.f32.mrf.mxu0
    %v1009 = vadd.f32 0.0, %v1008
    %v1010 = vpop.f32.mrf.mxu0
    %1011 = vmatprep.mubr.bf16.mxu0 0
    %1012 = vmatmul.mubr.bf16.gmra.mxu0 %v917
    %v1013 = vpop.f32.mrf.mxu0
    %v1014 = vadd.f32 0.0, %v1013
    %v1015 = vpop.f32.mrf.mxu0
    %v1016 = vpop.f32.mrf.mxu0
    %v1017 = vadd.f32 0.0, %v1016
    %v1018 = vpop.f32.mrf.mxu0
    %1019 = vdwg.mxu0
    %1020 = vrot.lane.b32.xlu0 %v153, 64
    %v1021 = vpop.permute.xlu0 %1020
    %1022 = vrot.lane.b32.xlu0 %v156, 64
    %v1023 = vpop.permute.xlu0 %1022
    %v1026 = vmul.f32 %v958, %v1021
    %v1027 = vmul.f32 %v961, %v1021
    %v1028 = vmul.f32 %v966, %v1021
    %v1029 = vmul.f32 %v969, %v1021
    %v1030 = vmul.f32 %v974, %v1021
    %v1031 = vmul.f32 %v977, %v1021
    %v1032 = vmul.f32 %v982, %v1021
    %v1033 = vmul.f32 %v985, %v1021
    %v1034 = vmul.f32 %v990, %v1023
    %v1035 = vmul.f32 %v993, %v1023
    %v1036 = vmul.f32 %v998, %v1023
    %v1037 = vmul.f32 %v1001, %v1023
    %v1038 = vmul.f32 %v1006, %v1023
    %v1039 = vmul.f32 %v1009, %v1023
    %v1040 = vmul.f32 %v1014, %v1023
    %v1041 = vmul.f32 %v1017, %v1023
    %v1042 = vsel %vm114, %v1026, 0.0
    %v1043 = vrot.slane %v1042, 4
    %v1044 = vadd.f32 %v1042, %v1043
    %v1045 = vrot.slane %v1044, 2
    %v1046 = vadd.f32 %v1044, %v1045
    %v1047 = vrot.slane %v1046, 1
    %v1048 = vadd.f32 %v1046, %v1047
    %v1049 = vsel %vm114, %v1027, 0.0
    %v1050 = vrot.slane %v1049, 4
    %v1051 = vadd.f32 %v1049, %v1050
    %v1052 = vrot.slane %v1051, 2
    %v1053 = vadd.f32 %v1051, %v1052
    %v1054 = vrot.slane %v1053, 1
    %v1055 = vadd.f32 %v1053, %v1054
    %v1056 = vsel %vm114, %v1028, 0.0
    %v1057 = vrot.slane %v1056, 4
    %v1058 = vadd.f32 %v1056, %v1057
    %v1059 = vrot.slane %v1058, 2
    %v1060 = vadd.f32 %v1058, %v1059
    %v1061 = vrot.slane %v1060, 1
    %v1062 = vadd.f32 %v1060, %v1061
    %v1063 = vsel %vm114, %v1029, 0.0
    %v1064 = vrot.slane %v1063, 4
    %v1065 = vadd.f32 %v1063, %v1064
    %v1066 = vrot.slane %v1065, 2
    %v1067 = vadd.f32 %v1065, %v1066
    %v1068 = vrot.slane %v1067, 1
    %v1069 = vadd.f32 %v1067, %v1068
    %v1070 = vsel %vm114, %v1030, 0.0
    %v1071 = vrot.slane %v1070, 4
    %v1072 = vadd.f32 %v1070, %v1071
    %v1073 = vrot.slane %v1072, 2
    %v1074 = vadd.f32 %v1072, %v1073
    %v1075 = vrot.slane %v1074, 1
    %v1076 = vadd.f32 %v1074, %v1075
    %v1077 = vsel %vm114, %v1031, 0.0
    %v1078 = vrot.slane %v1077, 4
    %v1079 = vadd.f32 %v1077, %v1078
    %v1080 = vrot.slane %v1079, 2
    %v1081 = vadd.f32 %v1079, %v1080
    %v1082 = vrot.slane %v1081, 1
    %v1083 = vadd.f32 %v1081, %v1082
    %v1084 = vsel %vm114, %v1032, 0.0
    %v1085 = vrot.slane %v1084, 4
    %v1086 = vadd.f32 %v1084, %v1085
    %v1087 = vrot.slane %v1086, 2
    %v1088 = vadd.f32 %v1086, %v1087
    %v1089 = vrot.slane %v1088, 1
    %v1090 = vadd.f32 %v1088, %v1089
    %v1091 = vsel %vm114, %v1033, 0.0
    %v1092 = vrot.slane %v1091, 4
    %v1093 = vadd.f32 %v1091, %v1092
    %v1094 = vrot.slane %v1093, 2
    %v1095 = vadd.f32 %v1093, %v1094
    %v1096 = vrot.slane %v1095, 1
    %v1097 = vadd.f32 %v1095, %v1096
    %v1098 = vsel %vm114, %v1034, 0.0
    %v1099 = vrot.slane %v1098, 4
    %v1100 = vadd.f32 %v1098, %v1099
    %v1101 = vrot.slane %v1100, 2
    %v1102 = vadd.f32 %v1100, %v1101
    %v1103 = vrot.slane %v1102, 1
    %v1104 = vadd.f32 %v1102, %v1103
    %v1105 = vsel %vm114, %v1035, 0.0
    %v1106 = vrot.slane %v1105, 4
    %v1107 = vadd.f32 %v1105, %v1106
    %v1108 = vrot.slane %v1107, 2
    %v1109 = vadd.f32 %v1107, %v1108
    %v1110 = vrot.slane %v1109, 1
    %v1111 = vadd.f32 %v1109, %v1110
    %v1112 = vsel %vm114, %v1036, 0.0
    %v1113 = vrot.slane %v1112, 4
    %v1114 = vadd.f32 %v1112, %v1113
    %v1115 = vrot.slane %v1114, 2
    %v1116 = vadd.f32 %v1114, %v1115
    %v1117 = vrot.slane %v1116, 1
    %v1118 = vadd.f32 %v1116, %v1117
    %v1119 = vsel %vm114, %v1037, 0.0
    %v1120 = vrot.slane %v1119, 4
    %v1121 = vadd.f32 %v1119, %v1120
    %v1122 = vrot.slane %v1121, 2
    %v1123 = vadd.f32 %v1121, %v1122
    %v1124 = vrot.slane %v1123, 1
    %v1125 = vadd.f32 %v1123, %v1124
    %v1126 = vsel %vm114, %v1038, 0.0
    %v1127 = vrot.slane %v1126, 4
    %v1128 = vadd.f32 %v1126, %v1127
    %v1129 = vrot.slane %v1128, 2
    %v1130 = vadd.f32 %v1128, %v1129
    %v1131 = vrot.slane %v1130, 1
    %v1132 = vadd.f32 %v1130, %v1131
    %v1133 = vsel %vm114, %v1039, 0.0
    %v1134 = vrot.slane %v1133, 4
    %v1135 = vadd.f32 %v1133, %v1134
    %v1136 = vrot.slane %v1135, 2
    %v1137 = vadd.f32 %v1135, %v1136
    %v1138 = vrot.slane %v1137, 1
    %v1139 = vadd.f32 %v1137, %v1138
    %v1140 = vsel %vm114, %v1040, 0.0
    %v1141 = vrot.slane %v1140, 4
    %v1142 = vadd.f32 %v1140, %v1141
    %v1143 = vrot.slane %v1142, 2
    %v1144 = vadd.f32 %v1142, %v1143
    %v1145 = vrot.slane %v1144, 1
    %v1146 = vadd.f32 %v1144, %v1145
    %v1147 = vsel %vm114, %v1041, 0.0
    %v1148 = vrot.slane %v1147, 4
    %v1149 = vadd.f32 %v1147, %v1148
    %v1150 = vrot.slane %v1149, 2
    %v1151 = vadd.f32 %v1149, %v1150
    %v1152 = vrot.slane %v1151, 1
    %v1153 = vadd.f32 %v1151, %v1152
    %v1154 = vld [vmem:[%s6] sm:$0xf]
    %v1155 = vld [vmem:[%s6 + $0x4] sm:$0xf]
    %v1156 = vld [vmem:[%s6 + $0x8] sm:$0xf]
    %v1157 = vld [vmem:[%s6 + $0xc] sm:$0xf]
    %v1158 = vpack.c.bf16 %v1048, %v1048
    %v1159 = vpack.c.bf16 %v1055, %v1055
    %v1160 = vpack.c.bf16 %v1062, %v1062
    %v1161 = vpack.c.bf16 %v1069, %v1069
    %v1162 = vpack.c.bf16 %v1076, %v1076
    %v1163 = vpack.c.bf16 %v1083, %v1083
    %v1164 = vpack.c.bf16 %v1090, %v1090
    %v1165 = vpack.c.bf16 %v1097, %v1097
    %v1166 = vpack.c.bf16 %v1104, %v1104
    %v1167 = vpack.c.bf16 %v1111, %v1111
    %v1168 = vpack.c.bf16 %v1118, %v1118
    %v1169 = vpack.c.bf16 %v1125, %v1125
    %v1170 = vpack.c.bf16 %v1132, %v1132
    %v1171 = vpack.c.bf16 %v1139, %v1139
    %v1172 = vpack.c.bf16 %v1146, %v1146
    %v1173 = vpack.c.bf16 %v1153, %v1153
    %v1174 = vld [vmem:[%s7] sm:$0x1]
    %v1175 = vlaneseq
    %v1176 = vshrl.u32 %v1175, 7
    %v1177 = vsub.s32 0, %v1176
    %v1178 = vrot.slane %v1174, %v1177
    %v1195 = vunpack.c.l.b16 %v1158
    %v1196 = vunpack.c.l.b16 %v1159
    %v1197 = vunpack.c.l.b16 %v1160
    %v1198 = vunpack.c.l.b16 %v1161
    %v1199 = vunpack.c.l.b16 %v1162
    %v1200 = vunpack.c.l.b16 %v1163
    %v1201 = vunpack.c.l.b16 %v1164
    %v1202 = vunpack.c.l.b16 %v1165
    %v1203 = vunpack.c.l.b16 %v1166
    %v1204 = vunpack.c.l.b16 %v1167
    %v1205 = vunpack.c.l.b16 %v1168
    %v1206 = vunpack.c.l.b16 %v1169
    %v1207 = vunpack.c.l.b16 %v1170
    %v1208 = vunpack.c.l.b16 %v1171
    %v1209 = vunpack.c.l.b16 %v1172
    %v1210 = vunpack.c.l.b16 %v1173
    %vm1211 = vcmask 1041409
    %v1212 = vsel %vm1211, %v1196, %v1195
    %vm1213 = vcmask 1042434
    %v1214 = vsel %vm1213, %v1197, %v1212
    %vm1215 = vcmask 1043459
    %v1216 = vsel %vm1215, %v1198, %v1214
    %vm1217 = vcmask 1044484
    %v1218 = vsel %vm1217, %v1199, %v1216
    %vm1219 = vcmask 1045509
    %v1220 = vsel %vm1219, %v1200, %v1218
    %vm1221 = vcmask 1046534
    %v1222 = vsel %vm1221, %v1201, %v1220
    %vm1223 = vcmask 1047559
    %v1224 = vsel %vm1223, %v1202, %v1222
    %v1225 = vsel %vm1211, %v1204, %v1203
    %v1226 = vsel %vm1213, %v1205, %v1225
    %v1227 = vsel %vm1215, %v1206, %v1226
    %v1228 = vsel %vm1217, %v1207, %v1227
    %v1229 = vsel %vm1219, %v1208, %v1228
    %v1230 = vsel %vm1221, %v1209, %v1229
    %v1231 = vsel %vm1223, %v1210, %v1230
    %v1232 = vpack.c.b16 %v1231, %v1224
    %v1237 = vunpack.c.l.b16 %v1154
    %v1238 = vunpack.c.l.b16 %v1155
    %v1239 = vunpack.c.l.b16 %v1156
    %v1240 = vunpack.c.l.b16 %v1157
    %v1241 = vpack.c.b16 %v1238, %v1237
    %v1242 = vpack.c.b16 %v1240, %v1239
    %v1246 = vsel %vm114, %v1232, 0
    %1248 = vmatprep.subr.bf16.mxu0 0
    %1249 = vmatpush1.bf16.msra.mxu0 0
    %1250 = vmatprep.subr.bf16.mxu0 0
    %1251 = vmatpush1.bf16.msra.mxu0 0
    %1252 = vmatprep.subr.bf16.mxu0 0
    %1253 = vmatpush1.bf16.msra.mxu0 0
    %1254 = vmatprep.subr.bf16.mxu0 0
    %1255 = vmatpush1.bf16.msra.mxu0 0
    %1256 = vmatprep.subr.bf16.mxu0 0
    %1257 = vmatpush1.bf16.msra.mxu0 0
    %1258 = vmatprep.subr.bf16.mxu0 0
    %1259 = vmatpush1.bf16.msra.mxu0 0
    %1260 = vmatprep.subr.bf16.mxu0 0
    %1261 = vmatpush1.bf16.msra.mxu0 %v1242
    %1262 = vmatprep.subr.bf16.mxu0 0
    %1263 = vmatpush1.bf16.msra.mxu0 %v1241
    %1264 = vmatprep.subr.bf16.mxu0 0
    %1265 = vmatpush2.bf16.msra.mxu0 0
    %1266 = vmatprep.subr.bf16.mxu0 0
    %1267 = vmatpush2.bf16.msra.mxu0 0
    %1268 = vmatprep.subr.bf16.mxu0 0
    %1269 = vmatpush2.bf16.msra.mxu0 0
    %1270 = vmatprep.subr.bf16.mxu0 0
    %1271 = vmatpush2.bf16.msra.mxu0 0
    %1272 = vmatprep.subr.bf16.mxu0 0
    %1273 = vmatpush2.bf16.msra.mxu0 0
    %1274 = vmatprep.subr.bf16.mxu0 0
    %1275 = vmatpush2.bf16.msra.mxu0 0
    %1276 = vmatprep.subr.bf16.mxu0 0
    %1277 = vmatpush2.bf16.msra.mxu0 0
    %1278 = vmatprep.subr.bf16.mxu0 0
    %1279 = vmatpush2.bf16.msra.mxu0 0
    %1280 = vmatprep.mubr.bf16.mxu0 0
    %1281 = vmatmul.mubr.bf16.gmra.mxu0 %v1246
    %v1282 = vpop.f32.mrf.mxu0
    %v1283 = vadd.f32 %v1178, %v1282
    %v1284 = vpop.f32.mrf.mxu0
    %v1285 = vpop.f32.mrf.mxu0
    %v1286 = vadd.f32 %v1178, %v1285
    %v1287 = vpop.f32.mrf.mxu0
    %1288 = vdwg.mxu0
    %v1289 = vadd.f32 %v69, %v1283
    %v1290 = vadd.f32 %v70, %v1286
    %v1291 = vld [vmem:[%s8] sm:$0x1]
    %v1292 = vld [vmem:[%s9] sm:$0x1]
    %v1293 = vsel %vm114, %v1289, 0.0
    %1294 = vadd.xlane.f32.xlu0 %v1293
    %v1295 = vpop.xlane.xlu0 %1294
    %v1296 = vsel %vm114, %v1290, 0.0
    %1297 = vadd.xlane.f32.xlu0 %v1296
    %v1298 = vpop.xlane.xlu0 %1297
    %v1299 = vrcp.pop 32.0
    %v1300 = vmul.f32 %v1295, %v1299
    %v1301 = vmul.f32 %v1298, %v1299
    %v1302 = vsub.f32 %v1289, %v1300
    %v1303 = vsub.f32 %v1290, %v1301
    %v1304 = vmul.f32 %v1302, %v1302
    %v1305 = vmul.f32 %v1303, %v1303
    %v1306 = vsel %vm114, %v1304, 0.0
    %1307 = vadd.xlane.f32.xlu0 %v1306
    %v1308 = vpop.xlane.xlu0 %1307
    %v1309 = vsel %vm114, %v1305, 0.0
    %1310 = vadd.xlane.f32.xlu0 %v1309
    %v1311 = vpop.xlane.xlu0 %1310
    %v1312 = vmul.f32 %v1308, %v1299
    %v1313 = vmul.f32 %v1311, %v1299
    %v1314 = vadd.f32 %v1312, 1e-05
    %v1315 = vadd.f32 %v1313, 1e-05
    %v1316 = vrsqrt.pop %v1314
    %v1317 = vrsqrt.pop %v1315
    %v1318 = vmul.f32 %v1302, %v1316
    %v1319 = vmul.f32 %v1303, %v1317
    %v1320 = vlaneseq
    %v1321 = vshrl.u32 %v1320, 7
    %v1322 = vsub.s32 0, %v1321
    %v1323 = vrot.slane %v1291, %v1322
    %v1324 = vmul.f32 %v1318, %v1323
    %v1325 = vmul.f32 %v1319, %v1323
    %v1326 = vlaneseq
    %v1327 = vshrl.u32 %v1326, 7
    %v1328 = vsub.s32 0, %v1327
    %v1329 = vrot.slane %v1292, %v1328
    %v1330 = vadd.f32 %v1324, %v1329
    %v1331 = vadd.f32 %v1325, %v1329
    %v1332 = vld [vmem:[%s12] sm:$0xf]
    %v1333 = vld [vmem:[%s12 + $0x4] sm:$0xf]
    %v1334 = vld [vmem:[%s12 + $0x8] sm:$0xf]
    %v1335 = vld [vmem:[%s12 + $0xc] sm:$0xf]
    %v1336 = vpack.c.bf16 %v1331, %v1330
    %v1337 = vld [vmem:[%s13] sm:$0x1]
    %v1338 = vlaneseq
    %v1339 = vshrl.u32 %v1338, 7
    %v1340 = vsub.s32 0, %v1339
    %v1341 = vrot.slane %v1337, %v1340
    %v1346 = vunpack.c.l.b16 %v1332
    %v1347 = vunpack.c.l.b16 %v1333
    %v1348 = vunpack.c.l.b16 %v1334
    %v1349 = vunpack.c.l.b16 %v1335
    %v1350 = vpack.c.b16 %v1347, %v1346
    %v1351 = vpack.c.b16 %v1349, %v1348
    %v1355 = vsel %vm114, %v1336, 0
    %1357 = vmatprep.subr.bf16.mxu0 0
    %1358 = vmatpush1.bf16.msra.mxu0 0
    %1359 = vmatprep.subr.bf16.mxu0 0
    %1360 = vmatpush1.bf16.msra.mxu0 0
    %1361 = vmatprep.subr.bf16.mxu0 0
    %1362 = vmatpush1.bf16.msra.mxu0 0
    %1363 = vmatprep.subr.bf16.mxu0 0
    %1364 = vmatpush1.bf16.msra.mxu0 0
    %1365 = vmatprep.subr.bf16.mxu0 0
    %1366 = vmatpush1.bf16.msra.mxu0 0
    %1367 = vmatprep.subr.bf16.mxu0 0
    %1368 = vmatpush1.bf16.msra.mxu0 0
    %1369 = vmatprep.subr.bf16.mxu0 0
    %1370 = vmatpush1.bf16.msra.mxu0 %v1351
    %1371 = vmatprep.subr.bf16.mxu0 0
    %1372 = vmatpush1.bf16.msra.mxu0 %v1350
    %1373 = vmatprep.subr.bf16.mxu0 0
    %1374 = vmatpush2.bf16.msra.mxu0 0
    %1375 = vmatprep.subr.bf16.mxu0 0
    %1376 = vmatpush2.bf16.msra.mxu0 0
    %1377 = vmatprep.subr.bf16.mxu0 0
    %1378 = vmatpush2.bf16.msra.mxu0 0
    %1379 = vmatprep.subr.bf16.mxu0 0
    %1380 = vmatpush2.bf16.msra.mxu0 0
    %1381 = vmatprep.subr.bf16.mxu0 0
    %1382 = vmatpush2.bf16.msra.mxu0 0
    %1383 = vmatprep.subr.bf16.mxu0 0
    %1384 = vmatpush2.bf16.msra.mxu0 0
    %1385 = vmatprep.subr.bf16.mxu0 0
    %1386 = vmatpush2.bf16.msra.mxu0 0
    %1387 = vmatprep.subr.bf16.mxu0 0
    %1388 = vmatpush2.bf16.msra.mxu0 0
    %1389 = vmatprep.mubr.bf16.mxu0 0
    %1390 = vmatmul.mubr.bf16.gmra.mxu0 %v1355
    %v1391 = vpop.f32.mrf.mxu0
    %v1392 = vadd.f32 %v1341, %v1391
    %v1393 = vpop.f32.mrf.mxu0
    %v1394 = vpop.f32.mrf.mxu0
    %v1395 = vadd.f32 %v1341, %v1394
    %v1396 = vpop.f32.mrf.mxu0
    %1397 = vdwg.mxu0
    %v1398 = vmax.f32 %v1392, 0.0
    %v1399 = vmax.f32 %v1395, 0.0
    %v1400 = vld [vmem:[%s14] sm:$0xf]
    %v1401 = vld [vmem:[%s14 + $0x4] sm:$0xf]
    %v1402 = vld [vmem:[%s14 + $0x8] sm:$0xf]
    %v1403 = vld [vmem:[%s14 + $0xc] sm:$0xf]
    %v1404 = vld [vmem:[%s14 + $0x10] sm:$0xf]
    %v1405 = vld [vmem:[%s14 + $0x14] sm:$0xf]
    %v1406 = vld [vmem:[%s14 + $0x18] sm:$0xf]
    %v1407 = vld [vmem:[%s14 + $0x1c] sm:$0xf]
    %v1408 = vpack.c.bf16 %v1399, %v1398
    %v1409 = vld [vmem:[%s15] sm:$0x1]
    %v1410 = vlaneseq
    %v1411 = vshrl.u32 %v1410, 7
    %v1412 = vsub.s32 0, %v1411
    %v1413 = vrot.slane %v1409, %v1412
    %v1422 = vunpack.c.l.b16 %v1400
    %v1423 = vunpack.c.l.b16 %v1401
    %v1424 = vunpack.c.l.b16 %v1402
    %v1425 = vunpack.c.l.b16 %v1403
    %v1426 = vunpack.c.l.b16 %v1404
    %v1427 = vunpack.c.l.b16 %v1405
    %v1428 = vunpack.c.l.b16 %v1406
    %v1429 = vunpack.c.l.b16 %v1407
    %v1430 = vpack.c.b16 %v1423, %v1422
    %v1431 = vpack.c.b16 %v1425, %v1424
    %v1432 = vpack.c.b16 %v1427, %v1426
    %v1433 = vpack.c.b16 %v1429, %v1428
    %vm1438 = vcmask 523264
    %v1440 = vsel %vm1438, %v1408, 0
    %1442 = vmatprep.subr.bf16.mxu0 0
    %1443 = vmatpush1.bf16.msra.mxu0 0
    %1444 = vmatprep.subr.bf16.mxu0 0
    %1445 = vmatpush1.bf16.msra.mxu0 0
    %1446 = vmatprep.subr.bf16.mxu0 0
    %1447 = vmatpush1.bf16.msra.mxu0 0
    %1448 = vmatprep.subr.bf16.mxu0 0
    %1449 = vmatpush1.bf16.msra.mxu0 0
    %1450 = vmatprep.subr.bf16.mxu0 0
    %1451 = vmatpush1.bf16.msra.mxu0 %v1433
    %1452 = vmatprep.subr.bf16.mxu0 0
    %1453 = vmatpush1.bf16.msra.mxu0 %v1432
    %1454 = vmatprep.subr.bf16.mxu0 0
    %1455 = vmatpush1.bf16.msra.mxu0 %v1431
    %1456 = vmatprep.subr.bf16.mxu0 0
    %1457 = vmatpush1.bf16.msra.mxu0 %v1430
    %1458 = vmatprep.subr.bf16.mxu0 0
    %1459 = vmatpush2.bf16.msra.mxu0 0
    %1460 = vmatprep.subr.bf16.mxu0 0
    %1461 = vmatpush2.bf16.msra.mxu0 0
    %1462 = vmatprep.subr.bf16.mxu0 0
    %1463 = vmatpush2.bf16.msra.mxu0 0
    %1464 = vmatprep.subr.bf16.mxu0 0
    %1465 = vmatpush2.bf16.msra.mxu0 0
    %1466 = vmatprep.subr.bf16.mxu0 0
    %1467 = vmatpush2.bf16.msra.mxu0 0
    %1468 = vmatprep.subr.bf16.mxu0 0
    %1469 = vmatpush2.bf16.msra.mxu0 0
    %1470 = vmatprep.subr.bf16.mxu0 0
    %1471 = vmatpush2.bf16.msra.mxu0 0
    %1472 = vmatprep.subr.bf16.mxu0 0
    %1473 = vmatpush2.bf16.msra.mxu0 0
    %1474 = vmatprep.mubr.bf16.mxu0 0
    %1475 = vmatmul.mubr.bf16.gmra.mxu0 %v1440
    %v1476 = vpop.f32.mrf.mxu0
    %v1477 = vadd.f32 %v1413, %v1476
    %v1478 = vpop.f32.mrf.mxu0
    %v1479 = vpop.f32.mrf.mxu0
    %v1480 = vadd.f32 %v1413, %v1479
    %v1481 = vpop.f32.mrf.mxu0
    %1482 = vdwg.mxu0
    %v1483 = vadd.f32 %v1330, %v1477
    %v1484 = vadd.f32 %v1331, %v1480
    %v1485 = vld [vmem:[%s10] sm:$0x1]
    %v1486 = vld [vmem:[%s11] sm:$0x1]
    %v1487 = vsel %vm114, %v1483, 0.0
    %1488 = vadd.xlane.f32.xlu0 %v1487
    %v1489 = vpop.xlane.xlu0 %1488
    %v1490 = vsel %vm114, %v1484, 0.0
    %1491 = vadd.xlane.f32.xlu0 %v1490
    %v1492 = vpop.xlane.xlu0 %1491
    %v1493 = vmul.f32 %v1489, %v1299
    %v1494 = vmul.f32 %v1492, %v1299
    %v1495 = vsub.f32 %v1483, %v1493
    %v1496 = vsub.f32 %v1484, %v1494
    %v1497 = vmul.f32 %v1495, %v1495
    %v1498 = vmul.f32 %v1496, %v1496
    %v1499 = vsel %vm114, %v1497, 0.0
    %1500 = vadd.xlane.f32.xlu0 %v1499
    %v1501 = vpop.xlane.xlu0 %1500
    %v1502 = vsel %vm114, %v1498, 0.0
    %1503 = vadd.xlane.f32.xlu0 %v1502
    %v1504 = vpop.xlane.xlu0 %1503
    %v1505 = vmul.f32 %v1501, %v1299
    %v1506 = vmul.f32 %v1504, %v1299
    %v1507 = vadd.f32 %v1505, 1e-05
    %v1508 = vadd.f32 %v1506, 1e-05
    %v1509 = vrsqrt.pop %v1507
    %v1510 = vrsqrt.pop %v1508
    %v1511 = vmul.f32 %v1495, %v1509
    %v1512 = vmul.f32 %v1496, %v1510
    %v1513 = vlaneseq
    %v1514 = vshrl.u32 %v1513, 7
    %v1515 = vsub.s32 0, %v1514
    %v1516 = vrot.slane %v1485, %v1515
    %v1517 = vmul.f32 %v1511, %v1516
    %v1518 = vmul.f32 %v1512, %v1516
    %v1519 = vlaneseq
    %v1520 = vshrl.u32 %v1519, 7
    %v1521 = vsub.s32 0, %v1520
    %v1522 = vrot.slane %v1486, %v1521
    %v1523 = vadd.f32 %v1517, %v1522
    %v1524 = vadd.f32 %v1518, %v1522
    %s1525 = scalar_lea.vmem %s4, 16
    %v1526 = vld [vmem:[%s1525] sm:$0xf]
    %v1527 = vld [vmem:[%s1525 + $0x4] sm:$0xf]
    %v1528 = vld [vmem:[%s1525 + $0x8] sm:$0xf]
    %v1529 = vld [vmem:[%s1525 + $0xc] sm:$0xf]
    %v1530 = vpack.c.bf16 %v1524, %v1523
    %v1531 = vld [vmem:[%s5 + $0x1] sm:$0x1]
    %v1532 = vlaneseq
    %v1533 = vshrl.u32 %v1532, 7
    %v1534 = vsub.s32 0, %v1533
    %v1535 = vrot.slane %v1531, %v1534
    %v1540 = vunpack.c.l.b16 %v1526
    %v1541 = vunpack.c.l.b16 %v1527
    %v1542 = vunpack.c.l.b16 %v1528
    %v1543 = vunpack.c.l.b16 %v1529
    %v1544 = vpack.c.b16 %v1541, %v1540
    %v1545 = vpack.c.b16 %v1543, %v1542
    %v1549 = vsel %vm114, %v1530, 0
    %1551 = vmatprep.subr.bf16.mxu0 0
    %1552 = vmatpush1.bf16.msra.mxu0 0
    %1553 = vmatprep.subr.bf16.mxu0 0
    %1554 = vmatpush1.bf16.msra.mxu0 0
    %1555 = vmatprep.subr.bf16.mxu0 0
    %1556 = vmatpush1.bf16.msra.mxu0 0
    %1557 = vmatprep.subr.bf16.mxu0 0
    %1558 = vmatpush1.bf16.msra.mxu0 0
    %1559 = vmatprep.subr.bf16.mxu0 0
    %1560 = vmatpush1.bf16.msra.mxu0 0
    %1561 = vmatprep.subr.bf16.mxu0 0
    %1562 = vmatpush1.bf16.msra.mxu0 0
    %1563 = vmatprep.subr.bf16.mxu0 0
    %1564 = vmatpush1.bf16.msra.mxu0 %v1545
    %1565 = vmatprep.subr.bf16.mxu0 0
    %1566 = vmatpush1.bf16.msra.mxu0 %v1544
    %1567 = vmatprep.subr.bf16.mxu0 0
    %1568 = vmatpush2.bf16.msra.mxu0 0
    %1569 = vmatprep.subr.bf16.mxu0 0
    %1570 = vmatpush2.bf16.msra.mxu0 0
    %1571 = vmatprep.subr.bf16.mxu0 0
    %1572 = vmatpush2.bf16.msra.mxu0 0
    %1573 = vmatprep.subr.bf16.mxu0 0
    %1574 = vmatpush2.bf16.msra.mxu0 0
    %1575 = vmatprep.subr.bf16.mxu0 0
    %1576 = vmatpush2.bf16.msra.mxu0 0
    %1577 = vmatprep.subr.bf16.mxu0 0
    %1578 = vmatpush2.bf16.msra.mxu0 0
    %1579 = vmatprep.subr.bf16.mxu0 0
    %1580 = vmatpush2.bf16.msra.mxu0 0
    %1581 = vmatprep.subr.bf16.mxu0 0
    %1582 = vmatpush2.bf16.msra.mxu0 0
    %1583 = vmatprep.mubr.bf16.mxu0 0
    %1584 = vmatmul.mubr.bf16.gmra.mxu0 %v1549
    %v1585 = vpop.f32.mrf.mxu0
    %v1586 = vadd.f32 %v1535, %v1585
    %v1587 = vpop.f32.mrf.mxu0
    %v1588 = vpop.f32.mrf.mxu0
    %v1589 = vadd.f32 %v1535, %v1588
    %v1590 = vpop.f32.mrf.mxu0
    %1591 = vdwg.mxu0
    %v1594 = vcombine.high %v1586, %v1586
    %v1596 = vunpack.c.l.s4 1966171168
    %v1597 = vunpack.c.0.s8 %v1596
    %v1598 = vlaneseq
    %v1599 = vshrl.u32 %v1598, 7
    %v1600 = vsub.s32 %v1597, %v1599
    %v1601 = vrot.slane %v1586, %v1600
    %v1603 = vunpack.c.l.s4 1966171168
    %v1604 = vunpack.c.0.s8 %v1603
    %v1605 = vlaneseq
    %v1606 = vshrl.u32 %v1605, 7
    %v1607 = vsub.s32 %v1604, %v1606
    %v1608 = vrot.slane %v1594, %v1607
    %v1609 = vcombine.high %v1601, %v1601
    %v1610 = vcombine.high %v1608, %v1608
    %v1612 = vunpack.c.l.s4 1966171168
    %v1613 = vunpack.c.0.s8 %v1612
    %v1614 = vlaneseq
    %v1615 = vshrl.u32 %v1614, 7
    %v1616 = vsub.s32 %v1613, %v1615
    %v1617 = vrot.slane %v1601, %v1616
    %v1619 = vunpack.c.l.s4 1966171168
    %v1620 = vunpack.c.0.s8 %v1619
    %v1621 = vlaneseq
    %v1622 = vshrl.u32 %v1621, 7
    %v1623 = vsub.s32 %v1620, %v1622
    %v1624 = vrot.slane %v1608, %v1623
    %v1626 = vunpack.c.l.s4 1966171168
    %v1627 = vunpack.c.0.s8 %v1626
    %v1628 = vlaneseq
    %v1629 = vshrl.u32 %v1628, 7
    %v1630 = vsub.s32 %v1627, %v1629
    %v1631 = vrot.slane %v1609, %v1630
    %v1633 = vunpack.c.l.s4 1966171168
    %v1634 = vunpack.c.0.s8 %v1633
    %v1635 = vlaneseq
    %v1636 = vshrl.u32 %v1635, 7
    %v1637 = vsub.s32 %v1634, %v1636
    %v1638 = vrot.slane %v1610, %v1637
    %v1639 = vcombine.high %v1617, %v1617
    %v1640 = vcombine.high %v1624, %v1624
    %v1641 = vcombine.high %v1631, %v1631
    %v1642 = vcombine.high %v1638, %v1638
    %v1643 = vcombine.high %v1589, %v1589
    %v1645 = vunpack.c.l.s4 1966171168
    %v1646 = vunpack.c.0.s8 %v1645
    %v1647 = vlaneseq
    %v1648 = vshrl.u32 %v1647, 7
    %v1649 = vsub.s32 %v1646, %v1648
    %v1650 = vrot.slane %v1589, %v1649
    %v1652 = vunpack.c.l.s4 1966171168
    %v1653 = vunpack.c.0.s8 %v1652
    %v1654 = vlaneseq
    %v1655 = vshrl.u32 %v1654, 7
    %v1656 = vsub.s32 %v1653, %v1655
    %v1657 = vrot.slane %v1643, %v1656
    %v1658 = vcombine.high %v1650, %v1650
    %v1659 = vcombine.high %v1657, %v1657
    %v1661 = vunpack.c.l.s4 1966171168
    %v1662 = vunpack.c.0.s8 %v1661
    %v1663 = vlaneseq
    %v1664 = vshrl.u32 %v1663, 7
    %v1665 = vsub.s32 %v1662, %v1664
    %v1666 = vrot.slane %v1650, %v1665
    %v1668 = vunpack.c.l.s4 1966171168
    %v1669 = vunpack.c.0.s8 %v1668
    %v1670 = vlaneseq
    %v1671 = vshrl.u32 %v1670, 7
    %v1672 = vsub.s32 %v1669, %v1671
    %v1673 = vrot.slane %v1657, %v1672
    %v1675 = vunpack.c.l.s4 1966171168
    %v1676 = vunpack.c.0.s8 %v1675
    %v1677 = vlaneseq
    %v1678 = vshrl.u32 %v1677, 7
    %v1679 = vsub.s32 %v1676, %v1678
    %v1680 = vrot.slane %v1658, %v1679
    %v1682 = vunpack.c.l.s4 1966171168
    %v1683 = vunpack.c.0.s8 %v1682
    %v1684 = vlaneseq
    %v1685 = vshrl.u32 %v1684, 7
    %v1686 = vsub.s32 %v1683, %v1685
    %v1687 = vrot.slane %v1659, %v1686
    %v1688 = vcombine.high %v1666, %v1666
    %v1689 = vcombine.high %v1673, %v1673
    %v1690 = vcombine.high %v1680, %v1680
    %v1691 = vcombine.high %v1687, %v1687
    %v1692 = vlaneseq
    %v1693 = vshrl.u32 %v1692, 7
    %v1694 = vsub.s32 0, %v1693
    %v1695 = vrot.slane %v1617, %v1694
    %v1696 = vlaneseq
    %v1697 = vshrl.u32 %v1696, 7
    %v1698 = vsub.s32 0, %v1697
    %v1699 = vrot.slane %v1631, %v1698
    %v1700 = vlaneseq
    %v1701 = vshrl.u32 %v1700, 7
    %v1702 = vsub.s32 0, %v1701
    %v1703 = vrot.slane %v1639, %v1702
    %v1704 = vlaneseq
    %v1705 = vshrl.u32 %v1704, 7
    %v1706 = vsub.s32 0, %v1705
    %v1707 = vrot.slane %v1641, %v1706
    %v1708 = vlaneseq
    %v1709 = vshrl.u32 %v1708, 7
    %v1710 = vsub.s32 0, %v1709
    %v1711 = vrot.slane %v1624, %v1710
    %v1712 = vlaneseq
    %v1713 = vshrl.u32 %v1712, 7
    %v1714 = vsub.s32 0, %v1713
    %v1715 = vrot.slane %v1638, %v1714
    %v1716 = vlaneseq
    %v1717 = vshrl.u32 %v1716, 7
    %v1718 = vsub.s32 0, %v1717
    %v1719 = vrot.slane %v1640, %v1718
    %v1720 = vlaneseq
    %v1721 = vshrl.u32 %v1720, 7
    %v1722 = vsub.s32 0, %v1721
    %v1723 = vrot.slane %v1642, %v1722
    %v1724 = vlaneseq
    %v1725 = vshrl.u32 %v1724, 7
    %v1726 = vsub.s32 0, %v1725
    %v1727 = vrot.slane %v1666, %v1726
    %v1728 = vlaneseq
    %v1729 = vshrl.u32 %v1728, 7
    %v1730 = vsub.s32 0, %v1729
    %v1731 = vrot.slane %v1680, %v1730
    %v1732 = vlaneseq
    %v1733 = vshrl.u32 %v1732, 7
    %v1734 = vsub.s32 0, %v1733
    %v1735 = vrot.slane %v1688, %v1734
    %v1736 = vlaneseq
    %v1737 = vshrl.u32 %v1736, 7
    %v1738 = vsub.s32 0, %v1737
    %v1739 = vrot.slane %v1690, %v1738
    %v1740 = vlaneseq
    %v1741 = vshrl.u32 %v1740, 7
    %v1742 = vsub.s32 0, %v1741
    %v1743 = vrot.slane %v1673, %v1742
    %v1744 = vlaneseq
    %v1745 = vshrl.u32 %v1744, 7
    %v1746 = vsub.s32 0, %v1745
    %v1747 = vrot.slane %v1687, %v1746
    %v1748 = vlaneseq
    %v1749 = vshrl.u32 %v1748, 7
    %v1750 = vsub.s32 0, %v1749
    %v1751 = vrot.slane %v1689, %v1750
    %v1752 = vlaneseq
    %v1753 = vshrl.u32 %v1752, 7
    %v1754 = vsub.s32 0, %v1753
    %v1755 = vrot.slane %v1691, %v1754
    %1772 = vrot.lane.b32.xlu0 %v1586, 96
    %v1773 = vpop.permute.xlu0 %1772
    %1774 = vrot.lane.b32.xlu0 %v1589, 96
    %v1775 = vpop.permute.xlu0 %1774
    %v1778 = vmul.f32 %v1695, %v1773
    %v1779 = vmul.f32 %v1699, %v1773
    %v1780 = vmul.f32 %v1703, %v1773
    %v1781 = vmul.f32 %v1707, %v1773
    %v1782 = vmul.f32 %v1711, %v1773
    %v1783 = vmul.f32 %v1715, %v1773
    %v1784 = vmul.f32 %v1719, %v1773
    %v1785 = vmul.f32 %v1723, %v1773
    %v1786 = vmul.f32 %v1727, %v1775
    %v1787 = vmul.f32 %v1731, %v1775
    %v1788 = vmul.f32 %v1735, %v1775
    %v1789 = vmul.f32 %v1739, %v1775
    %v1790 = vmul.f32 %v1743, %v1775
    %v1791 = vmul.f32 %v1747, %v1775
    %v1792 = vmul.f32 %v1751, %v1775
    %v1793 = vmul.f32 %v1755, %v1775
    %v1794 = vpack.c.bf16 %v1779, %v1778
    %v1795 = vpack.c.bf16 %v1781, %v1780
    %v1796 = vpack.c.bf16 %v1783, %v1782
    %v1797 = vpack.c.bf16 %v1785, %v1784
    %v1798 = vpack.c.bf16 %v1787, %v1786
    %v1799 = vpack.c.bf16 %v1789, %v1788
    %v1800 = vpack.c.bf16 %v1791, %v1790
    %v1801 = vpack.c.bf16 %v1793, %v1792
    %v1803 = vsel %vm114, %v1794, 0
    %v1806 = vsel %vm114, %v1795, 0
    %v1809 = vsel %vm114, %v1796, 0
    %v1812 = vsel %vm114, %v1797, 0
    %v1815 = vsel %vm114, %v1798, 0
    %v1818 = vsel %vm114, %v1799, 0
    %v1821 = vsel %vm114, %v1800, 0
    %v1824 = vsel %vm114, %v1801, 0
    %1826 = vmatprep.subr.bf16.mxu0 0
    %1827 = vmatpush1.bf16.msra.mxu0 0
    %1828 = vmatprep.subr.bf16.mxu0 0
    %1829 = vmatpush1.bf16.msra.mxu0 0
    %1830 = vmatprep.subr.bf16.mxu0 0
    %1831 = vmatpush1.bf16.msra.mxu0 0
    %1832 = vmatprep.subr.bf16.mxu0 0
    %1833 = vmatpush1.bf16.msra.mxu0 0
    %1834 = vmatprep.subr.bf16.mxu0 0
    %1835 = vmatpush1.bf16.msra.mxu0 0
    %1836 = vmatprep.subr.bf16.mxu0 0
    %1837 = vmatpush1.bf16.msra.mxu0 0
    %1838 = vmatprep.subr.bf16.mxu0 0
    %1839 = vmatpush1.bf16.msra.mxu0 %v458
    %1840 = vmatprep.subr.bf16.mxu0 0
    %1841 = vmatpush1.bf16.msra.mxu0 %v457
    %1842 = vmatprep.subr.bf16.mxu0 0
    %1843 = vmatpush2.bf16.msra.mxu0 0
    %1844 = vmatprep.subr.bf16.mxu0 0
    %1845 = vmatpush2.bf16.msra.mxu0 0
    %1846 = vmatprep.subr.bf16.mxu0 0
    %1847 = vmatpush2.bf16.msra.mxu0 0
    %1848 = vmatprep.subr.bf16.mxu0 0
    %1849 = vmatpush2.bf16.msra.mxu0 0
    %1850 = vmatprep.subr.bf16.mxu0 0
    %1851 = vmatpush2.bf16.msra.mxu0 0
    %1852 = vmatprep.subr.bf16.mxu0 0
    %1853 = vmatpush2.bf16.msra.mxu0 0
    %1854 = vmatprep.subr.bf16.mxu0 0
    %1855 = vmatpush2.bf16.msra.mxu0 0
    %1856 = vmatprep.subr.bf16.mxu0 0
    %1857 = vmatpush2.bf16.msra.mxu0 0
    %1858 = vmatprep.mubr.bf16.mxu0 0
    %1859 = vmatmul.mubr.bf16.gmra.mxu0 %v1803
    %v1860 = vpop.f32.mrf.mxu0
    %v1861 = vadd.f32 %v372, %v1860
    %v1862 = vpop.f32.mrf.mxu0
    %v1863 = vpop.f32.mrf.mxu0
    %v1864 = vadd.f32 %v377, %v1863
    %v1865 = vpop.f32.mrf.mxu0
    %1866 = vmatprep.mubr.bf16.mxu0 0
    %1867 = vmatmul.mubr.bf16.gmra.mxu0 %v1806
    %v1868 = vpop.f32.mrf.mxu0
    %v1869 = vadd.f32 %v382, %v1868
    %v1870 = vpop.f32.mrf.mxu0
    %v1871 = vpop.f32.mrf.mxu0
    %v1872 = vadd.f32 %v387, %v1871
    %v1873 = vpop.f32.mrf.mxu0
    %1874 = vmatprep.mubr.bf16.mxu0 0
    %1875 = vmatmul.mubr.bf16.gmra.mxu0 %v1809
    %v1876 = vpop.f32.mrf.mxu0
    %v1877 = vadd.f32 %v392, %v1876
    %v1878 = vpop.f32.mrf.mxu0
    %v1879 = vpop.f32.mrf.mxu0
    %v1880 = vadd.f32 %v397, %v1879
    %v1881 = vpop.f32.mrf.mxu0
    %1882 = vmatprep.mubr.bf16.mxu0 0
    %1883 = vmatmul.mubr.bf16.gmra.mxu0 %v1812
    %v1884 = vpop.f32.mrf.mxu0
    %v1885 = vadd.f32 %v402, %v1884
    %v1886 = vpop.f32.mrf.mxu0
    %v1887 = vpop.f32.mrf.mxu0
    %v1888 = vadd.f32 %v407, %v1887
    %v1889 = vpop.f32.mrf.mxu0
    %1890 = vmatprep.mubr.bf16.mxu0 0
    %1891 = vmatmul.mubr.bf16.gmra.mxu0 %v1815
    %v1892 = vpop.f32.mrf.mxu0
    %v1893 = vadd.f32 %v412, %v1892
    %v1894 = vpop.f32.mrf.mxu0
    %v1895 = vpop.f32.mrf.mxu0
    %v1896 = vadd.f32 %v417, %v1895
    %v1897 = vpop.f32.mrf.mxu0
    %1898 = vmatprep.mubr.bf16.mxu0 0
    %1899 = vmatmul.mubr.bf16.gmra.mxu0 %v1818
    %v1900 = vpop.f32.mrf.mxu0
    %v1901 = vadd.f32 %v422, %v1900
    %v1902 = vpop.f32.mrf.mxu0
    %v1903 = vpop.f32.mrf.mxu0
    %v1904 = vadd.f32 %v427, %v1903
    %v1905 = vpop.f32.mrf.mxu0
    %1906 = vmatprep.mubr.bf16.mxu0 0
    %1907 = vmatmul.mubr.bf16.gmra.mxu0 %v1821
    %v1908 = vpop.f32.mrf.mxu0
    %v1909 = vadd.f32 %v432, %v1908
    %v1910 = vpop.f32.mrf.mxu0
    %v1911 = vpop.f32.mrf.mxu0
    %v1912 = vadd.f32 %v437, %v1911
    %v1913 = vpop.f32.mrf.mxu0
    %1914 = vmatprep.mubr.bf16.mxu0 0
    %1915 = vmatmul.mubr.bf16.gmra.mxu0 %v1824
    %v1916 = vpop.f32.mrf.mxu0
    %v1917 = vadd.f32 %v442, %v1916
    %v1918 = vpop.f32.mrf.mxu0
    %v1919 = vpop.f32.mrf.mxu0
    %v1920 = vadd.f32 %v447, %v1919
    %v1921 = vpop.f32.mrf.mxu0
    %1922 = vdwg.mxu0
    %v1923 = vsel %vm582, %v1861, -inf
    %v1924 = vrot.slane %v1923, 4
    %v1925 = vmax.f32 %v1923, %v1924
    %v1926 = vrot.slane %v1925, 2
    %v1927 = vmax.f32 %v1925, %v1926
    %v1928 = vrot.slane %v1927, 1
    %v1929 = vmax.f32 %v1927, %v1928
    %v1930 = vsel %vm582, %v1864, -inf
    %v1931 = vrot.slane %v1930, 4
    %v1932 = vmax.f32 %v1930, %v1931
    %v1933 = vrot.slane %v1932, 2
    %v1934 = vmax.f32 %v1932, %v1933
    %v1935 = vrot.slane %v1934, 1
    %v1936 = vmax.f32 %v1934, %v1935
    %v1937 = vsel %vm582, %v1869, -inf
    %v1938 = vrot.slane %v1937, 4
    %v1939 = vmax.f32 %v1937, %v1938
    %v1940 = vrot.slane %v1939, 2
    %v1941 = vmax.f32 %v1939, %v1940
    %v1942 = vrot.slane %v1941, 1
    %v1943 = vmax.f32 %v1941, %v1942
    %v1944 = vsel %vm582, %v1872, -inf
    %v1945 = vrot.slane %v1944, 4
    %v1946 = vmax.f32 %v1944, %v1945
    %v1947 = vrot.slane %v1946, 2
    %v1948 = vmax.f32 %v1946, %v1947
    %v1949 = vrot.slane %v1948, 1
    %v1950 = vmax.f32 %v1948, %v1949
    %v1951 = vsel %vm582, %v1877, -inf
    %v1952 = vrot.slane %v1951, 4
    %v1953 = vmax.f32 %v1951, %v1952
    %v1954 = vrot.slane %v1953, 2
    %v1955 = vmax.f32 %v1953, %v1954
    %v1956 = vrot.slane %v1955, 1
    %v1957 = vmax.f32 %v1955, %v1956
    %v1958 = vsel %vm582, %v1880, -inf
    %v1959 = vrot.slane %v1958, 4
    %v1960 = vmax.f32 %v1958, %v1959
    %v1961 = vrot.slane %v1960, 2
    %v1962 = vmax.f32 %v1960, %v1961
    %v1963 = vrot.slane %v1962, 1
    %v1964 = vmax.f32 %v1962, %v1963
    %v1965 = vsel %vm582, %v1885, -inf
    %v1966 = vrot.slane %v1965, 4
    %v1967 = vmax.f32 %v1965, %v1966
    %v1968 = vrot.slane %v1967, 2
    %v1969 = vmax.f32 %v1967, %v1968
    %v1970 = vrot.slane %v1969, 1
    %v1971 = vmax.f32 %v1969, %v1970
    %v1972 = vsel %vm582, %v1888, -inf
    %v1973 = vrot.slane %v1972, 4
    %v1974 = vmax.f32 %v1972, %v1973
    %v1975 = vrot.slane %v1974, 2
    %v1976 = vmax.f32 %v1974, %v1975
    %v1977 = vrot.slane %v1976, 1
    %v1978 = vmax.f32 %v1976, %v1977
    %v1979 = vsel %vm582, %v1893, -inf
    %v1980 = vrot.slane %v1979, 4
    %v1981 = vmax.f32 %v1979, %v1980
    %v1982 = vrot.slane %v1981, 2
    %v1983 = vmax.f32 %v1981, %v1982
    %v1984 = vrot.slane %v1983, 1
    %v1985 = vmax.f32 %v1983, %v1984
    %v1986 = vsel %vm582, %v1896, -inf
    %v1987 = vrot.slane %v1986, 4
    %v1988 = vmax.f32 %v1986, %v1987
    %v1989 = vrot.slane %v1988, 2
    %v1990 = vmax.f32 %v1988, %v1989
    %v1991 = vrot.slane %v1990, 1
    %v1992 = vmax.f32 %v1990, %v1991
    %v1993 = vsel %vm582, %v1901, -inf
    %v1994 = vrot.slane %v1993, 4
    %v1995 = vmax.f32 %v1993, %v1994
    %v1996 = vrot.slane %v1995, 2
    %v1997 = vmax.f32 %v1995, %v1996
    %v1998 = vrot.slane %v1997, 1
    %v1999 = vmax.f32 %v1997, %v1998
    %v2000 = vsel %vm582, %v1904, -inf
    %v2001 = vrot.slane %v2000, 4
    %v2002 = vmax.f32 %v2000, %v2001
    %v2003 = vrot.slane %v2002, 2
    %v2004 = vmax.f32 %v2002, %v2003
    %v2005 = vrot.slane %v2004, 1
    %v2006 = vmax.f32 %v2004, %v2005
    %v2007 = vsel %vm582, %v1909, -inf
    %v2008 = vrot.slane %v2007, 4
    %v2009 = vmax.f32 %v2007, %v2008
    %v2010 = vrot.slane %v2009, 2
    %v2011 = vmax.f32 %v2009, %v2010
    %v2012 = vrot.slane %v2011, 1
    %v2013 = vmax.f32 %v2011, %v2012
    %v2014 = vsel %vm582, %v1912, -inf
    %v2015 = vrot.slane %v2014, 4
    %v2016 = vmax.f32 %v2014, %v2015
    %v2017 = vrot.slane %v2016, 2
    %v2018 = vmax.f32 %v2016, %v2017
    %v2019 = vrot.slane %v2018, 1
    %v2020 = vmax.f32 %v2018, %v2019
    %v2021 = vsel %vm582, %v1917, -inf
    %v2022 = vrot.slane %v2021, 4
    %v2023 = vmax.f32 %v2021, %v2022
    %v2024 = vrot.slane %v2023, 2
    %v2025 = vmax.f32 %v2023, %v2024
    %v2026 = vrot.slane %v2025, 1
    %v2027 = vmax.f32 %v2025, %v2026
    %v2028 = vsel %vm582, %v1920, -inf
    %v2029 = vrot.slane %v2028, 4
    %v2030 = vmax.f32 %v2028, %v2029
    %v2031 = vrot.slane %v2030, 2
    %v2032 = vmax.f32 %v2030, %v2031
    %v2033 = vrot.slane %v2032, 1
    %v2034 = vmax.f32 %v2032, %v2033
    %v2035 = vsub.f32 %v1861, %v1929
    %v2036 = vsub.f32 %v1864, %v1936
    %v2037 = vsub.f32 %v1869, %v1943
    %v2038 = vsub.f32 %v1872, %v1950
    %v2039 = vsub.f32 %v1877, %v1957
    %v2040 = vsub.f32 %v1880, %v1964
    %v2041 = vsub.f32 %v1885, %v1971
    %v2042 = vsub.f32 %v1888, %v1978
    %v2043 = vsub.f32 %v1893, %v1985
    %v2044 = vsub.f32 %v1896, %v1992
    %v2045 = vsub.f32 %v1901, %v1999
    %v2046 = vsub.f32 %v1904, %v2006
    %v2047 = vsub.f32 %v1909, %v2013
    %v2048 = vsub.f32 %v1912, %v2020
    %v2049 = vsub.f32 %v1917, %v2027
    %v2050 = vsub.f32 %v1920, %v2034
    %v2051 = vmul.f32 %v2035, 1.442695
    %v2052 = vpow.pop %v2051
    %v2053 = vmul.f32 %v2036, 1.442695
    %v2054 = vpow.pop %v2053
    %v2055 = vmul.f32 %v2037, 1.442695
    %v2056 = vpow.pop %v2055
    %v2057 = vmul.f32 %v2038, 1.442695
    %v2058 = vpow.pop %v2057
    %v2059 = vmul.f32 %v2039, 1.442695
    %v2060 = vpow.pop %v2059
    %v2061 = vmul.f32 %v2040, 1.442695
    %v2062 = vpow.pop %v2061
    %v2063 = vmul.f32 %v2041, 1.442695
    %v2064 = vpow.pop %v2063
    %v2065 = vmul.f32 %v2042, 1.442695
    %v2066 = vpow.pop %v2065
    %v2067 = vmul.f32 %v2043, 1.442695
    %v2068 = vpow.pop %v2067
    %v2069 = vmul.f32 %v2044, 1.442695
    %v2070 = vpow.pop %v2069
    %v2071 = vmul.f32 %v2045, 1.442695
    %v2072 = vpow.pop %v2071
    %v2073 = vmul.f32 %v2046, 1.442695
    %v2074 = vpow.pop %v2073
    %v2075 = vmul.f32 %v2047, 1.442695
    %v2076 = vpow.pop %v2075
    %v2077 = vmul.f32 %v2048, 1.442695
    %v2078 = vpow.pop %v2077
    %v2079 = vmul.f32 %v2049, 1.442695
    %v2080 = vpow.pop %v2079
    %v2081 = vmul.f32 %v2050, 1.442695
    %v2082 = vpow.pop %v2081
    %v2083 = vsel %vm582, %v2052, 0.0
    %v2084 = vrot.slane %v2083, 4
    %v2085 = vadd.f32 %v2083, %v2084
    %v2086 = vrot.slane %v2085, 2
    %v2087 = vadd.f32 %v2085, %v2086
    %v2088 = vrot.slane %v2087, 1
    %v2089 = vadd.f32 %v2087, %v2088
    %v2090 = vsel %vm582, %v2054, 0.0
    %v2091 = vrot.slane %v2090, 4
    %v2092 = vadd.f32 %v2090, %v2091
    %v2093 = vrot.slane %v2092, 2
    %v2094 = vadd.f32 %v2092, %v2093
    %v2095 = vrot.slane %v2094, 1
    %v2096 = vadd.f32 %v2094, %v2095
    %v2097 = vsel %vm582, %v2056, 0.0
    %v2098 = vrot.slane %v2097, 4
    %v2099 = vadd.f32 %v2097, %v2098
    %v2100 = vrot.slane %v2099, 2
    %v2101 = vadd.f32 %v2099, %v2100
    %v2102 = vrot.slane %v2101, 1
    %v2103 = vadd.f32 %v2101, %v2102
    %v2104 = vsel %vm582, %v2058, 0.0
    %v2105 = vrot.slane %v2104, 4
    %v2106 = vadd.f32 %v2104, %v2105
    %v2107 = vrot.slane %v2106, 2
    %v2108 = vadd.f32 %v2106, %v2107
    %v2109 = vrot.slane %v2108, 1
    %v2110 = vadd.f32 %v2108, %v2109
    %v2111 = vsel %vm582, %v2060, 0.0
    %v2112 = vrot.slane %v2111, 4
    %v2113 = vadd.f32 %v2111, %v2112
    %v2114 = vrot.slane %v2113, 2
    %v2115 = vadd.f32 %v2113, %v2114
    %v2116 = vrot.slane %v2115, 1
    %v2117 = vadd.f32 %v2115, %v2116
    %v2118 = vsel %vm582, %v2062, 0.0
    %v2119 = vrot.slane %v2118, 4
    %v2120 = vadd.f32 %v2118, %v2119
    %v2121 = vrot.slane %v2120, 2
    %v2122 = vadd.f32 %v2120, %v2121
    %v2123 = vrot.slane %v2122, 1
    %v2124 = vadd.f32 %v2122, %v2123
    %v2125 = vsel %vm582, %v2064, 0.0
    %v2126 = vrot.slane %v2125, 4
    %v2127 = vadd.f32 %v2125, %v2126
    %v2128 = vrot.slane %v2127, 2
    %v2129 = vadd.f32 %v2127, %v2128
    %v2130 = vrot.slane %v2129, 1
    %v2131 = vadd.f32 %v2129, %v2130
    %v2132 = vsel %vm582, %v2066, 0.0
    %v2133 = vrot.slane %v2132, 4
    %v2134 = vadd.f32 %v2132, %v2133
    %v2135 = vrot.slane %v2134, 2
    %v2136 = vadd.f32 %v2134, %v2135
    %v2137 = vrot.slane %v2136, 1
    %v2138 = vadd.f32 %v2136, %v2137
    %v2139 = vsel %vm582, %v2068, 0.0
    %v2140 = vrot.slane %v2139, 4
    %v2141 = vadd.f32 %v2139, %v2140
    %v2142 = vrot.slane %v2141, 2
    %v2143 = vadd.f32 %v2141, %v2142
    %v2144 = vrot.slane %v2143, 1
    %v2145 = vadd.f32 %v2143, %v2144
    %v2146 = vsel %vm582, %v2070, 0.0
    %v2147 = vrot.slane %v2146, 4
    %v2148 = vadd.f32 %v2146, %v2147
    %v2149 = vrot.slane %v2148, 2
    %v2150 = vadd.f32 %v2148, %v2149
    %v2151 = vrot.slane %v2150, 1
    %v2152 = vadd.f32 %v2150, %v2151
    %v2153 = vsel %vm582, %v2072, 0.0
    %v2154 = vrot.slane %v2153, 4
    %v2155 = vadd.f32 %v2153, %v2154
    %v2156 = vrot.slane %v2155, 2
    %v2157 = vadd.f32 %v2155, %v2156
    %v2158 = vrot.slane %v2157, 1
    %v2159 = vadd.f32 %v2157, %v2158
    %v2160 = vsel %vm582, %v2074, 0.0
    %v2161 = vrot.slane %v2160, 4
    %v2162 = vadd.f32 %v2160, %v2161
    %v2163 = vrot.slane %v2162, 2
    %v2164 = vadd.f32 %v2162, %v2163
    %v2165 = vrot.slane %v2164, 1
    %v2166 = vadd.f32 %v2164, %v2165
    %v2167 = vsel %vm582, %v2076, 0.0
    %v2168 = vrot.slane %v2167, 4
    %v2169 = vadd.f32 %v2167, %v2168
    %v2170 = vrot.slane %v2169, 2
    %v2171 = vadd.f32 %v2169, %v2170
    %v2172 = vrot.slane %v2171, 1
    %v2173 = vadd.f32 %v2171, %v2172
    %v2174 = vsel %vm582, %v2078, 0.0
    %v2175 = vrot.slane %v2174, 4
    %v2176 = vadd.f32 %v2174, %v2175
    %v2177 = vrot.slane %v2176, 2
    %v2178 = vadd.f32 %v2176, %v2177
    %v2179 = vrot.slane %v2178, 1
    %v2180 = vadd.f32 %v2178, %v2179
    %v2181 = vsel %vm582, %v2080, 0.0
    %v2182 = vrot.slane %v2181, 4
    %v2183 = vadd.f32 %v2181, %v2182
    %v2184 = vrot.slane %v2183, 2
    %v2185 = vadd.f32 %v2183, %v2184
    %v2186 = vrot.slane %v2185, 1
    %v2187 = vadd.f32 %v2185, %v2186
    %v2188 = vsel %vm582, %v2082, 0.0
    %v2189 = vrot.slane %v2188, 4
    %v2190 = vadd.f32 %v2188, %v2189
    %v2191 = vrot.slane %v2190, 2
    %v2192 = vadd.f32 %v2190, %v2191
    %v2193 = vrot.slane %v2192, 1
    %v2194 = vadd.f32 %v2192, %v2193
    %v2195 = vrcp.pop %v2089
    %v2196 = vrcp.pop %v2096
    %v2197 = vrcp.pop %v2103
    %v2198 = vrcp.pop %v2110
    %v2199 = vrcp.pop %v2117
    %v2200 = vrcp.pop %v2124
    %v2201 = vrcp.pop %v2131
    %v2202 = vrcp.pop %v2138
    %v2203 = vrcp.pop %v2145
    %v2204 = vrcp.pop %v2152
    %v2205 = vrcp.pop %v2159
    %v2206 = vrcp.pop %v2166
    %v2207 = vrcp.pop %v2173
    %v2208 = vrcp.pop %v2180
    %v2209 = vrcp.pop %v2187
    %v2210 = vrcp.pop %v2194
    %v2211 = vmul.f32 %v2052, %v2195
    %v2212 = vmul.f32 %v2054, %v2196
    %v2213 = vmul.f32 %v2056, %v2197
    %v2214 = vmul.f32 %v2058, %v2198
    %v2215 = vmul.f32 %v2060, %v2199
    %v2216 = vmul.f32 %v2062, %v2200
    %v2217 = vmul.f32 %v2064, %v2201
    %v2218 = vmul.f32 %v2066, %v2202
    %v2219 = vmul.f32 %v2068, %v2203
    %v2220 = vmul.f32 %v2070, %v2204
    %v2221 = vmul.f32 %v2072, %v2205
    %v2222 = vmul.f32 %v2074, %v2206
    %v2223 = vmul.f32 %v2076, %v2207
    %v2224 = vmul.f32 %v2078, %v2208
    %v2225 = vmul.f32 %v2080, %v2209
    %v2226 = vmul.f32 %v2082, %v2210
    %v2227 = vpack.c.bf16 %v2212, %v2211
    %v2228 = vpack.c.bf16 %v2214, %v2213
    %v2229 = vpack.c.bf16 %v2216, %v2215
    %v2230 = vpack.c.bf16 %v2218, %v2217
    %v2231 = vpack.c.bf16 %v2220, %v2219
    %v2232 = vpack.c.bf16 %v2222, %v2221
    %v2233 = vpack.c.bf16 %v2224, %v2223
    %v2234 = vpack.c.bf16 %v2226, %v2225
    %v2236 = vsel %vm582, %v2227, 0
    %v2239 = vsel %vm582, %v2228, 0
    %v2242 = vsel %vm582, %v2229, 0
    %v2245 = vsel %vm582, %v2230, 0
    %v2248 = vsel %vm582, %v2231, 0
    %v2251 = vsel %vm582, %v2232, 0
    %v2254 = vsel %vm582, %v2233, 0
    %v2257 = vsel %vm582, %v2234, 0
    %2259 = vmatprep.subr.bf16.mxu0 0
    %2260 = vmatpush1.bf16.msra.mxu0 0
    %2261 = vmatprep.subr.bf16.mxu0 0
    %2262 = vmatpush1.bf16.msra.mxu0 0
    %2263 = vmatprep.subr.bf16.mxu0 0
    %2264 = vmatpush1.bf16.msra.mxu0 0
    %2265 = vmatprep.subr.bf16.mxu0 0
    %2266 = vmatpush1.bf16.msra.mxu0 0
    %2267 = vmatprep.subr.bf16.mxu0 0
    %2268 = vmatpush1.bf16.msra.mxu0 0
    %2269 = vmatprep.subr.bf16.mxu0 0
    %2270 = vmatpush1.bf16.msra.mxu0 0
    %2271 = vmatprep.subr.bf16.mxu0 0
    %2272 = vmatpush1.bf16.msra.mxu0 0
    %2273 = vmatprep.subr.bf16.mxu0 0
    %2274 = vmatpush1.bf16.msra.mxu0 %v921
    %2275 = vmatprep.subr.bf16.mxu0 0
    %2276 = vmatpush2.bf16.msra.mxu0 0
    %2277 = vmatprep.subr.bf16.mxu0 0
    %2278 = vmatpush2.bf16.msra.mxu0 0
    %2279 = vmatprep.subr.bf16.mxu0 0
    %2280 = vmatpush2.bf16.msra.mxu0 0
    %2281 = vmatprep.subr.bf16.mxu0 0
    %2282 = vmatpush2.bf16.msra.mxu0 0
    %2283 = vmatprep.subr.bf16.mxu0 0
    %2284 = vmatpush2.bf16.msra.mxu0 0
    %2285 = vmatprep.subr.bf16.mxu0 0
    %2286 = vmatpush2.bf16.msra.mxu0 0
    %2287 = vmatprep.subr.bf16.mxu0 0
    %2288 = vmatpush2.bf16.msra.mxu0 0
    %2289 = vmatprep.subr.bf16.mxu0 0
    %2290 = vmatpush2.bf16.msra.mxu0 0
    %2291 = vmatprep.mubr.bf16.mxu0 0
    %2292 = vmatmul.mubr.bf16.gmra.mxu0 %v2236
    %v2293 = vpop.f32.mrf.mxu0
    %v2294 = vadd.f32 0.0, %v2293
    %v2295 = vpop.f32.mrf.mxu0
    %v2296 = vpop.f32.mrf.mxu0
    %v2297 = vadd.f32 0.0, %v2296
    %v2298 = vpop.f32.mrf.mxu0
    %2299 = vmatprep.mubr.bf16.mxu0 0
    %2300 = vmatmul.mubr.bf16.gmra.mxu0 %v2239
    %v2301 = vpop.f32.mrf.mxu0
    %v2302 = vadd.f32 0.0, %v2301
    %v2303 = vpop.f32.mrf.mxu0
    %v2304 = vpop.f32.mrf.mxu0
    %v2305 = vadd.f32 0.0, %v2304
    %v2306 = vpop.f32.mrf.mxu0
    %2307 = vmatprep.mubr.bf16.mxu0 0
    %2308 = vmatmul.mubr.bf16.gmra.mxu0 %v2242
    %v2309 = vpop.f32.mrf.mxu0
    %v2310 = vadd.f32 0.0, %v2309
    %v2311 = vpop.f32.mrf.mxu0
    %v2312 = vpop.f32.mrf.mxu0
    %v2313 = vadd.f32 0.0, %v2312
    %v2314 = vpop.f32.mrf.mxu0
    %2315 = vmatprep.mubr.bf16.mxu0 0
    %2316 = vmatmul.mubr.bf16.gmra.mxu0 %v2245
    %v2317 = vpop.f32.mrf.mxu0
    %v2318 = vadd.f32 0.0, %v2317
    %v2319 = vpop.f32.mrf.mxu0
    %v2320 = vpop.f32.mrf.mxu0
    %v2321 = vadd.f32 0.0, %v2320
    %v2322 = vpop.f32.mrf.mxu0
    %2323 = vmatprep.mubr.bf16.mxu0 0
    %2324 = vmatmul.mubr.bf16.gmra.mxu0 %v2248
    %v2325 = vpop.f32.mrf.mxu0
    %v2326 = vadd.f32 0.0, %v2325
    %v2327 = vpop.f32.mrf.mxu0
    %v2328 = vpop.f32.mrf.mxu0
    %v2329 = vadd.f32 0.0, %v2328
    %v2330 = vpop.f32.mrf.mxu0
    %2331 = vmatprep.mubr.bf16.mxu0 0
    %2332 = vmatmul.mubr.bf16.gmra.mxu0 %v2251
    %v2333 = vpop.f32.mrf.mxu0
    %v2334 = vadd.f32 0.0, %v2333
    %v2335 = vpop.f32.mrf.mxu0
    %v2336 = vpop.f32.mrf.mxu0
    %v2337 = vadd.f32 0.0, %v2336
    %v2338 = vpop.f32.mrf.mxu0
    %2339 = vmatprep.mubr.bf16.mxu0 0
    %2340 = vmatmul.mubr.bf16.gmra.mxu0 %v2254
    %v2341 = vpop.f32.mrf.mxu0
    %v2342 = vadd.f32 0.0, %v2341
    %v2343 = vpop.f32.mrf.mxu0
    %v2344 = vpop.f32.mrf.mxu0
    %v2345 = vadd.f32 0.0, %v2344
    %v2346 = vpop.f32.mrf.mxu0
    %2347 = vmatprep.mubr.bf16.mxu0 0
    %2348 = vmatmul.mubr.bf16.gmra.mxu0 %v2257
    %v2349 = vpop.f32.mrf.mxu0
    %v2350 = vadd.f32 0.0, %v2349
    %v2351 = vpop.f32.mrf.mxu0
    %v2352 = vpop.f32.mrf.mxu0
    %v2353 = vadd.f32 0.0, %v2352
    %v2354 = vpop.f32.mrf.mxu0
    %2355 = vdwg.mxu0
    %2356 = vrot.lane.b32.xlu0 %v1586, 64
    %v2357 = vpop.permute.xlu0 %2356
    %2358 = vrot.lane.b32.xlu0 %v1589, 64
    %v2359 = vpop.permute.xlu0 %2358
    %v2362 = vmul.f32 %v2294, %v2357
    %v2363 = vmul.f32 %v2297, %v2357
    %v2364 = vmul.f32 %v2302, %v2357
    %v2365 = vmul.f32 %v2305, %v2357
    %v2366 = vmul.f32 %v2310, %v2357
    %v2367 = vmul.f32 %v2313, %v2357
    %v2368 = vmul.f32 %v2318, %v2357
    %v2369 = vmul.f32 %v2321, %v2357
    %v2370 = vmul.f32 %v2326, %v2359
    %v2371 = vmul.f32 %v2329, %v2359
    %v2372 = vmul.f32 %v2334, %v2359
    %v2373 = vmul.f32 %v2337, %v2359
    %v2374 = vmul.f32 %v2342, %v2359
    %v2375 = vmul.f32 %v2345, %v2359
    %v2376 = vmul.f32 %v2350, %v2359
    %v2377 = vmul.f32 %v2353, %v2359
    %v2378 = vsel %vm114, %v2362, 0.0
    %v2379 = vrot.slane %v2378, 4
    %v2380 = vadd.f32 %v2378, %v2379
    %v2381 = vrot.slane %v2380, 2
    %v2382 = vadd.f32 %v2380, %v2381
    %v2383 = vrot.slane %v2382, 1
    %v2384 = vadd.f32 %v2382, %v2383
    %v2385 = vsel %vm114, %v2363, 0.0
    %v2386 = vrot.slane %v2385, 4
    %v2387 = vadd.f32 %v2385, %v2386
    %v2388 = vrot.slane %v2387, 2
    %v2389 = vadd.f32 %v2387, %v2388
    %v2390 = vrot.slane %v2389, 1
    %v2391 = vadd.f32 %v2389, %v2390
    %v2392 = vsel %vm114, %v2364, 0.0
    %v2393 = vrot.slane %v2392, 4
    %v2394 = vadd.f32 %v2392, %v2393
    %v2395 = vrot.slane %v2394, 2
    %v2396 = vadd.f32 %v2394, %v2395
    %v2397 = vrot.slane %v2396, 1
    %v2398 = vadd.f32 %v2396, %v2397
    %v2399 = vsel %vm114, %v2365, 0.0
    %v2400 = vrot.slane %v2399, 4
    %v2401 = vadd.f32 %v2399, %v2400
    %v2402 = vrot.slane %v2401, 2
    %v2403 = vadd.f32 %v2401, %v2402
    %v2404 = vrot.slane %v2403, 1
    %v2405 = vadd.f32 %v2403, %v2404
    %v2406 = vsel %vm114, %v2366, 0.0
    %v2407 = vrot.slane %v2406, 4
    %v2408 = vadd.f32 %v2406, %v2407
    %v2409 = vrot.slane %v2408, 2
    %v2410 = vadd.f32 %v2408, %v2409
    %v2411 = vrot.slane %v2410, 1
    %v2412 = vadd.f32 %v2410, %v2411
    %v2413 = vsel %vm114, %v2367, 0.0
    %v2414 = vrot.slane %v2413, 4
    %v2415 = vadd.f32 %v2413, %v2414
    %v2416 = vrot.slane %v2415, 2
    %v2417 = vadd.f32 %v2415, %v2416
    %v2418 = vrot.slane %v2417, 1
    %v2419 = vadd.f32 %v2417, %v2418
    %v2420 = vsel %vm114, %v2368, 0.0
    %v2421 = vrot.slane %v2420, 4
    %v2422 = vadd.f32 %v2420, %v2421
    %v2423 = vrot.slane %v2422, 2
    %v2424 = vadd.f32 %v2422, %v2423
    %v2425 = vrot.slane %v2424, 1
    %v2426 = vadd.f32 %v2424, %v2425
    %v2427 = vsel %vm114, %v2369, 0.0
    %v2428 = vrot.slane %v2427, 4
    %v2429 = vadd.f32 %v2427, %v2428
    %v2430 = vrot.slane %v2429, 2
    %v2431 = vadd.f32 %v2429, %v2430
    %v2432 = vrot.slane %v2431, 1
    %v2433 = vadd.f32 %v2431, %v2432
    %v2434 = vsel %vm114, %v2370, 0.0
    %v2435 = vrot.slane %v2434, 4
    %v2436 = vadd.f32 %v2434, %v2435
    %v2437 = vrot.slane %v2436, 2
    %v2438 = vadd.f32 %v2436, %v2437
    %v2439 = vrot.slane %v2438, 1
    %v2440 = vadd.f32 %v2438, %v2439
    %v2441 = vsel %vm114, %v2371, 0.0
    %v2442 = vrot.slane %v2441, 4
    %v2443 = vadd.f32 %v2441, %v2442
    %v2444 = vrot.slane %v2443, 2
    %v2445 = vadd.f32 %v2443, %v2444
    %v2446 = vrot.slane %v2445, 1
    %v2447 = vadd.f32 %v2445, %v2446
    %v2448 = vsel %vm114, %v2372, 0.0
    %v2449 = vrot.slane %v2448, 4
    %v2450 = vadd.f32 %v2448, %v2449
    %v2451 = vrot.slane %v2450, 2
    %v2452 = vadd.f32 %v2450, %v2451
    %v2453 = vrot.slane %v2452, 1
    %v2454 = vadd.f32 %v2452, %v2453
    %v2455 = vsel %vm114, %v2373, 0.0
    %v2456 = vrot.slane %v2455, 4
    %v2457 = vadd.f32 %v2455, %v2456
    %v2458 = vrot.slane %v2457, 2
    %v2459 = vadd.f32 %v2457, %v2458
    %v2460 = vrot.slane %v2459, 1
    %v2461 = vadd.f32 %v2459, %v2460
    %v2462 = vsel %vm114, %v2374, 0.0
    %v2463 = vrot.slane %v2462, 4
    %v2464 = vadd.f32 %v2462, %v2463
    %v2465 = vrot.slane %v2464, 2
    %v2466 = vadd.f32 %v2464, %v2465
    %v2467 = vrot.slane %v2466, 1
    %v2468 = vadd.f32 %v2466, %v2467
    %v2469 = vsel %vm114, %v2375, 0.0
    %v2470 = vrot.slane %v2469, 4
    %v2471 = vadd.f32 %v2469, %v2470
    %v2472 = vrot.slane %v2471, 2
    %v2473 = vadd.f32 %v2471, %v2472
    %v2474 = vrot.slane %v2473, 1
    %v2475 = vadd.f32 %v2473, %v2474
    %v2476 = vsel %vm114, %v2376, 0.0
    %v2477 = vrot.slane %v2476, 4
    %v2478 = vadd.f32 %v2476, %v2477
    %v2479 = vrot.slane %v2478, 2
    %v2480 = vadd.f32 %v2478, %v2479
    %v2481 = vrot.slane %v2480, 1
    %v2482 = vadd.f32 %v2480, %v2481
    %v2483 = vsel %vm114, %v2377, 0.0
    %v2484 = vrot.slane %v2483, 4
    %v2485 = vadd.f32 %v2483, %v2484
    %v2486 = vrot.slane %v2485, 2
    %v2487 = vadd.f32 %v2485, %v2486
    %v2488 = vrot.slane %v2487, 1
    %v2489 = vadd.f32 %v2487, %v2488
    %s2490 = scalar_lea.vmem %s6, 16
    %v2491 = vld [vmem:[%s2490] sm:$0xf]
    %v2492 = vld [vmem:[%s2490 + $0x4] sm:$0xf]
    %v2493 = vld [vmem:[%s2490 + $0x8] sm:$0xf]
    %v2494 = vld [vmem:[%s2490 + $0xc] sm:$0xf]
    %v2495 = vpack.c.bf16 %v2384, %v2384
    %v2496 = vpack.c.bf16 %v2391, %v2391
    %v2497 = vpack.c.bf16 %v2398, %v2398
    %v2498 = vpack.c.bf16 %v2405, %v2405
    %v2499 = vpack.c.bf16 %v2412, %v2412
    %v2500 = vpack.c.bf16 %v2419, %v2419
    %v2501 = vpack.c.bf16 %v2426, %v2426
    %v2502 = vpack.c.bf16 %v2433, %v2433
    %v2503 = vpack.c.bf16 %v2440, %v2440
    %v2504 = vpack.c.bf16 %v2447, %v2447
    %v2505 = vpack.c.bf16 %v2454, %v2454
    %v2506 = vpack.c.bf16 %v2461, %v2461
    %v2507 = vpack.c.bf16 %v2468, %v2468
    %v2508 = vpack.c.bf16 %v2475, %v2475
    %v2509 = vpack.c.bf16 %v2482, %v2482
    %v2510 = vpack.c.bf16 %v2489, %v2489
    %v2511 = vld [vmem:[%s7 + $0x1] sm:$0x1]
    %v2512 = vlaneseq
    %v2513 = vshrl.u32 %v2512, 7
    %v2514 = vsub.s32 0, %v2513
    %v2515 = vrot.slane %v2511, %v2514
    %v2532 = vunpack.c.l.b16 %v2495
    %v2533 = vunpack.c.l.b16 %v2496
    %v2534 = vunpack.c.l.b16 %v2497
    %v2535 = vunpack.c.l.b16 %v2498
    %v2536 = vunpack.c.l.b16 %v2499
    %v2537 = vunpack.c.l.b16 %v2500
    %v2538 = vunpack.c.l.b16 %v2501
    %v2539 = vunpack.c.l.b16 %v2502
    %v2540 = vunpack.c.l.b16 %v2503
    %v2541 = vunpack.c.l.b16 %v2504
    %v2542 = vunpack.c.l.b16 %v2505
    %v2543 = vunpack.c.l.b16 %v2506
    %v2544 = vunpack.c.l.b16 %v2507
    %v2545 = vunpack.c.l.b16 %v2508
    %v2546 = vunpack.c.l.b16 %v2509
    %v2547 = vunpack.c.l.b16 %v2510
    %v2548 = vsel %vm1211, %v2533, %v2532
    %v2549 = vsel %vm1213, %v2534, %v2548
    %v2550 = vsel %vm1215, %v2535, %v2549
    %v2551 = vsel %vm1217, %v2536, %v2550
    %v2552 = vsel %vm1219, %v2537, %v2551
    %v2553 = vsel %vm1221, %v2538, %v2552
    %v2554 = vsel %vm1223, %v2539, %v2553
    %v2555 = vsel %vm1211, %v2541, %v2540
    %v2556 = vsel %vm1213, %v2542, %v2555
    %v2557 = vsel %vm1215, %v2543, %v2556
    %v2558 = vsel %vm1217, %v2544, %v2557
    %v2559 = vsel %vm1219, %v2545, %v2558
    %v2560 = vsel %vm1221, %v2546, %v2559
    %v2561 = vsel %vm1223, %v2547, %v2560
    %v2562 = vpack.c.b16 %v2561, %v2554
    %v2567 = vunpack.c.l.b16 %v2491
    %v2568 = vunpack.c.l.b16 %v2492
    %v2569 = vunpack.c.l.b16 %v2493
    %v2570 = vunpack.c.l.b16 %v2494
    %v2571 = vpack.c.b16 %v2568, %v2567
    %v2572 = vpack.c.b16 %v2570, %v2569
    %v2576 = vsel %vm114, %v2562, 0
    %2578 = vmatprep.subr.bf16.mxu0 0
    %2579 = vmatpush1.bf16.msra.mxu0 0
    %2580 = vmatprep.subr.bf16.mxu0 0
    %2581 = vmatpush1.bf16.msra.mxu0 0
    %2582 = vmatprep.subr.bf16.mxu0 0
    %2583 = vmatpush1.bf16.msra.mxu0 0
    %2584 = vmatprep.subr.bf16.mxu0 0
    %2585 = vmatpush1.bf16.msra.mxu0 0
    %2586 = vmatprep.subr.bf16.mxu0 0
    %2587 = vmatpush1.bf16.msra.mxu0 0
    %2588 = vmatprep.subr.bf16.mxu0 0
    %2589 = vmatpush1.bf16.msra.mxu0 0
    %2590 = vmatprep.subr.bf16.mxu0 0
    %2591 = vmatpush1.bf16.msra.mxu0 %v2572
    %2592 = vmatprep.subr.bf16.mxu0 0
    %2593 = vmatpush1.bf16.msra.mxu0 %v2571
    %2594 = vmatprep.subr.bf16.mxu0 0
    %2595 = vmatpush2.bf16.msra.mxu0 0
    %2596 = vmatprep.subr.bf16.mxu0 0
    %2597 = vmatpush2.bf16.msra.mxu0 0
    %2598 = vmatprep.subr.bf16.mxu0 0
    %2599 = vmatpush2.bf16.msra.mxu0 0
    %2600 = vmatprep.subr.bf16.mxu0 0
    %2601 = vmatpush2.bf16.msra.mxu0 0
    %2602 = vmatprep.subr.bf16.mxu0 0
    %2603 = vmatpush2.bf16.msra.mxu0 0
    %2604 = vmatprep.subr.bf16.mxu0 0
    %2605 = vmatpush2.bf16.msra.mxu0 0
    %2606 = vmatprep.subr.bf16.mxu0 0
    %2607 = vmatpush2.bf16.msra.mxu0 0
    %2608 = vmatprep.subr.bf16.mxu0 0
    %2609 = vmatpush2.bf16.msra.mxu0 0
    %2610 = vmatprep.mubr.bf16.mxu0 0
    %2611 = vmatmul.mubr.bf16.gmra.mxu0 %v2576
    %v2612 = vpop.f32.mrf.mxu0
    %v2613 = vadd.f32 %v2515, %v2612
    %v2614 = vpop.f32.mrf.mxu0
    %v2615 = vpop.f32.mrf.mxu0
    %v2616 = vadd.f32 %v2515, %v2615
    %v2617 = vpop.f32.mrf.mxu0
    %2618 = vdwg.mxu0
    %v2619 = vadd.f32 %v1523, %v2613
    %v2620 = vadd.f32 %v1524, %v2616
    %v2621 = vld [vmem:[%s8 + $0x1] sm:$0x1]
    %v2622 = vld [vmem:[%s9 + $0x1] sm:$0x1]
    %v2623 = vsel %vm114, %v2619, 0.0
    %2624 = vadd.xlane.f32.xlu0 %v2623
    %v2625 = vpop.xlane.xlu0 %2624
    %v2626 = vsel %vm114, %v2620, 0.0
    %2627 = vadd.xlane.f32.xlu0 %v2626
    %v2628 = vpop.xlane.xlu0 %2627
    %v2629 = vmul.f32 %v2625, %v1299
    %v2630 = vmul.f32 %v2628, %v1299
    %v2631 = vsub.f32 %v2619, %v2629
    %v2632 = vsub.f32 %v2620, %v2630
    %v2633 = vmul.f32 %v2631, %v2631
    %v2634 = vmul.f32 %v2632, %v2632
    %v2635 = vsel %vm114, %v2633, 0.0
    %2636 = vadd.xlane.f32.xlu0 %v2635
    %v2637 = vpop.xlane.xlu0 %2636
    %v2638 = vsel %vm114, %v2634, 0.0
    %2639 = vadd.xlane.f32.xlu0 %v2638
    %v2640 = vpop.xlane.xlu0 %2639
    %v2641 = vmul.f32 %v2637, %v1299
    %v2642 = vmul.f32 %v2640, %v1299
    %v2643 = vadd.f32 %v2641, 1e-05
    %v2644 = vadd.f32 %v2642, 1e-05
    %v2645 = vrsqrt.pop %v2643
    %v2646 = vrsqrt.pop %v2644
    %v2647 = vmul.f32 %v2631, %v2645
    %v2648 = vmul.f32 %v2632, %v2646
    %v2649 = vlaneseq
    %v2650 = vshrl.u32 %v2649, 7
    %v2651 = vsub.s32 0, %v2650
    %v2652 = vrot.slane %v2621, %v2651
    %v2653 = vmul.f32 %v2647, %v2652
    %v2654 = vmul.f32 %v2648, %v2652
    %v2655 = vlaneseq
    %v2656 = vshrl.u32 %v2655, 7
    %v2657 = vsub.s32 0, %v2656
    %v2658 = vrot.slane %v2622, %v2657
    %v2659 = vadd.f32 %v2653, %v2658
    %v2660 = vadd.f32 %v2654, %v2658
    %s2661 = scalar_lea.vmem %s12, 16
    %v2662 = vld [vmem:[%s2661] sm:$0xf]
    %v2663 = vld [vmem:[%s2661 + $0x4] sm:$0xf]
    %v2664 = vld [vmem:[%s2661 + $0x8] sm:$0xf]
    %v2665 = vld [vmem:[%s2661 + $0xc] sm:$0xf]
    %v2666 = vpack.c.bf16 %v2660, %v2659
    %v2667 = vld [vmem:[%s13 + $0x1] sm:$0x1]
    %v2668 = vlaneseq
    %v2669 = vshrl.u32 %v2668, 7
    %v2670 = vsub.s32 0, %v2669
    %v2671 = vrot.slane %v2667, %v2670
    %v2676 = vunpack.c.l.b16 %v2662
    %v2677 = vunpack.c.l.b16 %v2663
    %v2678 = vunpack.c.l.b16 %v2664
    %v2679 = vunpack.c.l.b16 %v2665
    %v2680 = vpack.c.b16 %v2677, %v2676
    %v2681 = vpack.c.b16 %v2679, %v2678
    %v2685 = vsel %vm114, %v2666, 0
    %2687 = vmatprep.subr.bf16.mxu0 0
    %2688 = vmatpush1.bf16.msra.mxu0 0
    %2689 = vmatprep.subr.bf16.mxu0 0
    %2690 = vmatpush1.bf16.msra.mxu0 0
    %2691 = vmatprep.subr.bf16.mxu0 0
    %2692 = vmatpush1.bf16.msra.mxu0 0
    %2693 = vmatprep.subr.bf16.mxu0 0
    %2694 = vmatpush1.bf16.msra.mxu0 0
    %2695 = vmatprep.subr.bf16.mxu0 0
    %2696 = vmatpush1.bf16.msra.mxu0 0
    %2697 = vmatprep.subr.bf16.mxu0 0
    %2698 = vmatpush1.bf16.msra.mxu0 0
    %2699 = vmatprep.subr.bf16.mxu0 0
    %2700 = vmatpush1.bf16.msra.mxu0 %v2681
    %2701 = vmatprep.subr.bf16.mxu0 0
    %2702 = vmatpush1.bf16.msra.mxu0 %v2680
    %2703 = vmatprep.subr.bf16.mxu0 0
    %2704 = vmatpush2.bf16.msra.mxu0 0
    %2705 = vmatprep.subr.bf16.mxu0 0
    %2706 = vmatpush2.bf16.msra.mxu0 0
    %2707 = vmatprep.subr.bf16.mxu0 0
    %2708 = vmatpush2.bf16.msra.mxu0 0
    %2709 = vmatprep.subr.bf16.mxu0 0
    %2710 = vmatpush2.bf16.msra.mxu0 0
    %2711 = vmatprep.subr.bf16.mxu0 0
    %2712 = vmatpush2.bf16.msra.mxu0 0
    %2713 = vmatprep.subr.bf16.mxu0 0
    %2714 = vmatpush2.bf16.msra.mxu0 0
    %2715 = vmatprep.subr.bf16.mxu0 0
    %2716 = vmatpush2.bf16.msra.mxu0 0
    %2717 = vmatprep.subr.bf16.mxu0 0
    %2718 = vmatpush2.bf16.msra.mxu0 0
    %2719 = vmatprep.mubr.bf16.mxu0 0
    %2720 = vmatmul.mubr.bf16.gmra.mxu0 %v2685
    %v2721 = vpop.f32.mrf.mxu0
    %v2722 = vadd.f32 %v2671, %v2721
    %v2723 = vpop.f32.mrf.mxu0
    %v2724 = vpop.f32.mrf.mxu0
    %v2725 = vadd.f32 %v2671, %v2724
    %v2726 = vpop.f32.mrf.mxu0
    %2727 = vdwg.mxu0
    %v2728 = vmax.f32 %v2722, 0.0
    %v2729 = vmax.f32 %v2725, 0.0
    %s2730 = scalar_lea.vmem %s14, 32
    %v2731 = vld [vmem:[%s2730] sm:$0xf]
    %v2732 = vld [vmem:[%s2730 + $0x4] sm:$0xf]
    %v2733 = vld [vmem:[%s2730 + $0x8] sm:$0xf]
    %v2734 = vld [vmem:[%s2730 + $0xc] sm:$0xf]
    %v2735 = vld [vmem:[%s2730 + $0x10] sm:$0xf]
    %v2736 = vld [vmem:[%s2730 + $0x14] sm:$0xf]
    %v2737 = vld [vmem:[%s2730 + $0x18] sm:$0xf]
    %v2738 = vld [vmem:[%s2730 + $0x1c] sm:$0xf]
    %v2739 = vpack.c.bf16 %v2729, %v2728
    %v2740 = vld [vmem:[%s15 + $0x1] sm:$0x1]
    %v2741 = vlaneseq
    %v2742 = vshrl.u32 %v2741, 7
    %v2743 = vsub.s32 0, %v2742
    %v2744 = vrot.slane %v2740, %v2743
    %v2753 = vunpack.c.l.b16 %v2731
    %v2754 = vunpack.c.l.b16 %v2732
    %v2755 = vunpack.c.l.b16 %v2733
    %v2756 = vunpack.c.l.b16 %v2734
    %v2757 = vunpack.c.l.b16 %v2735
    %v2758 = vunpack.c.l.b16 %v2736
    %v2759 = vunpack.c.l.b16 %v2737
    %v2760 = vunpack.c.l.b16 %v2738
    %v2761 = vpack.c.b16 %v2754, %v2753
    %v2762 = vpack.c.b16 %v2756, %v2755
    %v2763 = vpack.c.b16 %v2758, %v2757
    %v2764 = vpack.c.b16 %v2760, %v2759
    %v2770 = vsel %vm1438, %v2739, 0
    %2772 = vmatprep.subr.bf16.mxu0 0
    %2773 = vmatpush1.bf16.msra.mxu0 0
    %2774 = vmatprep.subr.bf16.mxu0 0
    %2775 = vmatpush1.bf16.msra.mxu0 0
    %2776 = vmatprep.subr.bf16.mxu0 0
    %2777 = vmatpush1.bf16.msra.mxu0 0
    %2778 = vmatprep.subr.bf16.mxu0 0
    %2779 = vmatpush1.bf16.msra.mxu0 0
    %2780 = vmatprep.subr.bf16.mxu0 0
    %2781 = vmatpush1.bf16.msra.mxu0 %v2764
    %2782 = vmatprep.subr.bf16.mxu0 0
    %2783 = vmatpush1.bf16.msra.mxu0 %v2763
    %2784 = vmatprep.subr.bf16.mxu0 0
    %2785 = vmatpush1.bf16.msra.mxu0 %v2762
    %2786 = vmatprep.subr.bf16.mxu0 0
    %2787 = vmatpush1.bf16.msra.mxu0 %v2761
    %2788 = vmatprep.subr.bf16.mxu0 0
    %2789 = vmatpush2.bf16.msra.mxu0 0
    %2790 = vmatprep.subr.bf16.mxu0 0
    %2791 = vmatpush2.bf16.msra.mxu0 0
    %2792 = vmatprep.subr.bf16.mxu0 0
    %2793 = vmatpush2.bf16.msra.mxu0 0
    %2794 = vmatprep.subr.bf16.mxu0 0
    %2795 = vmatpush2.bf16.msra.mxu0 0
    %2796 = vmatprep.subr.bf16.mxu0 0
    %2797 = vmatpush2.bf16.msra.mxu0 0
    %2798 = vmatprep.subr.bf16.mxu0 0
    %2799 = vmatpush2.bf16.msra.mxu0 0
    %2800 = vmatprep.subr.bf16.mxu0 0
    %2801 = vmatpush2.bf16.msra.mxu0 0
    %2802 = vmatprep.subr.bf16.mxu0 0
    %2803 = vmatpush2.bf16.msra.mxu0 0
    %2804 = vmatprep.mubr.bf16.mxu0 0
    %2805 = vmatmul.mubr.bf16.gmra.mxu0 %v2770
    %v2806 = vpop.f32.mrf.mxu0
    %v2807 = vadd.f32 %v2744, %v2806
    %v2808 = vpop.f32.mrf.mxu0
    %v2809 = vpop.f32.mrf.mxu0
    %v2810 = vadd.f32 %v2744, %v2809
    %v2811 = vpop.f32.mrf.mxu0
    %2812 = vdwg.mxu0
    %v2813 = vadd.f32 %v2659, %v2807
    %v2814 = vadd.f32 %v2660, %v2810
    %v2815 = vld [vmem:[%s10 + $0x1] sm:$0x1]
    %v2816 = vld [vmem:[%s11 + $0x1] sm:$0x1]
    %v2817 = vsel %vm114, %v2813, 0.0
    %2818 = vadd.xlane.f32.xlu0 %v2817
    %v2819 = vpop.xlane.xlu0 %2818
    %v2820 = vsel %vm114, %v2814, 0.0
    %2821 = vadd.xlane.f32.xlu0 %v2820
    %v2822 = vpop.xlane.xlu0 %2821
    %v2823 = vmul.f32 %v2819, %v1299
    %v2824 = vmul.f32 %v2822, %v1299
    %v2825 = vsub.f32 %v2813, %v2823
    %v2826 = vsub.f32 %v2814, %v2824
    %v2827 = vmul.f32 %v2825, %v2825
    %v2828 = vmul.f32 %v2826, %v2826
    %v2829 = vsel %vm114, %v2827, 0.0
    %2830 = vadd.xlane.f32.xlu0 %v2829
    %v2831 = vpop.xlane.xlu0 %2830
    %v2832 = vsel %vm114, %v2828, 0.0
    %2833 = vadd.xlane.f32.xlu0 %v2832
    %v2834 = vpop.xlane.xlu0 %2833
    %v2835 = vmul.f32 %v2831, %v1299
    %v2836 = vmul.f32 %v2834, %v1299
    %v2837 = vadd.f32 %v2835, 1e-05
    %v2838 = vadd.f32 %v2836, 1e-05
    %v2839 = vrsqrt.pop %v2837
    %v2840 = vrsqrt.pop %v2838
    %v2841 = vmul.f32 %v2825, %v2839
    %v2842 = vmul.f32 %v2826, %v2840
    %v2843 = vlaneseq
    %v2844 = vshrl.u32 %v2843, 7
    %v2845 = vsub.s32 0, %v2844
    %v2846 = vrot.slane %v2815, %v2845
    %v2847 = vmul.f32 %v2841, %v2846
    %v2848 = vmul.f32 %v2842, %v2846
    %v2849 = vlaneseq
    %v2850 = vshrl.u32 %v2849, 7
    %v2851 = vsub.s32 0, %v2850
    %v2852 = vrot.slane %v2816, %v2851
    %v2853 = vadd.f32 %v2847, %v2852
    %v2854 = vadd.f32 %v2848, %v2852
    %v2855 = vld [vmem:[%s16] sm:$0x1]
    %v2856 = vld [vmem:[%s17] sm:$0x1]
    %v2857 = vsel %vm114, %v2853, 0.0
    %2858 = vadd.xlane.f32.xlu0 %v2857
    %v2859 = vpop.xlane.xlu0 %2858
    %v2860 = vsel %vm114, %v2854, 0.0
    %2861 = vadd.xlane.f32.xlu0 %v2860
    %v2862 = vpop.xlane.xlu0 %2861
    %v2863 = vmul.f32 %v2859, %v1299
    %v2864 = vmul.f32 %v2862, %v1299
    %v2865 = vsub.f32 %v2853, %v2863
    %v2866 = vsub.f32 %v2854, %v2864
    %v2867 = vmul.f32 %v2865, %v2865
    %v2868 = vmul.f32 %v2866, %v2866
    %v2869 = vsel %vm114, %v2867, 0.0
    %2870 = vadd.xlane.f32.xlu0 %v2869
    %v2871 = vpop.xlane.xlu0 %2870
    %v2872 = vsel %vm114, %v2868, 0.0
    %2873 = vadd.xlane.f32.xlu0 %v2872
    %v2874 = vpop.xlane.xlu0 %2873
    %v2875 = vmul.f32 %v2871, %v1299
    %v2876 = vmul.f32 %v2874, %v1299
    %v2877 = vadd.f32 %v2875, 1e-05
    %v2878 = vadd.f32 %v2876, 1e-05
    %v2879 = vrsqrt.pop %v2877
    %v2880 = vrsqrt.pop %v2878
    %v2881 = vmul.f32 %v2865, %v2879
    %v2882 = vmul.f32 %v2866, %v2880
    %v2884 = vlaneseq
    %v2885 = vshrl.u32 %v2884, 7
    %v2886 = vsub.s32 0, %v2885
    %v2887 = vrot.slane %v2855, %v2886
    %v2889 = vmul.f32 %v2881, %v2887
    %v2890 = vmul.f32 %v2882, %v2887
    %v2892 = vlaneseq
    %v2893 = vshrl.u32 %v2892, 7
    %v2894 = vsub.s32 0, %v2893
    %v2895 = vrot.slane %v2856, %v2894
    %v2897 = vadd.f32 %v2889, %v2895
    %v2898 = vadd.f32 %v2890, %v2895
    %v2899 = vld [vmem:[%s18] sm:$0x1]
    %v2901 = vlaneseq
    %v2902 = vshrl.u32 %v2901, 7
    %v2903 = vsub.s32 0, %v2902
    %v2904 = vrot.slane %v2899, %v2903
    %v2906 = vmul.f32 %v2897, %v2904
    %v2907 = vmul.f32 %v2898, %v2904
    %v2908 = vsel %vm114, %v2906, 0.0
    %2909 = vadd.xlane.f32.xlu0 %v2908
    %v2910 = vpop.xlane.xlu0 %2909
    %v2911 = vsel %vm114, %v2907, 0.0
    %2912 = vadd.xlane.f32.xlu0 %v2911
    %v2913 = vpop.xlane.xlu0 %2912
    %v2914 = vld [vmem:[#allocation2] sm:$0x1]
    %v2916 = vlaneseq
    %v2917 = vshrl.u32 %v2916, 7
    %v2918 = vsub.s32 0, %v2917
    %v2919 = vrot.slane %v2914, %v2918
    %2920 = vset.pattern.permute.xlu0 0
    %2921 = vperm.xlu0 %2920, %v2919
    %v2922 = vpop.permute.xlu0 %2921
    %v2924 = vadd.f32 %v2910, %v2922
    %v2925 = vadd.f32 %v2913, %v2922
    %v2928 = vlaneseq
    %v2929 = vand.u32 %v2928, 127
    %v2930 = vlaneseq
    %v2931 = vshrl.u32 %v2930, 7
    %v2932 = vsub.s32 %v2929, %v2931
    %v2933 = vrot.slane %v2924, %v2932
    %v2934 = vlaneseq
    %v2935 = vshrl.u32 %v2934, 7
    %v2936 = vsub.s32 %v2929, %v2935
    %v2937 = vrot.slane %v2925, %v2936
    %v2938 = vsel %vm1211, %v2937, %v2933
    %vm2940 = vcmask 58368
    %2941 = vst.msk [vmem:[#allocation3] sm:$0x3] %vm2940, %v2938
    // Predicated region
    $region82: #{tpu_custom_call.1} parent=1 // pred_check
      _
    $region83: #{tpu_custom_call.1} parent=1 // pred_check_branch
      %2943 = sbr.rel (0) target = $region85
    $region84: #{tpu_custom_call.1} parent=1 // pred_region
      %s2945 = ssub.s32 32, 32
      %2946 = vsyncadd [#allocation4], %s2945
      %s2948 = sshll.u32 [#allocation3], 4
      %s2949 = int_to_ptr.vmem [resolvable:$true] %s2948
      %2951 = dma.vmem_to_hbm [thread:$0]  %s2949, 32, %s20, [#allocation4]
    $region85: #{tpu_custom_call.1} parent=1 // pred_fallthru
      _
    // Predicated region
    $region86: #{tpu_custom_call.1} parent=1 // pred_check
      _
    $region87: #{tpu_custom_call.1} parent=1 // pred_check_branch
      %2953 = sbr.rel (0) target = $region89
    $region88: #{tpu_custom_call.1} parent=1 // pred_region
      %2954 = dma.done [#allocation4], 32
    $region89: #{tpu_custom_call.1} parent=1 // pred_fallthru
      _
    %2955 = vsyncpa [#allocation4], 1

</llo_original>
